<compile_context>
chip_gen: v5e
topology: v5e:2x2
jax: 0.10.0
libtpu: 0.0.40
codegen_flags: <defaults>
</compile_context>

<pallas_src>
import functools
import math

import jax
import jax.numpy as jnp
from jax.experimental import pallas as pl
from jax.experimental.pallas import tpu as pltpu


def _attn_kernel(x_ref, wqkv_t_ref, wproj_t_ref, o_ref, y_scratch, *,
                 n_head, seq_len):
    """Fused QKV -> block-diagonal causal attention -> output projection.

    x_ref:       (1, rows, C)  bf16 input rows (rows = batch_tile * T)
    wqkv_t_ref:  (C, 3C)       bf16, attn.weight^T with 1/sqrt(D) folded into Q cols
    wproj_t_ref: (C, C)        bf16, proj.weight^T
    o_ref:       (1, rows, C)  bf16 output rows
    y_scratch:   (rows, C)     bf16 VMEM scratch (concatenated head outputs)
    """
    rows = x_ref.shape[1]
    C = x_ref.shape[2]
    H = n_head
    D = C // H
    T = seq_len
    bt = rows // T

    x = x_ref[0]                                     # (rows, C) bf16

    # QKV projection for every (batch, time) row of the tile in ONE matmul.
    # bf16 operands, f32 accumulation on the MXU; cast back to bf16 once.
    qkv = jnp.dot(x, wqkv_t_ref[...],
                  preferred_element_type=jnp.float32).astype(jnp.bfloat16)  # (rows, 3C)

    # Single (T, T) causal mask shared by all sequences / heads of the tile.
    ri = jax.lax.broadcasted_iota(jnp.int32, (T, T), 0)
    ci = jax.lax.broadcasted_iota(jnp.int32, (T, T), 1)
    causal = ri >= ci
    neg_inf = jnp.float32(-jnp.inf)

    # TODO(synk): for long T switch the inner attention to a flash-style
    # (tq, tk) online-softmax tiling instead of materializing (bt, T, T)
    # scores; and if H grows, make heads a grid axis ("arbitrary") instead of
    # this small static unroll.
    for h in range(H):
        qh = qkv[:, h * D:(h + 1) * D].reshape(bt, T, D)               # bf16
        kh = qkv[:, C + h * D:C + (h + 1) * D].reshape(bt, T, D)
        vh = qkv[:, 2 * C + h * D:2 * C + (h + 1) * D].reshape(bt, T, D)

        # Scale already folded into the Q weight columns -> no extra VALU mul.
        s = jnp.einsum("btd,bsd->bts", qh, kh,
                       preferred_element_type=jnp.float32)             # (bt, T, T)
        s = jnp.where(causal[None], s, neg_inf)

        # Numerically-stable softmax in f32; approx reciprocal runs on the EUP.
        m = jnp.max(s, axis=-1, keepdims=True)
        p = jnp.exp(s - m)
        p = p * pl.reciprocal(jnp.sum(p, axis=-1, keepdims=True), approx=True)
        # TODO(synk): attn_dropout / resid_dropout are identities (dropout=0.0);
        # real dropout would use pltpu.prng_seed + pltpu.prng_random_bits.

        yh = jnp.einsum("bts,bsd->btd", p.astype(jnp.bfloat16), vh,
                        preferred_element_type=jnp.float32)            # (bt, T, D)

        # "Concatenate" heads by writing each head's slab into the VMEM
        # scratch at its lane offset (cheap masked vst), instead of H
        # shallow (K = D) projection matmuls.
        y_scratch[:, h * D:(h + 1) * D] = yh.reshape(rows, D).astype(jnp.bfloat16)

    # One full-depth (K = C) output projection for the whole tile.
    o_ref[0] = jnp.dot(y_scratch[...], wproj_t_ref[...],
                       preferred_element_type=jnp.float32).astype(o_ref.dtype)


def prepare_weights(w_attn, w_proj, n_head, compute_dtype=jnp.bfloat16):
    """One-time weight prep (outside the forward): transpose, fold the
    1/sqrt(head_dim) scale into the Q columns, cast to bf16."""
    C = w_proj.shape[0]
    D = C // n_head
    scale = 1.0 / math.sqrt(D)
    wqkv_t = jnp.asarray(w_attn, jnp.float32).T                 # (C, 3C)
    wqkv_t = wqkv_t.at[:, :C].multiply(scale)                   # pre-scale Q
    wproj_t = jnp.asarray(w_proj, jnp.float32).T                # (C, C)
    return wqkv_t.astype(compute_dtype), wproj_t.astype(compute_dtype)


def _pick_batch_tile(B, T, target_rows=256):
    """Largest divisor of B whose row tile (bt*T) stays <= target_rows
    (~256 rows feeds the v6e/v7x 256-high MXU; 128-multiples suit v5e).
    No forced min-grid clamp: on single-TC chips a grid of 1 is fine."""
    best = 1
    for bt in range(1, B + 1):
        if B % bt == 0 and bt * T <= target_rows:
            best = bt
    return best


@functools.partial(jax.jit, static_argnames=("n_head", "batch_tile"))
def causal_self_attention(x, wqkv_t, wproj_t, *, n_head, batch_tile=None):
    """x: (B, T, C) f32/bf16; wqkv_t: (C, 3C) bf16; wproj_t: (C, C) bf16.
    Returns (B, T, C) bf16."""
    B, T, C = x.shape
    assert C % n_head == 0
    bt = batch_tile if batch_tile is not None else _pick_batch_tile(B, T)
    assert B % bt == 0
    n_tiles = B // bt
    rows = bt * T
    assert rows % T == 0

    # Layout plumbing in the wrapper (free at the XLA level): fold batch tiles
    # into tall row blocks and cast activations to bf16 once.
    x_tiles = x.astype(wqkv_t.dtype).reshape(n_tiles, rows, C)

    kernel = functools.partial(_attn_kernel, n_head=n_head, seq_len=T)

    # TODO(synk): at large C the resident (C,3C)+(C,C) weight panels are
    # double-buffered by the pipeline; tile the QKV weight along its columns
    # (grid axis) or keep a single-buffered copy and set vmem_limit_bytes
    # before scaling C past ~1k (v7x has 64 MiB VMEM).
    out = pl.pallas_call(
        kernel,
        out_shape=jax.ShapeDtypeStruct((n_tiles, rows, C), jnp.bfloat16),
        grid_spec=pltpu.PrefetchScalarGridSpec(
            num_scalar_prefetch=0,
            grid=(n_tiles,),
            in_specs=[
                pl.BlockSpec((1, rows, C), lambda i: (i, 0, 0)),   # batch-tile of rows
                pl.BlockSpec((C, 3 * C), lambda i: (0, 0)),        # full QKV weight panel
                pl.BlockSpec((C, C), lambda i: (0, 0)),            # full proj weight panel
            ],
            out_specs=pl.BlockSpec((1, rows, C), lambda i: (i, 0, 0)),
            scratch_shapes=[pltpu.VMEM((rows, C), jnp.bfloat16)],  # head-concat buffer
        ),
        compiler_params=pltpu.CompilerParams(
            dimension_semantics=("parallel",)),   # batch-tile axis shards across TCs on v7x
    )(x_tiles, wqkv_t, wproj_t)

    return out.reshape(B, T, C)


def _reference(x, wqkv_t, wproj_t, *, n_head):
    """Pure-JAX reference mirroring the PyTorch forward (dropout=0) with the
    same bf16-operand / f32-accumulate precision policy as the kernel."""
    B, T, C = x.shape
    D = C // n_head
    cd = wqkv_t.dtype
    qkv = jnp.einsum("btc,cd->btd", x.astype(cd), wqkv_t,
                     preferred_element_type=jnp.float32)          # (B, T, 3C)
    q, k, v = jnp.split(qkv, 3, axis=-1)

    def heads(a):
        return a.reshape(B, T, n_head, D).transpose(0, 2, 1, 3).astype(cd)

    qh, kh, vh = heads(q), heads(k), heads(v)
    s = jnp.einsum("bhtd,bhsd->bhts", qh, kh,
                   preferred_element_type=jnp.float32)            # scale pre-folded
    mask = jnp.tril(jnp.ones((T, T), dtype=bool))
    s = jnp.where(mask[None, None], s, -jnp.inf)
    p = jax.nn.softmax(s, axis=-1)
    y = jnp.einsum("bhts,bhsd->bhtd", p.astype(cd), vh,
                   preferred_element_type=jnp.float32)
    y = y.transpose(0, 2, 1, 3).reshape(B, T, C).astype(cd)
    return jnp.einsum("btc,co->bto", y, wproj_t,
                      preferred_element_type=jnp.float32)


if __name__ == "__main__":
    # Small config consistent with the module: block_size=128, n_embd=128, n_head=4.
    # T=128 keeps the per-sequence score tile lane-dense; rows = 2*128 = 256.
    B, T, C, n_head = 4, 128, 128, 4

    key = jax.random.PRNGKey(0)
    kx, kw1, kw2 = jax.random.split(key, 3)

    x = jax.random.normal(kx, (B, T, C), dtype=jnp.float32)
    # nn.Linear(n_embd, 3*n_embd, bias=False).weight -> (3C, C)
    w_attn = jax.random.normal(kw1, (3 * C, C), dtype=jnp.float32) * (1.0 / math.sqrt(C))
    # nn.Linear(n_embd, n_embd, bias=False).weight -> (C, C)
    w_proj = jax.random.normal(kw2, (C, C), dtype=jnp.float32) * (1.0 / math.sqrt(C))

    # Weight prep happens once, outside the (jitted) forward.
    wqkv_t, wproj_t = prepare_weights(w_attn, w_proj, n_head)

    out = causal_self_attention(x, wqkv_t, wproj_t, n_head=n_head)
    out = jax.block_until_ready(out)

    ref = _reference(x, wqkv_t, wproj_t, n_head=n_head)
    assert out.shape == (B, T, C)
    # Tolerance accounts for the bf16-operand policy + EUP approx reciprocal
    # in the softmax denominator (softmax rows sum to 1 only to ~1e-3).
    assert jnp.allclose(out.astype(jnp.float32), ref, atol=3e-2, rtol=3e-2), \
        "mismatch vs reference"

    print("KERNEL_OK")
</pallas_src>

<mosaic_0001>
module attributes {stable_mosaic.version = 11 : i64} {
  func.func @_attn_kernel(%arg0: i32, %arg1: memref<1x256x128xbf16, #tpu.memory_space<vmem>>, %arg2: memref<128x384xbf16, #tpu.memory_space<vmem>>, %arg3: memref<128x128xbf16, #tpu.memory_space<vmem>>, %arg4: memref<1x256x128xbf16, #tpu.memory_space<vmem>>, %arg5: memref<256x128xbf16, #tpu.memory_space<vmem>>) attributes {dimension_semantics = [#tpu.dimension_semantics<parallel>], iteration_bounds = array<i64: 2>, scalar_prefetch = 0 : i64, scratch_operands = 1 : i64, tpu.core_type = #tpu.core_type<tc>, window_params = [{transform_indices = @transform_0, window_bounds = array<i64: 1, 256, 128>}, {pipeline_mode = #tpu.pipeline_mode<synchronous>, transform_indices = @transform_1, window_bounds = array<i64: 128, 384>}, {pipeline_mode = #tpu.pipeline_mode<synchronous>, transform_indices = @transform_2, window_bounds = array<i64: 128, 128>}, {transform_indices = @transform_3, window_bounds = array<i64: 1, 256, 128>}]} {
    %c0 = arith.constant 0 : index
    %c0_0 = arith.constant 0 : index
    %c0_1 = arith.constant 0 : index
    %0 = vector.load %arg1[%c0, %c0_0, %c0_1] : memref<1x256x128xbf16, #tpu.memory_space<vmem>>, vector<1x256x128xbf16>
    %1 = vector.shape_cast %0 : vector<1x256x128xbf16> to vector<256x128xbf16>
    %c0_2 = arith.constant 0 : index
    %c0_3 = arith.constant 0 : index
    %2 = vector.load %arg2[%c0_2, %c0_3] : memref<128x384xbf16, #tpu.memory_space<vmem>>, vector<128x384xbf16>
    %cst = arith.constant dense<0.000000e+00> : vector<256x384xf32>
    %3 = tpu.matmul %1, %2, %cst {dimension_numbers = #tpu.dot_dimension_numbers<[1], [0], [0], [1], [0, 0, 1, 1], [], []>} : vector<256x128xbf16>, vector<128x384xbf16>, vector<256x384xf32> -> vector<256x384xf32>
    %4 = arith.truncf %3 : vector<256x384xf32> to vector<256x384xbf16>
    %5 = tpu.iota {dimensions = array<i32: 0>} : vector<128x128xi32>
    %6 = tpu.iota {dimensions = array<i32: 1>} : vector<128x128xi32>
    %7 = arith.cmpi sge, %5, %6 : vector<128x128xi32>
    %8 = vector.extract_strided_slice %4 {offsets = [0, 0], sizes = [256, 32], strides = [1, 1]} : vector<256x384xbf16> to vector<256x32xbf16>
    %9 = vector.shape_cast %8 : vector<256x32xbf16> to vector<2x128x32xbf16>
    %10 = vector.extract_strided_slice %4 {offsets = [0, 128], sizes = [256, 32], strides = [1, 1]} : vector<256x384xbf16> to vector<256x32xbf16>
    %11 = vector.shape_cast %10 : vector<256x32xbf16> to vector<2x128x32xbf16>
    %12 = vector.extract_strided_slice %4 {offsets = [0, 256], sizes = [256, 32], strides = [1, 1]} : vector<256x384xbf16> to vector<256x32xbf16>
    %13 = vector.shape_cast %12 : vector<256x32xbf16> to vector<2x128x32xbf16>
    "tpu.trace_start"() <{level = 10 : i32, message = "btd,bsd->bts"}> : () -> ()
    %cst_4 = arith.constant dense<0.000000e+00> : vector<2x128x128xf32>
    %14 = tpu.matmul %9, %11, %cst_4 {dimension_numbers = #tpu.dot_dimension_numbers<[2], [2], [1], [1], [0, 0, 0, 1, 1, 1], [0], [0]>} : vector<2x128x32xbf16>, vector<2x128x32xbf16>, vector<2x128x128xf32> -> vector<2x128x128xf32>
    "tpu.trace_stop"() : () -> ()
    %15 = vector.shape_cast %7 : vector<128x128xi1> to vector<1x128x128xi1>
    %cst_5 = arith.constant 0xFF800000 : f32
    %16 = vector.shape_cast %15 : vector<1x128x128xi1> to vector<1x128x128xi1>
    %17 = vector.broadcast %16 : vector<1x128x128xi1> to vector<2x128x128xi1>
    %18 = vector.broadcast %cst_5 : f32 to vector<2x128x128xf32>
    %19 = arith.select %17, %14, %18 : vector<2x128x128xi1>, vector<2x128x128xf32>
    %cst_6 = arith.constant dense<0xFF800000> : vector<2x128xf32>
    %20 = vector.multi_reduction <maximumf>, %19, %cst_6 [2] : vector<2x128x128xf32> to vector<2x128xf32>
    %21 = vector.shape_cast %20 : vector<2x128xf32> to vector<2x128x1xf32>
    %22 = vector.broadcast %21 : vector<2x128x1xf32> to vector<2x128x128xf32>
    %23 = arith.subf %19, %22 : vector<2x128x128xf32>
    %24 = math.exp %23 : vector<2x128x128xf32>
    %cst_7 = arith.constant dense<0.000000e+00> : vector<2x128xf32>
    %25 = vector.multi_reduction <add>, %24, %cst_7 [2] : vector<2x128x128xf32> to vector<2x128xf32>
    %26 = vector.shape_cast %25 : vector<2x128xf32> to vector<2x128x1xf32>
    %27 = tpu.reciprocal %26 {approx = true} : vector<2x128x1xf32> -> vector<2x128x1xf32>
    %28 = vector.broadcast %27 : vector<2x128x1xf32> to vector<2x128x128xf32>
    %29 = arith.mulf %24, %28 : vector<2x128x128xf32>
    %30 = arith.truncf %29 : vector<2x128x128xf32> to vector<2x128x128xbf16>
    "tpu.trace_start"() <{level = 10 : i32, message = "bts,bsd->btd"}> : () -> ()
    %cst_8 = arith.constant dense<0.000000e+00> : vector<2x128x32xf32>
    %31 = tpu.matmul %30, %13, %cst_8 {dimension_numbers = #tpu.dot_dimension_numbers<[2], [1], [1], [2], [0, 0, 0, 1, 1, 2], [0], [0]>} : vector<2x128x128xbf16>, vector<2x128x32xbf16>, vector<2x128x32xf32> -> vector<2x128x32xf32>
    "tpu.trace_stop"() : () -> ()
    %32 = vector.shape_cast %31 : vector<2x128x32xf32> to vector<256x32xf32>
    %33 = arith.truncf %32 : vector<256x32xf32> to vector<256x32xbf16>
    %c0_9 = arith.constant 0 : index
    %c0_10 = arith.constant 0 : index
    %34 = vector.load %arg5[%c0_9, %c0_10] : memref<256x128xbf16, #tpu.memory_space<vmem>>, vector<256x32xbf16>
    tpu.vector_store %arg5[%c0_9, %c0_10], %33 {strides = array<i32>} : memref<256x128xbf16, #tpu.memory_space<vmem>>, vector<256x32xbf16>,
    %35 = vector.extract_strided_slice %4 {offsets = [0, 32], sizes = [256, 32], strides = [1, 1]} : vector<256x384xbf16> to vector<256x32xbf16>
    %36 = vector.shape_cast %35 : vector<256x32xbf16> to vector<2x128x32xbf16>
    %37 = vector.extract_strided_slice %4 {offsets = [0, 160], sizes = [256, 32], strides = [1, 1]} : vector<256x384xbf16> to vector<256x32xbf16>
    %38 = vector.shape_cast %37 : vector<256x32xbf16> to vector<2x128x32xbf16>
    %39 = vector.extract_strided_slice %4 {offsets = [0, 288], sizes = [256, 32], strides = [1, 1]} : vector<256x384xbf16> to vector<256x32xbf16>
    %40 = vector.shape_cast %39 : vector<256x32xbf16> to vector<2x128x32xbf16>
    "tpu.trace_start"() <{level = 10 : i32, message = "btd,bsd->bts"}> : () -> ()
    %cst_11 = arith.constant dense<0.000000e+00> : vector<2x128x128xf32>
    %41 = tpu.matmul %36, %38, %cst_11 {dimension_numbers = #tpu.dot_dimension_numbers<[2], [2], [1], [1], [0, 0, 0, 1, 1, 1], [0], [0]>} : vector<2x128x32xbf16>, vector<2x128x32xbf16>, vector<2x128x128xf32> -> vector<2x128x128xf32>
    "tpu.trace_stop"() : () -> ()
    %42 = vector.shape_cast %7 : vector<128x128xi1> to vector<1x128x128xi1>
    %cst_12 = arith.constant 0xFF800000 : f32
    %43 = vector.shape_cast %42 : vector<1x128x128xi1> to vector<1x128x128xi1>
    %44 = vector.broadcast %43 : vector<1x128x128xi1> to vector<2x128x128xi1>
    %45 = vector.broadcast %cst_12 : f32 to vector<2x128x128xf32>
    %46 = arith.select %44, %41, %45 : vector<2x128x128xi1>, vector<2x128x128xf32>
    %cst_13 = arith.constant dense<0xFF800000> : vector<2x128xf32>
    %47 = vector.multi_reduction <maximumf>, %46, %cst_13 [2] : vector<2x128x128xf32> to vector<2x128xf32>
    %48 = vector.shape_cast %47 : vector<2x128xf32> to vector<2x128x1xf32>
    %49 = vector.broadcast %48 : vector<2x128x1xf32> to vector<2x128x128xf32>
    %50 = arith.subf %46, %49 : vector<2x128x128xf32>
    %51 = math.exp %50 : vector<2x128x128xf32>
    %cst_14 = arith.constant dense<0.000000e+00> : vector<2x128xf32>
    %52 = vector.multi_reduction <add>, %51, %cst_14 [2] : vector<2x128x128xf32> to vector<2x128xf32>
    %53 = vector.shape_cast %52 : vector<2x128xf32> to vector<2x128x1xf32>
    %54 = tpu.reciprocal %53 {approx = true} : vector<2x128x1xf32> -> vector<2x128x1xf32>
    %55 = vector.broadcast %54 : vector<2x128x1xf32> to vector<2x128x128xf32>
    %56 = arith.mulf %51, %55 : vector<2x128x128xf32>
    %57 = arith.truncf %56 : vector<2x128x128xf32> to vector<2x128x128xbf16>
    "tpu.trace_start"() <{level = 10 : i32, message = "bts,bsd->btd"}> : () -> ()
    %cst_15 = arith.constant dense<0.000000e+00> : vector<2x128x32xf32>
    %58 = tpu.matmul %57, %40, %cst_15 {dimension_numbers = #tpu.dot_dimension_numbers<[2], [1], [1], [2], [0, 0, 0, 1, 1, 2], [0], [0]>} : vector<2x128x128xbf16>, vector<2x128x32xbf16>, vector<2x128x32xf32> -> vector<2x128x32xf32>
    "tpu.trace_stop"() : () -> ()
    %59 = vector.shape_cast %58 : vector<2x128x32xf32> to vector<256x32xf32>
    %60 = arith.truncf %59 : vector<256x32xf32> to vector<256x32xbf16>
    %c0_16 = arith.constant 0 : index
    %c32 = arith.constant 32 : index
    %61 = vector.load %arg5[%c0_16, %c32] : memref<256x128xbf16, #tpu.memory_space<vmem>>, vector<256x32xbf16>
    tpu.vector_store %arg5[%c0_16, %c32], %60 {strides = array<i32>} : memref<256x128xbf16, #tpu.memory_space<vmem>>, vector<256x32xbf16>,
    %62 = vector.extract_strided_slice %4 {offsets = [0, 64], sizes = [256, 32], strides = [1, 1]} : vector<256x384xbf16> to vector<256x32xbf16>
    %63 = vector.shape_cast %62 : vector<256x32xbf16> to vector<2x128x32xbf16>
    %64 = vector.extract_strided_slice %4 {offsets = [0, 192], sizes = [256, 32], strides = [1, 1]} : vector<256x384xbf16> to vector<256x32xbf16>
    %65 = vector.shape_cast %64 : vector<256x32xbf16> to vector<2x128x32xbf16>
    %66 = vector.extract_strided_slice %4 {offsets = [0, 320], sizes = [256, 32], strides = [1, 1]} : vector<256x384xbf16> to vector<256x32xbf16>
    %67 = vector.shape_cast %66 : vector<256x32xbf16> to vector<2x128x32xbf16>
    "tpu.trace_start"() <{level = 10 : i32, message = "btd,bsd->bts"}> : () -> ()
    %cst_17 = arith.constant dense<0.000000e+00> : vector<2x128x128xf32>
    %68 = tpu.matmul %63, %65, %cst_17 {dimension_numbers = #tpu.dot_dimension_numbers<[2], [2], [1], [1], [0, 0, 0, 1, 1, 1], [0], [0]>} : vector<2x128x32xbf16>, vector<2x128x32xbf16>, vector<2x128x128xf32> -> vector<2x128x128xf32>
    "tpu.trace_stop"() : () -> ()
    %69 = vector.shape_cast %7 : vector<128x128xi1> to vector<1x128x128xi1>
    %cst_18 = arith.constant 0xFF800000 : f32
    %70 = vector.shape_cast %69 : vector<1x128x128xi1> to vector<1x128x128xi1>
    %71 = vector.broadcast %70 : vector<1x128x128xi1> to vector<2x128x128xi1>
    %72 = vector.broadcast %cst_18 : f32 to vector<2x128x128xf32>
    %73 = arith.select %71, %68, %72 : vector<2x128x128xi1>, vector<2x128x128xf32>
    %cst_19 = arith.constant dense<0xFF800000> : vector<2x128xf32>
    %74 = vector.multi_reduction <maximumf>, %73, %cst_19 [2] : vector<2x128x128xf32> to vector<2x128xf32>
    %75 = vector.shape_cast %74 : vector<2x128xf32> to vector<2x128x1xf32>
    %76 = vector.broadcast %75 : vector<2x128x1xf32> to vector<2x128x128xf32>
    %77 = arith.subf %73, %76 : vector<2x128x128xf32>
    %78 = math.exp %77 : vector<2x128x128xf32>
    %cst_20 = arith.constant dense<0.000000e+00> : vector<2x128xf32>
    %79 = vector.multi_reduction <add>, %78, %cst_20 [2] : vector<2x128x128xf32> to vector<2x128xf32>
    %80 = vector.shape_cast %79 : vector<2x128xf32> to vector<2x128x1xf32>
    %81 = tpu.reciprocal %80 {approx = true} : vector<2x128x1xf32> -> vector<2x128x1xf32>
    %82 = vector.broadcast %81 : vector<2x128x1xf32> to vector<2x128x128xf32>
    %83 = arith.mulf %78, %82 : vector<2x128x128xf32>
    %84 = arith.truncf %83 : vector<2x128x128xf32> to vector<2x128x128xbf16>
    "tpu.trace_start"() <{level = 10 : i32, message = "bts,bsd->btd"}> : () -> ()
    %cst_21 = arith.constant dense<0.000000e+00> : vector<2x128x32xf32>
    %85 = tpu.matmul %84, %67, %cst_21 {dimension_numbers = #tpu.dot_dimension_numbers<[2], [1], [1], [2], [0, 0, 0, 1, 1, 2], [0], [0]>} : vector<2x128x128xbf16>, vector<2x128x32xbf16>, vector<2x128x32xf32> -> vector<2x128x32xf32>
    "tpu.trace_stop"() : () -> ()
    %86 = vector.shape_cast %85 : vector<2x128x32xf32> to vector<256x32xf32>
    %87 = arith.truncf %86 : vector<256x32xf32> to vector<256x32xbf16>
    %c0_22 = arith.constant 0 : index
    %c64 = arith.constant 64 : index
    %88 = vector.load %arg5[%c0_22, %c64] : memref<256x128xbf16, #tpu.memory_space<vmem>>, vector<256x32xbf16>
    tpu.vector_store %arg5[%c0_22, %c64], %87 {strides = array<i32>} : memref<256x128xbf16, #tpu.memory_space<vmem>>, vector<256x32xbf16>,
    %89 = vector.extract_strided_slice %4 {offsets = [0, 96], sizes = [256, 32], strides = [1, 1]} : vector<256x384xbf16> to vector<256x32xbf16>
    %90 = vector.shape_cast %89 : vector<256x32xbf16> to vector<2x128x32xbf16>
    %91 = vector.extract_strided_slice %4 {offsets = [0, 224], sizes = [256, 32], strides = [1, 1]} : vector<256x384xbf16> to vector<256x32xbf16>
    %92 = vector.shape_cast %91 : vector<256x32xbf16> to vector<2x128x32xbf16>
    %93 = vector.extract_strided_slice %4 {offsets = [0, 352], sizes = [256, 32], strides = [1, 1]} : vector<256x384xbf16> to vector<256x32xbf16>
    %94 = vector.shape_cast %93 : vector<256x32xbf16> to vector<2x128x32xbf16>
    "tpu.trace_start"() <{level = 10 : i32, message = "btd,bsd->bts"}> : () -> ()
    %cst_23 = arith.constant dense<0.000000e+00> : vector<2x128x128xf32>
    %95 = tpu.matmul %90, %92, %cst_23 {dimension_numbers = #tpu.dot_dimension_numbers<[2], [2], [1], [1], [0, 0, 0, 1, 1, 1], [0], [0]>} : vector<2x128x32xbf16>, vector<2x128x32xbf16>, vector<2x128x128xf32> -> vector<2x128x128xf32>
    "tpu.trace_stop"() : () -> ()
    %96 = vector.shape_cast %7 : vector<128x128xi1> to vector<1x128x128xi1>
    %cst_24 = arith.constant 0xFF800000 : f32
    %97 = vector.shape_cast %96 : vector<1x128x128xi1> to vector<1x128x128xi1>
    %98 = vector.broadcast %97 : vector<1x128x128xi1> to vector<2x128x128xi1>
    %99 = vector.broadcast %cst_24 : f32 to vector<2x128x128xf32>
    %100 = arith.select %98, %95, %99 : vector<2x128x128xi1>, vector<2x128x128xf32>
    %cst_25 = arith.constant dense<0xFF800000> : vector<2x128xf32>
    %101 = vector.multi_reduction <maximumf>, %100, %cst_25 [2] : vector<2x128x128xf32> to vector<2x128xf32>
    %102 = vector.shape_cast %101 : vector<2x128xf32> to vector<2x128x1xf32>
    %103 = vector.broadcast %102 : vector<2x128x1xf32> to vector<2x128x128xf32>
    %104 = arith.subf %100, %103 : vector<2x128x128xf32>
    %105 = math.exp %104 : vector<2x128x128xf32>
    %cst_26 = arith.constant dense<0.000000e+00> : vector<2x128xf32>
    %106 = vector.multi_reduction <add>, %105, %cst_26 [2] : vector<2x128x128xf32> to vector<2x128xf32>
    %107 = vector.shape_cast %106 : vector<2x128xf32> to vector<2x128x1xf32>
    %108 = tpu.reciprocal %107 {approx = true} : vector<2x128x1xf32> -> vector<2x128x1xf32>
    %109 = vector.broadcast %108 : vector<2x128x1xf32> to vector<2x128x128xf32>
    %110 = arith.mulf %105, %109 : vector<2x128x128xf32>
    %111 = arith.truncf %110 : vector<2x128x128xf32> to vector<2x128x128xbf16>
    "tpu.trace_start"() <{level = 10 : i32, message = "bts,bsd->btd"}> : () -> ()
    %cst_27 = arith.constant dense<0.000000e+00> : vector<2x128x32xf32>
    %112 = tpu.matmul %111, %94, %cst_27 {dimension_numbers = #tpu.dot_dimension_numbers<[2], [1], [1], [2], [0, 0, 0, 1, 1, 2], [0], [0]>} : vector<2x128x128xbf16>, vector<2x128x32xbf16>, vector<2x128x32xf32> -> vector<2x128x32xf32>
    "tpu.trace_stop"() : () -> ()
    %113 = vector.shape_cast %112 : vector<2x128x32xf32> to vector<256x32xf32>
    %114 = arith.truncf %113 : vector<256x32xf32> to vector<256x32xbf16>
    %c0_28 = arith.constant 0 : index
    %c96 = arith.constant 96 : index
    %115 = vector.load %arg5[%c0_28, %c96] : memref<256x128xbf16, #tpu.memory_space<vmem>>, vector<256x32xbf16>
    tpu.vector_store %arg5[%c0_28, %c96], %114 {strides = array<i32>} : memref<256x128xbf16, #tpu.memory_space<vmem>>, vector<256x32xbf16>,
    %c0_29 = arith.constant 0 : index
    %c0_30 = arith.constant 0 : index
    %116 = vector.load %arg5[%c0_29, %c0_30] : memref<256x128xbf16, #tpu.memory_space<vmem>>, vector<256x128xbf16>
    %c0_31 = arith.constant 0 : index
    %c0_32 = arith.constant 0 : index
    %117 = vector.load %arg3[%c0_31, %c0_32] : memref<128x128xbf16, #tpu.memory_space<vmem>>, vector<128x128xbf16>
    %cst_33 = arith.constant dense<0.000000e+00> : vector<256x128xf32>
    %118 = tpu.matmul %116, %117, %cst_33 {dimension_numbers = #tpu.dot_dimension_numbers<[1], [0], [0], [1], [0, 0, 1, 1], [], []>} : vector<256x128xbf16>, vector<128x128xbf16>, vector<256x128xf32> -> vector<256x128xf32>
    %119 = arith.truncf %118 : vector<256x128xf32> to vector<256x128xbf16>
    %c0_34 = arith.constant 0 : index
    %c0_35 = arith.constant 0 : index
    %c0_36 = arith.constant 0 : index
    %120 = vector.load %arg4[%c0_34, %c0_35, %c0_36] : memref<1x256x128xbf16, #tpu.memory_space<vmem>>, vector<1x256x128xbf16>
    %121 = vector.shape_cast %120 : vector<1x256x128xbf16> to vector<256x128xbf16>
    %122 = vector.shape_cast %119 : vector<256x128xbf16> to vector<1x256x128xbf16>
    tpu.vector_store %arg4[%c0_34, %c0_35, %c0_36], %122 {strides = array<i32>} : memref<1x256x128xbf16, #tpu.memory_space<vmem>>, vector<1x256x128xbf16>,
    return
  }
  func.func @transform_0(%arg0: i32) -> (i32, i32, i32) {
    %c0_i32 = arith.constant 0 : i32
    %c0_i32_0 = arith.constant 0 : i32
    %c0_i32_1 = arith.constant 0 : i32
    return %arg0, %c0_i32, %c0_i32_0 : i32, i32, i32
  }
  func.func @transform_1(%arg0: i32) -> (i32, i32) {
    %c0_i32 = arith.constant 0 : i32
    %c0_i32_0 = arith.constant 0 : i32
    %c0_i32_1 = arith.constant 0 : i32
    return %c0_i32, %c0_i32_0 : i32, i32
  }
  func.func @transform_2(%arg0: i32) -> (i32, i32) {
    %c0_i32 = arith.constant 0 : i32
    %c0_i32_0 = arith.constant 0 : i32
    %c0_i32_1 = arith.constant 0 : i32
    return %c0_i32, %c0_i32_0 : i32, i32
  }
  func.func @transform_3(%arg0: i32) -> (i32, i32, i32) {
    %c0_i32 = arith.constant 0 : i32
    %c0_i32_0 = arith.constant 0 : i32
    %c0_i32_1 = arith.constant 0 : i32
    return %arg0, %c0_i32, %c0_i32_0 : i32, i32, i32
  }
}

</mosaic_0001>

<llo_original>
// kernel: causal_self_attention.1
$region0: #{causal_self_attention.1}
  #allocation0 [shape = 'u32[]', space=smem, size = 0x4, offset = 0x4, fixed_abs, tag = 'smem constant byte address 0x4 - core index']
  #allocation1 [shape = 'u32[72,128]{1,0:T(1,128)}', space=vmem, size = 0x9000, scoped, tag = 'internal scratch']
  #allocation2 [shape = 'bf16[256,128]{1,0:T(8,128)(2,1)}', space=vmem, size = 0x10000, scoped, tag = 'scratch operand']
  %s0 = inlined_call_operand.vmem [shape: bf16[2,256,128], index: 0, kind: input, shape index: {}]
  %s1 = inlined_call_operand.vmem [shape: bf16[128,384], index: 1, kind: input, shape index: {}]
  %s2 = inlined_call_operand.vmem [shape: bf16[128,128], index: 2, kind: input, shape index: {}]
  %s3 = inlined_call_operand.hbm [shape: bf16[2,256,128], index: 3, kind: output, shape index: {}]
  %s4 = sld [smem:[#allocation0]]
  $region45: #{causal_self_attention.1} parent=0
    _
  %s6 = ssub.s32 1, %s4
  %s7 = scalar_select 0, %s6, %s4
  $region1: #{causal_self_attention.1} parent=0
    #allocation3 [shape = 'u8[131072]{0}', space=vmem, size = 0x20000, scoped, tag = 'output window, operand 0']
    #allocation4 [shape = 's32[2]{0}', space=sflag, size = 0x8, scoped, tag = 'scoped memory for causal_self_attention.1']
    %8 = vsyncpa [#allocation4], 0
    %s9 = scalar_lea.sflag [#allocation4], 1
    %10 = vsyncpa %s9, 0
    loop: start=0, step=1, limit=4
    $region2: #{causal_self_attention.1} parent=1 // loop_pre_header
      _
    $region3: #{causal_self_attention.1} parent=1 // loop_header
      %s12 = sphi 0, %s16
      %p13 = scmp.ge.s32.totalorder %s12, 4
      %s22 = sphi 0, %s24
      %s25 = sphi 0, %s22
      %s26 = sphi 0, %s25
      %s42 = sphi 0, %s26
      %s46 = sphi 0, %s46
      %s48 = sphi 0, %s46
      %s49 = sphi 0, %s48
      %s63 = sphi 0, %s49
      %s67 = sphi 0, %s67
      %s69 = sphi 0, %s67
      %s70 = sphi 0, %s69
      %s84 = sphi 0, %s70
      %s90 = sphi 0, %s92
      %s93 = sphi 0, %s90
      %s94 = sphi 0, %s93
      %s110 = sphi 0, %s94
    $region4: #{causal_self_attention.1} parent=1 // loop_header_branch
      %15 = sbr.rel (%p13) target = $region8
    $region5: #{causal_self_attention.1} parent=1 // loop_body
      %s17 = ssub.s32 %s12, 1
      %s18 = ssub.s32 %s12, 2
      %s19 = sadd.s32 %s12, 1
      %s20 = ssub.s32 %s12, %s19
      %p21 = scmp.eq.s32.totalorder %s20, 0
      %s23 = sadd.s32 %s22, 1
      %s24 = scalar_select %p21, %s22, %s23
      %p27 = pneg %p21
      %p28 = scmp.eq.s32.totalorder %s12, 1
      %p29 = por %p27, %p28
      %p30 = scmp.ne.s32.totalorder %s22, %s25
      %p31 = scmp.eq.s32.totalorder %s12, 0
      %p32 = por %p30, %p31
      %p33 = scmp.ne.s32.totalorder %s22, %s25
      %p34 = scmp.eq.s32.totalorder %s17, 1
      %p35 = por %p33, %p34
      %p36 = scmp.ne.s32.totalorder %s25, %s26
      %p37 = scmp.eq.s32.totalorder %s17, 0
      %p38 = por %p36, %p37
      %p39 = scmp.ne.s32.totalorder %s25, %s26
      %p40 = scmp.eq.s32.totalorder %s18, 1
      %p41 = por %p39, %p40
      %p43 = scmp.ne.s32.totalorder %s26, %s42
      %p44 = scmp.eq.s32.totalorder %s18, 0
      %p45 = por %p43, %p44
      %s47 = sadd.s32 %s46, 1
      %p50 = scmp.eq.s32.totalorder %s12, 1
      %p51 = scmp.ne.s32.totalorder %s46, %s48
      %p52 = scmp.eq.s32.totalorder %s12, 0
      %p53 = por %p51, %p52
      %p54 = scmp.ne.s32.totalorder %s46, %s48
      %p55 = scmp.eq.s32.totalorder %s17, 1
      %p56 = por %p54, %p55
      %p57 = scmp.ne.s32.totalorder %s48, %s49
      %p58 = scmp.eq.s32.totalorder %s17, 0
      %p59 = por %p57, %p58
      %p60 = scmp.ne.s32.totalorder %s48, %s49
      %p61 = scmp.eq.s32.totalorder %s18, 1
      %p62 = por %p60, %p61
      %p64 = scmp.ne.s32.totalorder %s49, %s63
      %p65 = scmp.eq.s32.totalorder %s18, 0
      %p66 = por %p64, %p65
      %s68 = sadd.s32 %s67, 1
      %p71 = scmp.eq.s32.totalorder %s12, 1
      %p72 = scmp.ne.s32.totalorder %s67, %s69
      %p73 = scmp.eq.s32.totalorder %s12, 0
      %p74 = por %p72, %p73
      %p75 = scmp.ne.s32.totalorder %s67, %s69
      %p76 = scmp.eq.s32.totalorder %s17, 1
      %p77 = por %p75, %p76
      %p78 = scmp.ne.s32.totalorder %s69, %s70
      %p79 = scmp.eq.s32.totalorder %s17, 0
      %p80 = por %p78, %p79
      %p81 = scmp.ne.s32.totalorder %s69, %s70
      %p82 = scmp.eq.s32.totalorder %s18, 1
      %p83 = por %p81, %p82
      %p85 = scmp.ne.s32.totalorder %s70, %s84
      %p86 = scmp.eq.s32.totalorder %s18, 0
      %p87 = por %p85, %p86
      %s88 = ssub.s32 %s12, %s19
      %p89 = scmp.eq.s32.totalorder %s88, 0
      %s91 = sadd.s32 %s90, 1
      %s92 = scalar_select %p89, %s90, %s91
      %p95 = pneg %p89
      %p96 = scmp.eq.s32.totalorder %s12, 1
      %p97 = por %p95, %p96
      %p98 = scmp.ne.s32.totalorder %s90, %s93
      %p99 = scmp.eq.s32.totalorder %s12, 0
      %p100 = por %p98, %p99
      %p101 = scmp.ne.s32.totalorder %s90, %s93
      %p102 = scmp.eq.s32.totalorder %s17, 1
      %p103 = por %p101, %p102
      %p104 = scmp.ne.s32.totalorder %s93, %s94
      %p105 = scmp.eq.s32.totalorder %s17, 0
      %p106 = por %p104, %p105
      %p107 = scmp.ne.s32.totalorder %s93, %s94
      %p108 = scmp.eq.s32.totalorder %s18, 1
      %p109 = por %p107, %p108
      %p111 = scmp.ne.s32.totalorder %s94, %s110
      %p112 = scmp.eq.s32.totalorder %s18, 0
      %p113 = por %p111, %p112
      %p114 = scmp.le.s32.totalorder 1, %s12
      %p115 = scmp.lt.s32.totalorder %s12, 3
      %p116 = pnand %p114, %p115
      %p117 = pneg %p116
      // Predicated region
      $region9: #{causal_self_attention.1} parent=5 // pred_check
        _
      $region10: #{causal_self_attention.1} parent=5 // pred_check_branch
        %119 = sbr.rel (%p116) target = $region12
      $region11: #{causal_self_attention.1} parent=5 // pred_region
        %s120 = ssub.s32 %s12, 1
        // Predicated region
        $region13: #{causal_self_attention.1} parent=11 // pred_check
          %p121 = pneg %p59
        $region14: #{causal_self_attention.1} parent=11 // pred_check_branch
          %123 = sbr.rel (%p121) target = $region16
        $region15: #{causal_self_attention.1} parent=11 // pred_region
          _
        $region16: #{causal_self_attention.1} parent=11 // pred_fallthru
          _
        // Predicated region
        $region17: #{causal_self_attention.1} parent=11 // pred_check
          %p124 = pneg %p80
        $region18: #{causal_self_attention.1} parent=11 // pred_check_branch
          %126 = sbr.rel (%p124) target = $region20
        $region19: #{causal_self_attention.1} parent=11 // pred_region
          _
        $region20: #{causal_self_attention.1} parent=11 // pred_fallthru
          _
      $region12: #{causal_self_attention.1} parent=5 // pred_fallthru
        _
      %p127 = scmp.lt.s32.totalorder %s12, 2
      // Predicated region
      $region21: #{causal_self_attention.1} parent=5 // pred_check
        %p128 = pneg %p127
      $region22: #{causal_self_attention.1} parent=5 // pred_check_branch
        %130 = sbr.rel (%p128) target = $region24
      $region23: #{causal_self_attention.1} parent=5 // pred_region
        // Predicated region
        $region25: #{causal_self_attention.1} parent=23 // pred_check
          %p131 = pneg %p32
        $region26: #{causal_self_attention.1} parent=23 // pred_check_branch
          %133 = sbr.rel (%p131) target = $region28
        $region27: #{causal_self_attention.1} parent=23 // pred_region
          %p134 = scmp.lt.s32.totalorder %s12, 1
          %s135 = scalar_select %p134, %s12, 1
          %s136 = smul.addr %s135, 32
          %s137 = smul.addr %s136, 4
          %s138 = scalar_lea.vmem %s0, %s137
        $region28: #{causal_self_attention.1} parent=23 // pred_fallthru
          _
      $region24: #{causal_self_attention.1} parent=5 // pred_fallthru
        _
      %p139 = scmp.le.s32.totalorder 1, %s12
      %p140 = scmp.lt.s32.totalorder %s12, 3
      %p141 = pnand %p139, %p140
      %p142 = pneg %p141
      // Predicated region
      $region29: #{causal_self_attention.1} parent=5 // pred_check
        _
      $region30: #{causal_self_attention.1} parent=5 // pred_check_branch
        %144 = sbr.rel (%p141) target = $region32
      $region31: #{causal_self_attention.1} parent=5 // pred_region
        %s145 = ssub.s32 %s12, 1
        %p146 = scmp.lt.s32.totalorder %s17, 1
        %s147 = scalar_select %p146, %s17, 1
        %s148 = smul.addr %s147, 32
        %s149 = smul.addr %s148, 4
        %s150 = scalar_lea.vmem %s0, %s149
        %p151 = pneg %p38
        %p152 = pneg %p35
        %p153 = pneg %p59
        %p154 = pneg %p56
        %p155 = pneg %p80
        %p156 = pneg %p77
        %p157 = pneg %p106
        %p158 = pneg %p103
        %s159 = sand.u32 %s93, 1
        %s160 = scalar_lea.sflag [#allocation4], %s159
        %s161 = sand.u32 %s93, 1
        %s162 = smul.addr %s161, 128
        %s163 = scalar_lea.vmem [#allocation3], %s162
        %p164 = scmp.lt.s32.totalorder %s17, 1
        %s165 = scalar_select %p164, %s17, 1
        %s166 = smul.addr %s165, 32
        %s167 = smul.addr %s166, 4
        %s168 = scalar_lea.vmem %s0, %s167
        %v169 = vld [vmem:[%s168] sm:$0xf]
        %v170 = vld [vmem:[%s168 + $0x4] sm:$0xf]
        %v171 = vld [vmem:[%s168 + $0x8] sm:$0xf]
        %v172 = vld [vmem:[%s168 + $0xc] sm:$0xf]
        %v173 = vld [vmem:[%s168 + $0x10] sm:$0xf]
        %v174 = vld [vmem:[%s168 + $0x14] sm:$0xf]
        %v175 = vld [vmem:[%s168 + $0x18] sm:$0xf]
        %v176 = vld [vmem:[%s168 + $0x1c] sm:$0xf]
        %v177 = vld [vmem:[%s168 + $0x20] sm:$0xf]
        %v178 = vld [vmem:[%s168 + $0x24] sm:$0xf]
        %v179 = vld [vmem:[%s168 + $0x28] sm:$0xf]
        %v180 = vld [vmem:[%s168 + $0x2c] sm:$0xf]
        %v181 = vld [vmem:[%s168 + $0x30] sm:$0xf]
        %v182 = vld [vmem:[%s168 + $0x34] sm:$0xf]
        %v183 = vld [vmem:[%s168 + $0x38] sm:$0xf]
        %v184 = vld [vmem:[%s168 + $0x3c] sm:$0xf]
        %v185 = vld [vmem:[%s168 + $0x40] sm:$0xf]
        %v186 = vld [vmem:[%s168 + $0x44] sm:$0xf]
        %v187 = vld [vmem:[%s168 + $0x48] sm:$0xf]
        %v188 = vld [vmem:[%s168 + $0x4c] sm:$0xf]
        %v189 = vld [vmem:[%s168 + $0x50] sm:$0xf]
        %v190 = vld [vmem:[%s168 + $0x54] sm:$0xf]
        %v191 = vld [vmem:[%s168 + $0x58] sm:$0xf]
        %v192 = vld [vmem:[%s168 + $0x5c] sm:$0xf]
        %v193 = vld [vmem:[%s168 + $0x60] sm:$0xf]
        %v194 = vld [vmem:[%s168 + $0x64] sm:$0xf]
        %v195 = vld [vmem:[%s168 + $0x68] sm:$0xf]
        %v196 = vld [vmem:[%s168 + $0x6c] sm:$0xf]
        %v197 = vld [vmem:[%s168 + $0x70] sm:$0xf]
        %v198 = vld [vmem:[%s168 + $0x74] sm:$0xf]
        %v199 = vld [vmem:[%s168 + $0x78] sm:$0xf]
        %v200 = vld [vmem:[%s168 + $0x7c] sm:$0xf]
        %v201 = vld [vmem:[%s1] sm:$0xff]
        %v202 = vld [vmem:[%s1 + $0x8] sm:$0xf]
        %v203 = vld [vmem:[%s1 + $0xc] sm:$0xff]
        %v204 = vld [vmem:[%s1 + $0x14] sm:$0xf]
        %v205 = vld [vmem:[%s1 + $0x18] sm:$0xff]
        %v206 = vld [vmem:[%s1 + $0x20] sm:$0xf]
        %v207 = vld [vmem:[%s1 + $0x24] sm:$0xff]
        %v208 = vld [vmem:[%s1 + $0x2c] sm:$0xf]
        %v209 = vld [vmem:[%s1 + $0x30] sm:$0xff]
        %v210 = vld [vmem:[%s1 + $0x38] sm:$0xf]
        %v211 = vld [vmem:[%s1 + $0x3c] sm:$0xff]
        %v212 = vld [vmem:[%s1 + $0x44] sm:$0xf]
        %v213 = vld [vmem:[%s1 + $0x48] sm:$0xff]
        %v214 = vld [vmem:[%s1 + $0x50] sm:$0xf]
        %v215 = vld [vmem:[%s1 + $0x54] sm:$0xff]
        %v216 = vld [vmem:[%s1 + $0x5c] sm:$0xf]
        %v217 = vld [vmem:[%s1 + $0x60] sm:$0xff]
        %v218 = vld [vmem:[%s1 + $0x68] sm:$0xf]
        %v219 = vld [vmem:[%s1 + $0x6c] sm:$0xff]
        %v220 = vld [vmem:[%s1 + $0x74] sm:$0xf]
        %v221 = vld [vmem:[%s1 + $0x78] sm:$0xff]
        %v222 = vld [vmem:[%s1 + $0x80] sm:$0xf]
        %v223 = vld [vmem:[%s1 + $0x84] sm:$0xff]
        %v224 = vld [vmem:[%s1 + $0x8c] sm:$0xf]
        %v225 = vld [vmem:[%s1 + $0x90] sm:$0xff]
        %v226 = vld [vmem:[%s1 + $0x98] sm:$0xf]
        %v227 = vld [vmem:[%s1 + $0x9c] sm:$0xff]
        %v228 = vld [vmem:[%s1 + $0xa4] sm:$0xf]
        %v229 = vld [vmem:[%s1 + $0xa8] sm:$0xff]
        %v230 = vld [vmem:[%s1 + $0xb0] sm:$0xf]
        %v231 = vld [vmem:[%s1 + $0xb4] sm:$0xff]
        %v232 = vld [vmem:[%s1 + $0xbc] sm:$0xf]
        %v265 = vunpack.c.l.b16 %v169
        %v266 = vunpack.c.l.b16 %v170
        %v267 = vunpack.c.l.b16 %v171
        %v268 = vunpack.c.l.b16 %v172
        %v269 = vunpack.c.l.b16 %v173
        %v270 = vunpack.c.l.b16 %v174
        %v271 = vunpack.c.l.b16 %v175
        %v272 = vunpack.c.l.b16 %v176
        %v273 = vunpack.c.l.b16 %v177
        %v274 = vunpack.c.l.b16 %v178
        %v275 = vunpack.c.l.b16 %v179
        %v276 = vunpack.c.l.b16 %v180
        %v277 = vunpack.c.l.b16 %v181
        %v278 = vunpack.c.l.b16 %v182
        %v279 = vunpack.c.l.b16 %v183
        %v280 = vunpack.c.l.b16 %v184
        %v281 = vunpack.c.l.b16 %v185
        %v282 = vunpack.c.l.b16 %v186
        %v283 = vunpack.c.l.b16 %v187
        %v284 = vunpack.c.l.b16 %v188
        %v285 = vunpack.c.l.b16 %v189
        %v286 = vunpack.c.l.b16 %v190
        %v287 = vunpack.c.l.b16 %v191
        %v288 = vunpack.c.l.b16 %v192
        %v289 = vunpack.c.l.b16 %v193
        %v290 = vunpack.c.l.b16 %v194
        %v291 = vunpack.c.l.b16 %v195
        %v292 = vunpack.c.l.b16 %v196
        %v293 = vunpack.c.l.b16 %v197
        %v294 = vunpack.c.l.b16 %v198
        %v295 = vunpack.c.l.b16 %v199
        %v296 = vunpack.c.l.b16 %v200
        %v297 = vpack.c.b16 %v266, %v265
        %v298 = vpack.c.b16 %v268, %v267
        %v299 = vpack.c.b16 %v270, %v269
        %v300 = vpack.c.b16 %v272, %v271
        %v301 = vpack.c.b16 %v274, %v273
        %v302 = vpack.c.b16 %v276, %v275
        %v303 = vpack.c.b16 %v278, %v277
        %v304 = vpack.c.b16 %v280, %v279
        %v305 = vpack.c.b16 %v282, %v281
        %v306 = vpack.c.b16 %v284, %v283
        %v307 = vpack.c.b16 %v286, %v285
        %v308 = vpack.c.b16 %v288, %v287
        %v309 = vpack.c.b16 %v290, %v289
        %v310 = vpack.c.b16 %v292, %v291
        %v311 = vpack.c.b16 %v294, %v293
        %v312 = vpack.c.b16 %v296, %v295
        %v361 = vunpack.c.l.b16 %v201
        %v362 = vunpack.c.h.b16 %v201
        %v363 = vunpack.c.l.b16 %v202
        %v364 = vunpack.c.l.b16 %v203
        %v365 = vunpack.c.h.b16 %v203
        %v366 = vunpack.c.l.b16 %v204
        %v367 = vunpack.c.l.b16 %v205
        %v368 = vunpack.c.h.b16 %v205
        %v369 = vunpack.c.l.b16 %v206
        %v370 = vunpack.c.l.b16 %v207
        %v371 = vunpack.c.h.b16 %v207
        %v372 = vunpack.c.l.b16 %v208
        %v373 = vunpack.c.l.b16 %v209
        %v374 = vunpack.c.h.b16 %v209
        %v375 = vunpack.c.l.b16 %v210
        %v376 = vunpack.c.l.b16 %v211
        %v377 = vunpack.c.h.b16 %v211
        %v378 = vunpack.c.l.b16 %v212
        %v379 = vunpack.c.l.b16 %v213
        %v380 = vunpack.c.h.b16 %v213
        %v381 = vunpack.c.l.b16 %v214
        %v382 = vunpack.c.l.b16 %v215
        %v383 = vunpack.c.h.b16 %v215
        %v384 = vunpack.c.l.b16 %v216
        %v385 = vunpack.c.l.b16 %v217
        %v386 = vunpack.c.h.b16 %v217
        %v387 = vunpack.c.l.b16 %v218
        %v388 = vunpack.c.l.b16 %v219
        %v389 = vunpack.c.h.b16 %v219
        %v390 = vunpack.c.l.b16 %v220
        %v391 = vunpack.c.l.b16 %v221
        %v392 = vunpack.c.h.b16 %v221
        %v393 = vunpack.c.l.b16 %v222
        %v394 = vunpack.c.l.b16 %v223
        %v395 = vunpack.c.h.b16 %v223
        %v396 = vunpack.c.l.b16 %v224
        %v397 = vunpack.c.l.b16 %v225
        %v398 = vunpack.c.h.b16 %v225
        %v399 = vunpack.c.l.b16 %v226
        %v400 = vunpack.c.l.b16 %v227
        %v401 = vunpack.c.h.b16 %v227
        %v402 = vunpack.c.l.b16 %v228
        %v403 = vunpack.c.l.b16 %v229
        %v404 = vunpack.c.h.b16 %v229
        %v405 = vunpack.c.l.b16 %v230
        %v406 = vunpack.c.l.b16 %v231
        %v407 = vunpack.c.h.b16 %v231
        %v408 = vunpack.c.l.b16 %v232
        %v409 = vpack.c.b16 %v364, %v361
        %v410 = vpack.c.b16 %v365, %v362
        %v411 = vpack.c.b16 %v366, %v363
        %v412 = vpack.c.b16 %v370, %v367
        %v413 = vpack.c.b16 %v371, %v368
        %v414 = vpack.c.b16 %v372, %v369
        %v415 = vpack.c.b16 %v376, %v373
        %v416 = vpack.c.b16 %v377, %v374
        %v417 = vpack.c.b16 %v378, %v375
        %v418 = vpack.c.b16 %v382, %v379
        %v419 = vpack.c.b16 %v383, %v380
        %v420 = vpack.c.b16 %v384, %v381
        %v421 = vpack.c.b16 %v388, %v385
        %v422 = vpack.c.b16 %v389, %v386
        %v423 = vpack.c.b16 %v390, %v387
        %v424 = vpack.c.b16 %v394, %v391
        %v425 = vpack.c.b16 %v395, %v392
        %v426 = vpack.c.b16 %v396, %v393
        %v427 = vpack.c.b16 %v400, %v397
        %v428 = vpack.c.b16 %v401, %v398
        %v429 = vpack.c.b16 %v402, %v399
        %v430 = vpack.c.b16 %v406, %v403
        %v431 = vpack.c.b16 %v407, %v404
        %v432 = vpack.c.b16 %v408, %v405
        %457 = vmatpush.bf16.msra.mxu0 %v430
        %458 = vmatpush.bf16.msra.mxu0 %v427
        %459 = vmatpush.bf16.msra.mxu0 %v424
        %460 = vmatpush.bf16.msra.mxu0 %v421
        %461 = vmatpush.bf16.msra.mxu0 %v418
        %462 = vmatpush.bf16.msra.mxu0 %v415
        %463 = vmatpush.bf16.msra.mxu0 %v412
        %464 = vmatpush.bf16.msra.mxu0 %v409
        %465 = vmatmul.bf16.gmra.mxu0 %v297
        %v466 = vpop.f32.mrf.mxu0
        %v467 = vadd.f32 0.0, %v466
        %v468 = vpop.f32.mrf.mxu0
        %v469 = vadd.f32 0.0, %v468
        %470 = vmatmul.bf16.gmra.mxu0 %v298
        %v471 = vpop.f32.mrf.mxu0
        %v472 = vadd.f32 0.0, %v471
        %v473 = vpop.f32.mrf.mxu0
        %v474 = vadd.f32 0.0, %v473
        %475 = vmatmul.bf16.gmra.mxu0 %v299
        %v476 = vpop.f32.mrf.mxu0
        %v477 = vadd.f32 0.0, %v476
        %v478 = vpop.f32.mrf.mxu0
        %v479 = vadd.f32 0.0, %v478
        %480 = vmatmul.bf16.gmra.mxu0 %v300
        %v481 = vpop.f32.mrf.mxu0
        %v482 = vadd.f32 0.0, %v481
        %v483 = vpop.f32.mrf.mxu0
        %v484 = vadd.f32 0.0, %v483
        %485 = vmatmul.bf16.gmra.mxu0 %v301
        %v486 = vpop.f32.mrf.mxu0
        %v487 = vadd.f32 0.0, %v486
        %v488 = vpop.f32.mrf.mxu0
        %v489 = vadd.f32 0.0, %v488
        %490 = vmatmul.bf16.gmra.mxu0 %v302
        %v491 = vpop.f32.mrf.mxu0
        %v492 = vadd.f32 0.0, %v491
        %v493 = vpop.f32.mrf.mxu0
        %v494 = vadd.f32 0.0, %v493
        %495 = vmatmul.bf16.gmra.mxu0 %v303
        %v496 = vpop.f32.mrf.mxu0
        %v497 = vadd.f32 0.0, %v496
        %v498 = vpop.f32.mrf.mxu0
        %v499 = vadd.f32 0.0, %v498
        %500 = vmatmul.bf16.gmra.mxu0 %v304
        %v501 = vpop.f32.mrf.mxu0
        %v502 = vadd.f32 0.0, %v501
        %v503 = vpop.f32.mrf.mxu0
        %v504 = vadd.f32 0.0, %v503
        %505 = vmatmul.bf16.gmra.mxu0 %v305
        %v506 = vpop.f32.mrf.mxu0
        %v507 = vadd.f32 0.0, %v506
        %v508 = vpop.f32.mrf.mxu0
        %v509 = vadd.f32 0.0, %v508
        %510 = vmatmul.bf16.gmra.mxu0 %v306
        %v511 = vpop.f32.mrf.mxu0
        %v512 = vadd.f32 0.0, %v511
        %v513 = vpop.f32.mrf.mxu0
        %v514 = vadd.f32 0.0, %v513
        %515 = vmatmul.bf16.gmra.mxu0 %v307
        %v516 = vpop.f32.mrf.mxu0
        %v517 = vadd.f32 0.0, %v516
        %v518 = vpop.f32.mrf.mxu0
        %v519 = vadd.f32 0.0, %v518
        %520 = vmatmul.bf16.gmra.mxu0 %v308
        %v521 = vpop.f32.mrf.mxu0
        %v522 = vadd.f32 0.0, %v521
        %v523 = vpop.f32.mrf.mxu0
        %v524 = vadd.f32 0.0, %v523
        %525 = vmatmul.bf16.gmra.mxu0 %v309
        %v526 = vpop.f32.mrf.mxu0
        %v527 = vadd.f32 0.0, %v526
        %v528 = vpop.f32.mrf.mxu0
        %v529 = vadd.f32 0.0, %v528
        %530 = vmatmul.bf16.gmra.mxu0 %v310
        %v531 = vpop.f32.mrf.mxu0
        %v532 = vadd.f32 0.0, %v531
        %v533 = vpop.f32.mrf.mxu0
        %v534 = vadd.f32 0.0, %v533
        %535 = vmatmul.bf16.gmra.mxu0 %v311
        %v536 = vpop.f32.mrf.mxu0
        %v537 = vadd.f32 0.0, %v536
        %v538 = vpop.f32.mrf.mxu0
        %v539 = vadd.f32 0.0, %v538
        %540 = vmatmul.bf16.gmra.mxu0 %v312
        %v541 = vpop.f32.mrf.mxu0
        %v542 = vadd.f32 0.0, %v541
        %v543 = vpop.f32.mrf.mxu0
        %v544 = vadd.f32 0.0, %v543
        %545 = vdwg.mxu0
        %546 = vmatpush.bf16.msra.mxu0 %v431
        %547 = vmatpush.bf16.msra.mxu0 %v428
        %548 = vmatpush.bf16.msra.mxu0 %v425
        %549 = vmatpush.bf16.msra.mxu0 %v422
        %550 = vmatpush.bf16.msra.mxu0 %v419
        %551 = vmatpush.bf16.msra.mxu0 %v416
        %552 = vmatpush.bf16.msra.mxu0 %v413
        %553 = vmatpush.bf16.msra.mxu0 %v410
        %554 = vmatmul.bf16.gmra.mxu0 %v297
        %v555 = vpop.f32.mrf.mxu0
        %v556 = vadd.f32 0.0, %v555
        %v557 = vpop.f32.mrf.mxu0
        %v558 = vadd.f32 0.0, %v557
        %559 = vmatmul.bf16.gmra.mxu0 %v298
        %v560 = vpop.f32.mrf.mxu0
        %v561 = vadd.f32 0.0, %v560
        %v562 = vpop.f32.mrf.mxu0
        %v563 = vadd.f32 0.0, %v562
        %564 = vmatmul.bf16.gmra.mxu0 %v299
        %v565 = vpop.f32.mrf.mxu0
        %v566 = vadd.f32 0.0, %v565
        %v567 = vpop.f32.mrf.mxu0
        %v568 = vadd.f32 0.0, %v567
        %569 = vmatmul.bf16.gmra.mxu0 %v300
        %v570 = vpop.f32.mrf.mxu0
        %v571 = vadd.f32 0.0, %v570
        %v572 = vpop.f32.mrf.mxu0
        %v573 = vadd.f32 0.0, %v572
        %574 = vmatmul.bf16.gmra.mxu0 %v301
        %v575 = vpop.f32.mrf.mxu0
        %v576 = vadd.f32 0.0, %v575
        %v577 = vpop.f32.mrf.mxu0
        %v578 = vadd.f32 0.0, %v577
        %579 = vmatmul.bf16.gmra.mxu0 %v302
        %v580 = vpop.f32.mrf.mxu0
        %v581 = vadd.f32 0.0, %v580
        %v582 = vpop.f32.mrf.mxu0
        %v583 = vadd.f32 0.0, %v582
        %584 = vmatmul.bf16.gmra.mxu0 %v303
        %v585 = vpop.f32.mrf.mxu0
        %v586 = vadd.f32 0.0, %v585
        %v587 = vpop.f32.mrf.mxu0
        %v588 = vadd.f32 0.0, %v587
        %589 = vmatmul.bf16.gmra.mxu0 %v304
        %v590 = vpop.f32.mrf.mxu0
        %v591 = vadd.f32 0.0, %v590
        %v592 = vpop.f32.mrf.mxu0
        %v593 = vadd.f32 0.0, %v592
        %594 = vmatmul.bf16.gmra.mxu0 %v305
        %v595 = vpop.f32.mrf.mxu0
        %v596 = vadd.f32 0.0, %v595
        %v597 = vpop.f32.mrf.mxu0
        %v598 = vadd.f32 0.0, %v597
        %599 = vmatmul.bf16.gmra.mxu0 %v306
        %v600 = vpop.f32.mrf.mxu0
        %v601 = vadd.f32 0.0, %v600
        %v602 = vpop.f32.mrf.mxu0
        %v603 = vadd.f32 0.0, %v602
        %604 = vmatmul.bf16.gmra.mxu0 %v307
        %v605 = vpop.f32.mrf.mxu0
        %v606 = vadd.f32 0.0, %v605
        %v607 = vpop.f32.mrf.mxu0
        %v608 = vadd.f32 0.0, %v607
        %609 = vmatmul.bf16.gmra.mxu0 %v308
        %v610 = vpop.f32.mrf.mxu0
        %v611 = vadd.f32 0.0, %v610
        %v612 = vpop.f32.mrf.mxu0
        %v613 = vadd.f32 0.0, %v612
        %614 = vmatmul.bf16.gmra.mxu0 %v309
        %v615 = vpop.f32.mrf.mxu0
        %v616 = vadd.f32 0.0, %v615
        %v617 = vpop.f32.mrf.mxu0
        %v618 = vadd.f32 0.0, %v617
        %619 = vmatmul.bf16.gmra.mxu0 %v310
        %v620 = vpop.f32.mrf.mxu0
        %v621 = vadd.f32 0.0, %v620
        %v622 = vpop.f32.mrf.mxu0
        %v623 = vadd.f32 0.0, %v622
        %624 = vmatmul.bf16.gmra.mxu0 %v311
        %v625 = vpop.f32.mrf.mxu0
        %v626 = vadd.f32 0.0, %v625
        %v627 = vpop.f32.mrf.mxu0
        %v628 = vadd.f32 0.0, %v627
        %629 = vmatmul.bf16.gmra.mxu0 %v312
        %v630 = vpop.f32.mrf.mxu0
        %v631 = vadd.f32 0.0, %v630
        %v632 = vpop.f32.mrf.mxu0
        %v633 = vadd.f32 0.0, %v632
        %634 = vdwg.mxu0
        %635 = vmatpush.bf16.msra.mxu0 %v432
        %636 = vmatpush.bf16.msra.mxu0 %v429
        %637 = vmatpush.bf16.msra.mxu0 %v426
        %638 = vmatpush.bf16.msra.mxu0 %v423
        %639 = vmatpush.bf16.msra.mxu0 %v420
        %640 = vmatpush.bf16.msra.mxu0 %v417
        %641 = vmatpush.bf16.msra.mxu0 %v414
        %642 = vmatpush.bf16.msra.mxu0 %v411
        %643 = vmatmul.bf16.gmra.mxu0 %v297
        %v644 = vpop.f32.mrf.mxu0
        %v645 = vadd.f32 0.0, %v644
        %v646 = vpop.f32.mrf.mxu0
        %v647 = vadd.f32 0.0, %v646
        %648 = vmatmul.bf16.gmra.mxu0 %v298
        %v649 = vpop.f32.mrf.mxu0
        %v650 = vadd.f32 0.0, %v649
        %v651 = vpop.f32.mrf.mxu0
        %v652 = vadd.f32 0.0, %v651
        %653 = vmatmul.bf16.gmra.mxu0 %v299
        %v654 = vpop.f32.mrf.mxu0
        %v655 = vadd.f32 0.0, %v654
        %v656 = vpop.f32.mrf.mxu0
        %v657 = vadd.f32 0.0, %v656
        %658 = vmatmul.bf16.gmra.mxu0 %v300
        %v659 = vpop.f32.mrf.mxu0
        %v660 = vadd.f32 0.0, %v659
        %v661 = vpop.f32.mrf.mxu0
        %v662 = vadd.f32 0.0, %v661
        %663 = vmatmul.bf16.gmra.mxu0 %v301
        %v664 = vpop.f32.mrf.mxu0
        %v665 = vadd.f32 0.0, %v664
        %v666 = vpop.f32.mrf.mxu0
        %v667 = vadd.f32 0.0, %v666
        %668 = vmatmul.bf16.gmra.mxu0 %v302
        %v669 = vpop.f32.mrf.mxu0
        %v670 = vadd.f32 0.0, %v669
        %v671 = vpop.f32.mrf.mxu0
        %v672 = vadd.f32 0.0, %v671
        %673 = vmatmul.bf16.gmra.mxu0 %v303
        %v674 = vpop.f32.mrf.mxu0
        %v675 = vadd.f32 0.0, %v674
        %v676 = vpop.f32.mrf.mxu0
        %v677 = vadd.f32 0.0, %v676
        %678 = vmatmul.bf16.gmra.mxu0 %v304
        %v679 = vpop.f32.mrf.mxu0
        %v680 = vadd.f32 0.0, %v679
        %v681 = vpop.f32.mrf.mxu0
        %v682 = vadd.f32 0.0, %v681
        %683 = vmatmul.bf16.gmra.mxu0 %v305
        %v684 = vpop.f32.mrf.mxu0
        %v685 = vadd.f32 0.0, %v684
        %v686 = vpop.f32.mrf.mxu0
        %v687 = vadd.f32 0.0, %v686
        %688 = vmatmul.bf16.gmra.mxu0 %v306
        %v689 = vpop.f32.mrf.mxu0
        %v690 = vadd.f32 0.0, %v689
        %v691 = vpop.f32.mrf.mxu0
        %v692 = vadd.f32 0.0, %v691
        %693 = vmatmul.bf16.gmra.mxu0 %v307
        %v694 = vpop.f32.mrf.mxu0
        %v695 = vadd.f32 0.0, %v694
        %v696 = vpop.f32.mrf.mxu0
        %v697 = vadd.f32 0.0, %v696
        %698 = vmatmul.bf16.gmra.mxu0 %v308
        %v699 = vpop.f32.mrf.mxu0
        %v700 = vadd.f32 0.0, %v699
        %v701 = vpop.f32.mrf.mxu0
        %v702 = vadd.f32 0.0, %v701
        %703 = vmatmul.bf16.gmra.mxu0 %v309
        %v704 = vpop.f32.mrf.mxu0
        %v705 = vadd.f32 0.0, %v704
        %v706 = vpop.f32.mrf.mxu0
        %v707 = vadd.f32 0.0, %v706
        %708 = vmatmul.bf16.gmra.mxu0 %v310
        %v709 = vpop.f32.mrf.mxu0
        %v710 = vadd.f32 0.0, %v709
        %v711 = vpop.f32.mrf.mxu0
        %v712 = vadd.f32 0.0, %v711
        %713 = vmatmul.bf16.gmra.mxu0 %v311
        %v714 = vpop.f32.mrf.mxu0
        %v715 = vadd.f32 0.0, %v714
        %v716 = vpop.f32.mrf.mxu0
        %v717 = vadd.f32 0.0, %v716
        %718 = vmatmul.bf16.gmra.mxu0 %v312
        %v719 = vpop.f32.mrf.mxu0
        %v720 = vadd.f32 0.0, %v719
        %v721 = vpop.f32.mrf.mxu0
        %v722 = vadd.f32 0.0, %v721
        %723 = vdwg.mxu0
        %v724 = vpack.c.bf16 %v556, %v467
        %v725 = vpack.c.bf16 %v645, %v645
        %v726 = vpack.c.bf16 %v558, %v469
        %v727 = vpack.c.bf16 %v647, %v647
        %v728 = vpack.c.bf16 %v561, %v472
        %v729 = vpack.c.bf16 %v650, %v650
        %v730 = vpack.c.bf16 %v563, %v474
        %v731 = vpack.c.bf16 %v652, %v652
        %v732 = vpack.c.bf16 %v566, %v477
        %v733 = vpack.c.bf16 %v655, %v655
        %v734 = vpack.c.bf16 %v568, %v479
        %v735 = vpack.c.bf16 %v657, %v657
        %v736 = vpack.c.bf16 %v571, %v482
        %v737 = vpack.c.bf16 %v660, %v660
        %v738 = vpack.c.bf16 %v573, %v484
        %v739 = vpack.c.bf16 %v662, %v662
        %v740 = vpack.c.bf16 %v576, %v487
        %v741 = vpack.c.bf16 %v665, %v665
        %v742 = vpack.c.bf16 %v578, %v489
        %v743 = vpack.c.bf16 %v667, %v667
        %v744 = vpack.c.bf16 %v581, %v492
        %v745 = vpack.c.bf16 %v670, %v670
        %v746 = vpack.c.bf16 %v583, %v494
        %v747 = vpack.c.bf16 %v672, %v672
        %v748 = vpack.c.bf16 %v586, %v497
        %v749 = vpack.c.bf16 %v675, %v675
        %v750 = vpack.c.bf16 %v588, %v499
        %v751 = vpack.c.bf16 %v677, %v677
        %v752 = vpack.c.bf16 %v591, %v502
        %v753 = vpack.c.bf16 %v680, %v680
        %v754 = vpack.c.bf16 %v593, %v504
        %v755 = vpack.c.bf16 %v682, %v682
        %v756 = vpack.c.bf16 %v596, %v507
        %v757 = vpack.c.bf16 %v685, %v685
        %v758 = vpack.c.bf16 %v598, %v509
        %v759 = vpack.c.bf16 %v687, %v687
        %v760 = vpack.c.bf16 %v601, %v512
        %v761 = vpack.c.bf16 %v690, %v690
        %v762 = vpack.c.bf16 %v603, %v514
        %v763 = vpack.c.bf16 %v692, %v692
        %v764 = vpack.c.bf16 %v606, %v517
        %v765 = vpack.c.bf16 %v695, %v695
        %v766 = vpack.c.bf16 %v608, %v519
        %v767 = vpack.c.bf16 %v697, %v697
        %v768 = vpack.c.bf16 %v611, %v522
        %v769 = vpack.c.bf16 %v700, %v700
        %v770 = vpack.c.bf16 %v613, %v524
        %v771 = vpack.c.bf16 %v702, %v702
        %v772 = vpack.c.bf16 %v616, %v527
        %v773 = vpack.c.bf16 %v705, %v705
        %v774 = vpack.c.bf16 %v618, %v529
        %v775 = vpack.c.bf16 %v707, %v707
        %v776 = vpack.c.bf16 %v621, %v532
        %v777 = vpack.c.bf16 %v710, %v710
        %v778 = vpack.c.bf16 %v623, %v534
        %v779 = vpack.c.bf16 %v712, %v712
        %v780 = vpack.c.bf16 %v626, %v537
        %v781 = vpack.c.bf16 %v715, %v715
        %v782 = vpack.c.bf16 %v628, %v539
        %v783 = vpack.c.bf16 %v717, %v717
        %v784 = vpack.c.bf16 %v631, %v542
        %v785 = vpack.c.bf16 %v720, %v720
        %v786 = vpack.c.bf16 %v633, %v544
        %v787 = vpack.c.bf16 %v722, %v722
        %v788 = vlaneseq
        %v789 = vshrl.u32 %v788, 7
        %v790 = vadd.s32 %v789, 8
        %v791 = vadd.s32 %v789, 16
        %v792 = vadd.s32 %v789, 24
        %v793 = vadd.s32 %v789, 32
        %v794 = vadd.s32 %v789, 40
        %v795 = vadd.s32 %v789, 48
        %v796 = vadd.s32 %v789, 56
        %v797 = vadd.s32 %v789, 64
        %v798 = vadd.s32 %v789, 72
        %v799 = vadd.s32 %v789, 80
        %v800 = vadd.s32 %v789, 88
        %v801 = vadd.s32 %v789, 96
        %v802 = vadd.s32 %v789, 104
        %v803 = vadd.s32 %v789, 112
        %v804 = vadd.s32 %v789, 120
        %v805 = vlaneseq
        %v806 = vand.u32 %v805, 127
        %vm807 = vcmp.ge.s32.totalorder %v789, %v806
        %vm808 = vcmp.ge.s32.totalorder %v790, %v806
        %vm809 = vcmp.ge.s32.totalorder %v791, %v806
        %vm810 = vcmp.ge.s32.totalorder %v792, %v806
        %vm811 = vcmp.ge.s32.totalorder %v793, %v806
        %vm812 = vcmp.ge.s32.totalorder %v794, %v806
        %vm813 = vcmp.ge.s32.totalorder %v795, %v806
        %vm814 = vcmp.ge.s32.totalorder %v796, %v806
        %vm815 = vcmp.ge.s32.totalorder %v797, %v806
        %vm816 = vcmp.ge.s32.totalorder %v798, %v806
        %vm817 = vcmp.ge.s32.totalorder %v799, %v806
        %vm818 = vcmp.ge.s32.totalorder %v800, %v806
        %vm819 = vcmp.ge.s32.totalorder %v801, %v806
        %vm820 = vcmp.ge.s32.totalorder %v802, %v806
        %vm821 = vcmp.ge.s32.totalorder %v803, %v806
        %vm822 = vcmp.ge.s32.totalorder %v804, %v806
        %v855 = vrot.slane %v724, 4
        %v856 = vrot.slane %v726, 4
        %v857 = vrot.slane %v728, 4
        %v858 = vrot.slane %v730, 4
        %v859 = vrot.slane %v732, 4
        %v860 = vrot.slane %v734, 4
        %v861 = vrot.slane %v736, 4
        %v862 = vrot.slane %v738, 4
        %v863 = vrot.slane %v740, 4
        %v864 = vrot.slane %v742, 4
        %v865 = vrot.slane %v744, 4
        %v866 = vrot.slane %v746, 4
        %v867 = vrot.slane %v748, 4
        %v868 = vrot.slane %v750, 4
        %v869 = vrot.slane %v752, 4
        %v870 = vrot.slane %v754, 4
        %v871 = vrot.slane %v756, 4
        %v872 = vrot.slane %v758, 4
        %v873 = vrot.slane %v760, 4
        %v874 = vrot.slane %v762, 4
        %v875 = vrot.slane %v764, 4
        %v876 = vrot.slane %v766, 4
        %v877 = vrot.slane %v768, 4
        %v878 = vrot.slane %v770, 4
        %v879 = vrot.slane %v772, 4
        %v880 = vrot.slane %v774, 4
        %v881 = vrot.slane %v776, 4
        %v882 = vrot.slane %v778, 4
        %v883 = vrot.slane %v780, 4
        %v884 = vrot.slane %v782, 4
        %v885 = vrot.slane %v784, 4
        %v886 = vrot.slane %v786, 4
        %v887 = vunpack.c.l.b16 %v724
        %v888 = vunpack.c.l.b16 %v726
        %v889 = vunpack.c.l.b16 %v728
        %v890 = vunpack.c.l.b16 %v730
        %v891 = vunpack.c.l.b16 %v732
        %v892 = vunpack.c.l.b16 %v734
        %v893 = vunpack.c.l.b16 %v736
        %v894 = vunpack.c.l.b16 %v738
        %v895 = vunpack.c.l.b16 %v740
        %v896 = vunpack.c.l.b16 %v742
        %v897 = vunpack.c.l.b16 %v744
        %v898 = vunpack.c.l.b16 %v746
        %v899 = vunpack.c.l.b16 %v748
        %v900 = vunpack.c.l.b16 %v750
        %v901 = vunpack.c.l.b16 %v752
        %v902 = vunpack.c.l.b16 %v754
        %v903 = vpack.c.b16 %v888, %v887
        %v904 = vpack.c.b16 %v890, %v889
        %v905 = vpack.c.b16 %v892, %v891
        %v906 = vpack.c.b16 %v894, %v893
        %v907 = vpack.c.b16 %v896, %v895
        %v908 = vpack.c.b16 %v898, %v897
        %v909 = vpack.c.b16 %v900, %v899
        %v910 = vpack.c.b16 %v902, %v901
        %v911 = vunpack.c.l.b16 %v855
        %v912 = vunpack.c.l.b16 %v856
        %v913 = vunpack.c.l.b16 %v857
        %v914 = vunpack.c.l.b16 %v858
        %v915 = vunpack.c.l.b16 %v859
        %v916 = vunpack.c.l.b16 %v860
        %v917 = vunpack.c.l.b16 %v861
        %v918 = vunpack.c.l.b16 %v862
        %v919 = vunpack.c.l.b16 %v863
        %v920 = vunpack.c.l.b16 %v864
        %v921 = vunpack.c.l.b16 %v865
        %v922 = vunpack.c.l.b16 %v866
        %v923 = vunpack.c.l.b16 %v867
        %v924 = vunpack.c.l.b16 %v868
        %v925 = vunpack.c.l.b16 %v869
        %v926 = vunpack.c.l.b16 %v870
        %v927 = vpack.c.b16 %v912, %v911
        %v928 = vpack.c.b16 %v914, %v913
        %v929 = vpack.c.b16 %v916, %v915
        %v930 = vpack.c.b16 %v918, %v917
        %v931 = vpack.c.b16 %v920, %v919
        %v932 = vpack.c.b16 %v922, %v921
        %v933 = vpack.c.b16 %v924, %v923
        %v934 = vpack.c.b16 %v926, %v925
        %vm935 = vcmask 261120
        %v937 = vsel %vm935, %v903, 0
        %v940 = vsel %vm935, %v904, 0
        %v943 = vsel %vm935, %v905, 0
        %v946 = vsel %vm935, %v906, 0
        %v949 = vsel %vm935, %v907, 0
        %v952 = vsel %vm935, %v908, 0
        %v955 = vsel %vm935, %v909, 0
        %v958 = vsel %vm935, %v910, 0
        %v961 = vsel %vm935, %v927, 0
        %v964 = vsel %vm935, %v928, 0
        %v967 = vsel %vm935, %v929, 0
        %v970 = vsel %vm935, %v930, 0
        %v973 = vsel %vm935, %v931, 0
        %v976 = vsel %vm935, %v932, 0
        %v979 = vsel %vm935, %v933, 0
        %v982 = vsel %vm935, %v934, 0
        %984 = vmatpush.bf16.xpose.msra.mxu0 %v982
        %985 = vmatpush.bf16.xpose.msra.mxu0 %v979
        %986 = vmatpush.bf16.xpose.msra.mxu0 %v976
        %987 = vmatpush.bf16.xpose.msra.mxu0 %v973
        %988 = vmatpush.bf16.xpose.msra.mxu0 %v970
        %989 = vmatpush.bf16.xpose.msra.mxu0 %v967
        %990 = vmatpush.bf16.xpose.msra.mxu0 %v964
        %991 = vmatpush.bf16.xpose.msra.mxu0 %v961
        %992 = vmatmul.bf16.gmra.mxu0 %v937
        %v993 = vpop.f32.mrf.mxu0
        %v994 = vadd.f32 0.0, %v993
        %v995 = vpop.f32.mrf.mxu0
        %v996 = vadd.f32 0.0, %v995
        %997 = vmatmul.bf16.gmra.mxu0 %v940
        %v998 = vpop.f32.mrf.mxu0
        %v999 = vadd.f32 0.0, %v998
        %v1000 = vpop.f32.mrf.mxu0
        %v1001 = vadd.f32 0.0, %v1000
        %1002 = vmatmul.bf16.gmra.mxu0 %v943
        %v1003 = vpop.f32.mrf.mxu0
        %v1004 = vadd.f32 0.0, %v1003
        %v1005 = vpop.f32.mrf.mxu0
        %v1006 = vadd.f32 0.0, %v1005
        %1007 = vmatmul.bf16.gmra.mxu0 %v946
        %v1008 = vpop.f32.mrf.mxu0
        %v1009 = vadd.f32 0.0, %v1008
        %v1010 = vpop.f32.mrf.mxu0
        %v1011 = vadd.f32 0.0, %v1010
        %1012 = vmatmul.bf16.gmra.mxu0 %v949
        %v1013 = vpop.f32.mrf.mxu0
        %v1014 = vadd.f32 0.0, %v1013
        %v1015 = vpop.f32.mrf.mxu0
        %v1016 = vadd.f32 0.0, %v1015
        %1017 = vmatmul.bf16.gmra.mxu0 %v952
        %v1018 = vpop.f32.mrf.mxu0
        %v1019 = vadd.f32 0.0, %v1018
        %v1020 = vpop.f32.mrf.mxu0
        %v1021 = vadd.f32 0.0, %v1020
        %1022 = vmatmul.bf16.gmra.mxu0 %v955
        %v1023 = vpop.f32.mrf.mxu0
        %v1024 = vadd.f32 0.0, %v1023
        %v1025 = vpop.f32.mrf.mxu0
        %v1026 = vadd.f32 0.0, %v1025
        %1027 = vmatmul.bf16.gmra.mxu0 %v958
        %v1028 = vpop.f32.mrf.mxu0
        %v1029 = vadd.f32 0.0, %v1028
        %v1030 = vpop.f32.mrf.mxu0
        %v1031 = vadd.f32 0.0, %v1030
        %1032 = vdwg.mxu0
        %v1033 = vunpack.c.l.b16 %v756
        %v1034 = vunpack.c.l.b16 %v758
        %v1035 = vunpack.c.l.b16 %v760
        %v1036 = vunpack.c.l.b16 %v762
        %v1037 = vunpack.c.l.b16 %v764
        %v1038 = vunpack.c.l.b16 %v766
        %v1039 = vunpack.c.l.b16 %v768
        %v1040 = vunpack.c.l.b16 %v770
        %v1041 = vunpack.c.l.b16 %v772
        %v1042 = vunpack.c.l.b16 %v774
        %v1043 = vunpack.c.l.b16 %v776
        %v1044 = vunpack.c.l.b16 %v778
        %v1045 = vunpack.c.l.b16 %v780
        %v1046 = vunpack.c.l.b16 %v782
        %v1047 = vunpack.c.l.b16 %v784
        %v1048 = vunpack.c.l.b16 %v786
        %v1049 = vpack.c.b16 %v1034, %v1033
        %v1050 = vpack.c.b16 %v1036, %v1035
        %v1051 = vpack.c.b16 %v1038, %v1037
        %v1052 = vpack.c.b16 %v1040, %v1039
        %v1053 = vpack.c.b16 %v1042, %v1041
        %v1054 = vpack.c.b16 %v1044, %v1043
        %v1055 = vpack.c.b16 %v1046, %v1045
        %v1056 = vpack.c.b16 %v1048, %v1047
        %v1057 = vunpack.c.l.b16 %v871
        %v1058 = vunpack.c.l.b16 %v872
        %v1059 = vunpack.c.l.b16 %v873
        %v1060 = vunpack.c.l.b16 %v874
        %v1061 = vunpack.c.l.b16 %v875
        %v1062 = vunpack.c.l.b16 %v876
        %v1063 = vunpack.c.l.b16 %v877
        %v1064 = vunpack.c.l.b16 %v878
        %v1065 = vunpack.c.l.b16 %v879
        %v1066 = vunpack.c.l.b16 %v880
        %v1067 = vunpack.c.l.b16 %v881
        %v1068 = vunpack.c.l.b16 %v882
        %v1069 = vunpack.c.l.b16 %v883
        %v1070 = vunpack.c.l.b16 %v884
        %v1071 = vunpack.c.l.b16 %v885
        %v1072 = vunpack.c.l.b16 %v886
        %v1073 = vpack.c.b16 %v1058, %v1057
        %v1074 = vpack.c.b16 %v1060, %v1059
        %v1075 = vpack.c.b16 %v1062, %v1061
        %v1076 = vpack.c.b16 %v1064, %v1063
        %v1077 = vpack.c.b16 %v1066, %v1065
        %v1078 = vpack.c.b16 %v1068, %v1067
        %v1079 = vpack.c.b16 %v1070, %v1069
        %v1080 = vpack.c.b16 %v1072, %v1071
        %v1082 = vsel %vm935, %v1049, 0
        %v1085 = vsel %vm935, %v1050, 0
        %v1088 = vsel %vm935, %v1051, 0
        %v1091 = vsel %vm935, %v1052, 0
        %v1094 = vsel %vm935, %v1053, 0
        %v1097 = vsel %vm935, %v1054, 0
        %v1100 = vsel %vm935, %v1055, 0
        %v1103 = vsel %vm935, %v1056, 0
        %v1106 = vsel %vm935, %v1073, 0
        %v1109 = vsel %vm935, %v1074, 0
        %v1112 = vsel %vm935, %v1075, 0
        %v1115 = vsel %vm935, %v1076, 0
        %v1118 = vsel %vm935, %v1077, 0
        %v1121 = vsel %vm935, %v1078, 0
        %v1124 = vsel %vm935, %v1079, 0
        %v1127 = vsel %vm935, %v1080, 0
        %1129 = vmatpush.bf16.xpose.msra.mxu0 %v1127
        %1130 = vmatpush.bf16.xpose.msra.mxu0 %v1124
        %1131 = vmatpush.bf16.xpose.msra.mxu0 %v1121
        %1132 = vmatpush.bf16.xpose.msra.mxu0 %v1118
        %1133 = vmatpush.bf16.xpose.msra.mxu0 %v1115
        %1134 = vmatpush.bf16.xpose.msra.mxu0 %v1112
        %1135 = vmatpush.bf16.xpose.msra.mxu0 %v1109
        %1136 = vmatpush.bf16.xpose.msra.mxu0 %v1106
        %1137 = vmatmul.bf16.gmra.mxu0 %v1082
        %v1138 = vpop.f32.mrf.mxu0
        %v1139 = vadd.f32 0.0, %v1138
        %v1140 = vpop.f32.mrf.mxu0
        %v1141 = vadd.f32 0.0, %v1140
        %1142 = vmatmul.bf16.gmra.mxu0 %v1085
        %v1143 = vpop.f32.mrf.mxu0
        %v1144 = vadd.f32 0.0, %v1143
        %v1145 = vpop.f32.mrf.mxu0
        %v1146 = vadd.f32 0.0, %v1145
        %1147 = vmatmul.bf16.gmra.mxu0 %v1088
        %v1148 = vpop.f32.mrf.mxu0
        %v1149 = vadd.f32 0.0, %v1148
        %v1150 = vpop.f32.mrf.mxu0
        %v1151 = vadd.f32 0.0, %v1150
        %1152 = vmatmul.bf16.gmra.mxu0 %v1091
        %v1153 = vpop.f32.mrf.mxu0
        %v1154 = vadd.f32 0.0, %v1153
        %v1155 = vpop.f32.mrf.mxu0
        %v1156 = vadd.f32 0.0, %v1155
        %1157 = vmatmul.bf16.gmra.mxu0 %v1094
        %v1158 = vpop.f32.mrf.mxu0
        %v1159 = vadd.f32 0.0, %v1158
        %v1160 = vpop.f32.mrf.mxu0
        %v1161 = vadd.f32 0.0, %v1160
        %1162 = vmatmul.bf16.gmra.mxu0 %v1097
        %v1163 = vpop.f32.mrf.mxu0
        %v1164 = vadd.f32 0.0, %v1163
        %v1165 = vpop.f32.mrf.mxu0
        %v1166 = vadd.f32 0.0, %v1165
        %1167 = vmatmul.bf16.gmra.mxu0 %v1100
        %v1168 = vpop.f32.mrf.mxu0
        %v1169 = vadd.f32 0.0, %v1168
        %v1170 = vpop.f32.mrf.mxu0
        %v1171 = vadd.f32 0.0, %v1170
        %1172 = vmatmul.bf16.gmra.mxu0 %v1103
        %v1173 = vpop.f32.mrf.mxu0
        %v1174 = vadd.f32 0.0, %v1173
        %v1175 = vpop.f32.mrf.mxu0
        %v1176 = vadd.f32 0.0, %v1175
        %1177 = vdwg.mxu0
        %v1178 = vsel %vm807, 1, 0
        %v1179 = vsel %vm808, 1, 0
        %v1180 = vsel %vm809, 1, 0
        %v1181 = vsel %vm810, 1, 0
        %v1182 = vsel %vm811, 1, 0
        %v1183 = vsel %vm812, 1, 0
        %v1184 = vsel %vm813, 1, 0
        %v1185 = vsel %vm814, 1, 0
        %v1186 = vsel %vm815, 1, 0
        %v1187 = vsel %vm816, 1, 0
        %v1188 = vsel %vm817, 1, 0
        %v1189 = vsel %vm818, 1, 0
        %v1190 = vsel %vm819, 1, 0
        %v1191 = vsel %vm820, 1, 0
        %v1192 = vsel %vm821, 1, 0
        %v1193 = vsel %vm822, 1, 0
        %vm1194 = vcmp.eq.s32.totalorder %v1178, 1
        %vm1195 = vcmp.eq.s32.totalorder %v1179, 1
        %vm1196 = vcmp.eq.s32.totalorder %v1180, 1
        %vm1197 = vcmp.eq.s32.totalorder %v1181, 1
        %vm1198 = vcmp.eq.s32.totalorder %v1182, 1
        %vm1199 = vcmp.eq.s32.totalorder %v1183, 1
        %vm1200 = vcmp.eq.s32.totalorder %v1184, 1
        %vm1201 = vcmp.eq.s32.totalorder %v1185, 1
        %vm1202 = vcmp.eq.s32.totalorder %v1186, 1
        %vm1203 = vcmp.eq.s32.totalorder %v1187, 1
        %vm1204 = vcmp.eq.s32.totalorder %v1188, 1
        %vm1205 = vcmp.eq.s32.totalorder %v1189, 1
        %vm1206 = vcmp.eq.s32.totalorder %v1190, 1
        %vm1207 = vcmp.eq.s32.totalorder %v1191, 1
        %vm1208 = vcmp.eq.s32.totalorder %v1192, 1
        %vm1209 = vcmp.eq.s32.totalorder %v1193, 1
        %v1210 = vsel %vm1194, %v994, -inf
        %v1211 = vsel %vm1195, %v996, -inf
        %v1212 = vsel %vm1196, %v999, -inf
        %v1213 = vsel %vm1197, %v1001, -inf
        %v1214 = vsel %vm1198, %v1004, -inf
        %v1215 = vsel %vm1199, %v1006, -inf
        %v1216 = vsel %vm1200, %v1009, -inf
        %v1217 = vsel %vm1201, %v1011, -inf
        %v1218 = vsel %vm1202, %v1014, -inf
        %v1219 = vsel %vm1203, %v1016, -inf
        %v1220 = vsel %vm1204, %v1019, -inf
        %v1221 = vsel %vm1205, %v1021, -inf
        %v1222 = vsel %vm1206, %v1024, -inf
        %v1223 = vsel %vm1207, %v1026, -inf
        %v1224 = vsel %vm1208, %v1029, -inf
        %v1225 = vsel %vm1209, %v1031, -inf
        %v1226 = vsel %vm1194, %v1139, -inf
        %v1227 = vsel %vm1195, %v1141, -inf
        %v1228 = vsel %vm1196, %v1144, -inf
        %v1229 = vsel %vm1197, %v1146, -inf
        %v1230 = vsel %vm1198, %v1149, -inf
        %v1231 = vsel %vm1199, %v1151, -inf
        %v1232 = vsel %vm1200, %v1154, -inf
        %v1233 = vsel %vm1201, %v1156, -inf
        %v1234 = vsel %vm1202, %v1159, -inf
        %v1235 = vsel %vm1203, %v1161, -inf
        %v1236 = vsel %vm1204, %v1164, -inf
        %v1237 = vsel %vm1205, %v1166, -inf
        %v1238 = vsel %vm1206, %v1169, -inf
        %v1239 = vsel %vm1207, %v1171, -inf
        %v1240 = vsel %vm1208, %v1174, -inf
        %v1241 = vsel %vm1209, %v1176, -inf
        %1242 = vmax.xlane.f32.xlu0 %v1210
        %v1243 = vpop.xlane.xlu0 %1242
        %1244 = vmax.xlane.f32.xlu0 %v1211
        %v1245 = vpop.xlane.xlu0 %1244
        %1246 = vmax.xlane.f32.xlu0 %v1212
        %v1247 = vpop.xlane.xlu0 %1246
        %1248 = vmax.xlane.f32.xlu0 %v1213
        %v1249 = vpop.xlane.xlu0 %1248
        %1250 = vmax.xlane.f32.xlu0 %v1214
        %v1251 = vpop.xlane.xlu0 %1250
        %1252 = vmax.xlane.f32.xlu0 %v1215
        %v1253 = vpop.xlane.xlu0 %1252
        %1254 = vmax.xlane.f32.xlu0 %v1216
        %v1255 = vpop.xlane.xlu0 %1254
        %1256 = vmax.xlane.f32.xlu0 %v1217
        %v1257 = vpop.xlane.xlu0 %1256
        %1258 = vmax.xlane.f32.xlu0 %v1218
        %v1259 = vpop.xlane.xlu0 %1258
        %1260 = vmax.xlane.f32.xlu0 %v1219
        %v1261 = vpop.xlane.xlu0 %1260
        %1262 = vmax.xlane.f32.xlu0 %v1220
        %v1263 = vpop.xlane.xlu0 %1262
        %1264 = vmax.xlane.f32.xlu0 %v1221
        %v1265 = vpop.xlane.xlu0 %1264
        %1266 = vmax.xlane.f32.xlu0 %v1222
        %v1267 = vpop.xlane.xlu0 %1266
        %1268 = vmax.xlane.f32.xlu0 %v1223
        %v1269 = vpop.xlane.xlu0 %1268
        %1270 = vmax.xlane.f32.xlu0 %v1224
        %v1271 = vpop.xlane.xlu0 %1270
        %1272 = vmax.xlane.f32.xlu0 %v1225
        %v1273 = vpop.xlane.xlu0 %1272
        %1274 = vmax.xlane.f32.xlu0 %v1226
        %v1275 = vpop.xlane.xlu0 %1274
        %1276 = vmax.xlane.f32.xlu0 %v1227
        %v1277 = vpop.xlane.xlu0 %1276
        %1278 = vmax.xlane.f32.xlu0 %v1228
        %v1279 = vpop.xlane.xlu0 %1278
        %1280 = vmax.xlane.f32.xlu0 %v1229
        %v1281 = vpop.xlane.xlu0 %1280
        %1282 = vmax.xlane.f32.xlu0 %v1230
        %v1283 = vpop.xlane.xlu0 %1282
        %1284 = vmax.xlane.f32.xlu0 %v1231
        %v1285 = vpop.xlane.xlu0 %1284
        %1286 = vmax.xlane.f32.xlu0 %v1232
        %v1287 = vpop.xlane.xlu0 %1286
        %1288 = vmax.xlane.f32.xlu0 %v1233
        %v1289 = vpop.xlane.xlu0 %1288
        %1290 = vmax.xlane.f32.xlu0 %v1234
        %v1291 = vpop.xlane.xlu0 %1290
        %1292 = vmax.xlane.f32.xlu0 %v1235
        %v1293 = vpop.xlane.xlu0 %1292
        %1294 = vmax.xlane.f32.xlu0 %v1236
        %v1295 = vpop.xlane.xlu0 %1294
        %1296 = vmax.xlane.f32.xlu0 %v1237
        %v1297 = vpop.xlane.xlu0 %1296
        %1298 = vmax.xlane.f32.xlu0 %v1238
        %v1299 = vpop.xlane.xlu0 %1298
        %1300 = vmax.xlane.f32.xlu0 %v1239
        %v1301 = vpop.xlane.xlu0 %1300
        %1302 = vmax.xlane.f32.xlu0 %v1240
        %v1303 = vpop.xlane.xlu0 %1302
        %1304 = vmax.xlane.f32.xlu0 %v1241
        %v1305 = vpop.xlane.xlu0 %1304
        %v1306 = vsub.f32 %v1210, %v1243
        %v1307 = vsub.f32 %v1211, %v1245
        %v1308 = vsub.f32 %v1212, %v1247
        %v1309 = vsub.f32 %v1213, %v1249
        %v1310 = vsub.f32 %v1214, %v1251
        %v1311 = vsub.f32 %v1215, %v1253
        %v1312 = vsub.f32 %v1216, %v1255
        %v1313 = vsub.f32 %v1217, %v1257
        %v1314 = vsub.f32 %v1218, %v1259
        %v1315 = vsub.f32 %v1219, %v1261
        %v1316 = vsub.f32 %v1220, %v1263
        %v1317 = vsub.f32 %v1221, %v1265
        %v1318 = vsub.f32 %v1222, %v1267
        %v1319 = vsub.f32 %v1223, %v1269
        %v1320 = vsub.f32 %v1224, %v1271
        %v1321 = vsub.f32 %v1225, %v1273
        %v1322 = vsub.f32 %v1226, %v1275
        %v1323 = vsub.f32 %v1227, %v1277
        %v1324 = vsub.f32 %v1228, %v1279
        %v1325 = vsub.f32 %v1229, %v1281
        %v1326 = vsub.f32 %v1230, %v1283
        %v1327 = vsub.f32 %v1231, %v1285
        %v1328 = vsub.f32 %v1232, %v1287
        %v1329 = vsub.f32 %v1233, %v1289
        %v1330 = vsub.f32 %v1234, %v1291
        %v1331 = vsub.f32 %v1235, %v1293
        %v1332 = vsub.f32 %v1236, %v1295
        %v1333 = vsub.f32 %v1237, %v1297
        %v1334 = vsub.f32 %v1238, %v1299
        %v1335 = vsub.f32 %v1239, %v1301
        %v1336 = vsub.f32 %v1240, %v1303
        %v1337 = vsub.f32 %v1241, %v1305
        %v1338 = vmul.f32 %v1306, 1.442695
        %v1339 = vpow.pop %v1338
        %v1340 = vmul.f32 %v1307, 1.442695
        %v1341 = vpow.pop %v1340
        %v1342 = vmul.f32 %v1308, 1.442695
        %v1343 = vpow.pop %v1342
        %v1344 = vmul.f32 %v1309, 1.442695
        %v1345 = vpow.pop %v1344
        %v1346 = vmul.f32 %v1310, 1.442695
        %v1347 = vpow.pop %v1346
        %v1348 = vmul.f32 %v1311, 1.442695
        %v1349 = vpow.pop %v1348
        %v1350 = vmul.f32 %v1312, 1.442695
        %v1351 = vpow.pop %v1350
        %v1352 = vmul.f32 %v1313, 1.442695
        %v1353 = vpow.pop %v1352
        %v1354 = vmul.f32 %v1314, 1.442695
        %v1355 = vpow.pop %v1354
        %v1356 = vmul.f32 %v1315, 1.442695
        %v1357 = vpow.pop %v1356
        %v1358 = vmul.f32 %v1316, 1.442695
        %v1359 = vpow.pop %v1358
        %v1360 = vmul.f32 %v1317, 1.442695
        %v1361 = vpow.pop %v1360
        %v1362 = vmul.f32 %v1318, 1.442695
        %v1363 = vpow.pop %v1362
        %v1364 = vmul.f32 %v1319, 1.442695
        %v1365 = vpow.pop %v1364
        %v1366 = vmul.f32 %v1320, 1.442695
        %v1367 = vpow.pop %v1366
        %v1368 = vmul.f32 %v1321, 1.442695
        %v1369 = vpow.pop %v1368
        %v1370 = vmul.f32 %v1322, 1.442695
        %v1371 = vpow.pop %v1370
        %v1372 = vmul.f32 %v1323, 1.442695
        %v1373 = vpow.pop %v1372
        %v1374 = vmul.f32 %v1324, 1.442695
        %v1375 = vpow.pop %v1374
        %v1376 = vmul.f32 %v1325, 1.442695
        %v1377 = vpow.pop %v1376
        %v1378 = vmul.f32 %v1326, 1.442695
        %v1379 = vpow.pop %v1378
        %v1380 = vmul.f32 %v1327, 1.442695
        %v1381 = vpow.pop %v1380
        %v1382 = vmul.f32 %v1328, 1.442695
        %v1383 = vpow.pop %v1382
        %v1384 = vmul.f32 %v1329, 1.442695
        %v1385 = vpow.pop %v1384
        %v1386 = vmul.f32 %v1330, 1.442695
        %v1387 = vpow.pop %v1386
        %v1388 = vmul.f32 %v1331, 1.442695
        %v1389 = vpow.pop %v1388
        %v1390 = vmul.f32 %v1332, 1.442695
        %v1391 = vpow.pop %v1390
        %v1392 = vmul.f32 %v1333, 1.442695
        %v1393 = vpow.pop %v1392
        %v1394 = vmul.f32 %v1334, 1.442695
        %v1395 = vpow.pop %v1394
        %v1396 = vmul.f32 %v1335, 1.442695
        %v1397 = vpow.pop %v1396
        %v1398 = vmul.f32 %v1336, 1.442695
        %v1399 = vpow.pop %v1398
        %v1400 = vmul.f32 %v1337, 1.442695
        %v1401 = vpow.pop %v1400
        %1402 = vadd.xlane.f32.xlu0 %v1339
        %v1403 = vpop.xlane.xlu0 %1402
        %1404 = vadd.xlane.f32.xlu0 %v1341
        %v1405 = vpop.xlane.xlu0 %1404
        %1406 = vadd.xlane.f32.xlu0 %v1343
        %v1407 = vpop.xlane.xlu0 %1406
        %1408 = vadd.xlane.f32.xlu0 %v1345
        %v1409 = vpop.xlane.xlu0 %1408
        %1410 = vadd.xlane.f32.xlu0 %v1347
        %v1411 = vpop.xlane.xlu0 %1410
        %1412 = vadd.xlane.f32.xlu0 %v1349
        %v1413 = vpop.xlane.xlu0 %1412
        %1414 = vadd.xlane.f32.xlu0 %v1351
        %v1415 = vpop.xlane.xlu0 %1414
        %1416 = vadd.xlane.f32.xlu0 %v1353
        %v1417 = vpop.xlane.xlu0 %1416
        %1418 = vadd.xlane.f32.xlu0 %v1355
        %v1419 = vpop.xlane.xlu0 %1418
        %1420 = vadd.xlane.f32.xlu0 %v1357
        %v1421 = vpop.xlane.xlu0 %1420
        %1422 = vadd.xlane.f32.xlu0 %v1359
        %v1423 = vpop.xlane.xlu0 %1422
        %1424 = vadd.xlane.f32.xlu0 %v1361
        %v1425 = vpop.xlane.xlu0 %1424
        %1426 = vadd.xlane.f32.xlu0 %v1363
        %v1427 = vpop.xlane.xlu0 %1426
        %1428 = vadd.xlane.f32.xlu0 %v1365
        %v1429 = vpop.xlane.xlu0 %1428
        %1430 = vadd.xlane.f32.xlu0 %v1367
        %v1431 = vpop.xlane.xlu0 %1430
        %1432 = vadd.xlane.f32.xlu0 %v1369
        %v1433 = vpop.xlane.xlu0 %1432
        %1434 = vadd.xlane.f32.xlu0 %v1371
        %v1435 = vpop.xlane.xlu0 %1434
        %1436 = vadd.xlane.f32.xlu0 %v1373
        %v1437 = vpop.xlane.xlu0 %1436
        %1438 = vadd.xlane.f32.xlu0 %v1375
        %v1439 = vpop.xlane.xlu0 %1438
        %1440 = vadd.xlane.f32.xlu0 %v1377
        %v1441 = vpop.xlane.xlu0 %1440
        %1442 = vadd.xlane.f32.xlu0 %v1379
        %v1443 = vpop.xlane.xlu0 %1442
        %1444 = vadd.xlane.f32.xlu0 %v1381
        %v1445 = vpop.xlane.xlu0 %1444
        %1446 = vadd.xlane.f32.xlu0 %v1383
        %v1447 = vpop.xlane.xlu0 %1446
        %1448 = vadd.xlane.f32.xlu0 %v1385
        %v1449 = vpop.xlane.xlu0 %1448
        %1450 = vadd.xlane.f32.xlu0 %v1387
        %v1451 = vpop.xlane.xlu0 %1450
        %1452 = vadd.xlane.f32.xlu0 %v1389
        %v1453 = vpop.xlane.xlu0 %1452
        %1454 = vadd.xlane.f32.xlu0 %v1391
        %v1455 = vpop.xlane.xlu0 %1454
        %1456 = vadd.xlane.f32.xlu0 %v1393
        %v1457 = vpop.xlane.xlu0 %1456
        %1458 = vadd.xlane.f32.xlu0 %v1395
        %v1459 = vpop.xlane.xlu0 %1458
        %1460 = vadd.xlane.f32.xlu0 %v1397
        %v1461 = vpop.xlane.xlu0 %1460
        %1462 = vadd.xlane.f32.xlu0 %v1399
        %v1463 = vpop.xlane.xlu0 %1462
        %1464 = vadd.xlane.f32.xlu0 %v1401
        %v1465 = vpop.xlane.xlu0 %1464
        %v1466 = vrcp.pop %v1403
        %v1467 = vrcp.pop %v1405
        %v1468 = vrcp.pop %v1407
        %v1469 = vrcp.pop %v1409
        %v1470 = vrcp.pop %v1411
        %v1471 = vrcp.pop %v1413
        %v1472 = vrcp.pop %v1415
        %v1473 = vrcp.pop %v1417
        %v1474 = vrcp.pop %v1419
        %v1475 = vrcp.pop %v1421
        %v1476 = vrcp.pop %v1423
        %v1477 = vrcp.pop %v1425
        %v1478 = vrcp.pop %v1427
        %v1479 = vrcp.pop %v1429
        %v1480 = vrcp.pop %v1431
        %v1481 = vrcp.pop %v1433
        %v1482 = vrcp.pop %v1435
        %v1483 = vrcp.pop %v1437
        %v1484 = vrcp.pop %v1439
        %v1485 = vrcp.pop %v1441
        %v1486 = vrcp.pop %v1443
        %v1487 = vrcp.pop %v1445
        %v1488 = vrcp.pop %v1447
        %v1489 = vrcp.pop %v1449
        %v1490 = vrcp.pop %v1451
        %v1491 = vrcp.pop %v1453
        %v1492 = vrcp.pop %v1455
        %v1493 = vrcp.pop %v1457
        %v1494 = vrcp.pop %v1459
        %v1495 = vrcp.pop %v1461
        %v1496 = vrcp.pop %v1463
        %v1497 = vrcp.pop %v1465
        %v1498 = vmul.f32 %v1339, %v1466
        %v1499 = vmul.f32 %v1341, %v1467
        %v1500 = vmul.f32 %v1343, %v1468
        %v1501 = vmul.f32 %v1345, %v1469
        %v1502 = vmul.f32 %v1347, %v1470
        %v1503 = vmul.f32 %v1349, %v1471
        %v1504 = vmul.f32 %v1351, %v1472
        %v1505 = vmul.f32 %v1353, %v1473
        %v1506 = vmul.f32 %v1355, %v1474
        %v1507 = vmul.f32 %v1357, %v1475
        %v1508 = vmul.f32 %v1359, %v1476
        %v1509 = vmul.f32 %v1361, %v1477
        %v1510 = vmul.f32 %v1363, %v1478
        %v1511 = vmul.f32 %v1365, %v1479
        %v1512 = vmul.f32 %v1367, %v1480
        %v1513 = vmul.f32 %v1369, %v1481
        %v1514 = vmul.f32 %v1371, %v1482
        %v1515 = vmul.f32 %v1373, %v1483
        %v1516 = vmul.f32 %v1375, %v1484
        %v1517 = vmul.f32 %v1377, %v1485
        %v1518 = vmul.f32 %v1379, %v1486
        %v1519 = vmul.f32 %v1381, %v1487
        %v1520 = vmul.f32 %v1383, %v1488
        %v1521 = vmul.f32 %v1385, %v1489
        %v1522 = vmul.f32 %v1387, %v1490
        %v1523 = vmul.f32 %v1389, %v1491
        %v1524 = vmul.f32 %v1391, %v1492
        %v1525 = vmul.f32 %v1393, %v1493
        %v1526 = vmul.f32 %v1395, %v1494
        %v1527 = vmul.f32 %v1397, %v1495
        %v1528 = vmul.f32 %v1399, %v1496
        %v1529 = vmul.f32 %v1401, %v1497
        %v1530 = vpack.c.bf16 %v1498, %v1498
        %v1531 = vpack.c.bf16 %v1499, %v1499
        %v1532 = vpack.c.bf16 %v1500, %v1500
        %v1533 = vpack.c.bf16 %v1501, %v1501
        %v1534 = vpack.c.bf16 %v1502, %v1502
        %v1535 = vpack.c.bf16 %v1503, %v1503
        %v1536 = vpack.c.bf16 %v1504, %v1504
        %v1537 = vpack.c.bf16 %v1505, %v1505
        %v1538 = vpack.c.bf16 %v1506, %v1506
        %v1539 = vpack.c.bf16 %v1507, %v1507
        %v1540 = vpack.c.bf16 %v1508, %v1508
        %v1541 = vpack.c.bf16 %v1509, %v1509
        %v1542 = vpack.c.bf16 %v1510, %v1510
        %v1543 = vpack.c.bf16 %v1511, %v1511
        %v1544 = vpack.c.bf16 %v1512, %v1512
        %v1545 = vpack.c.bf16 %v1513, %v1513
        %v1546 = vpack.c.bf16 %v1514, %v1514
        %v1547 = vpack.c.bf16 %v1515, %v1515
        %v1548 = vpack.c.bf16 %v1516, %v1516
        %v1549 = vpack.c.bf16 %v1517, %v1517
        %v1550 = vpack.c.bf16 %v1518, %v1518
        %v1551 = vpack.c.bf16 %v1519, %v1519
        %v1552 = vpack.c.bf16 %v1520, %v1520
        %v1553 = vpack.c.bf16 %v1521, %v1521
        %v1554 = vpack.c.bf16 %v1522, %v1522
        %v1555 = vpack.c.bf16 %v1523, %v1523
        %v1556 = vpack.c.bf16 %v1524, %v1524
        %v1557 = vpack.c.bf16 %v1525, %v1525
        %v1558 = vpack.c.bf16 %v1526, %v1526
        %v1559 = vpack.c.bf16 %v1527, %v1527
        %v1560 = vpack.c.bf16 %v1528, %v1528
        %v1561 = vpack.c.bf16 %v1529, %v1529
        %v1578 = vunpack.c.l.b16 %v1530
        %v1579 = vunpack.c.l.b16 %v1531
        %v1580 = vunpack.c.l.b16 %v1532
        %v1581 = vunpack.c.l.b16 %v1533
        %v1582 = vunpack.c.l.b16 %v1534
        %v1583 = vunpack.c.l.b16 %v1535
        %v1584 = vunpack.c.l.b16 %v1536
        %v1585 = vunpack.c.l.b16 %v1537
        %v1586 = vunpack.c.l.b16 %v1538
        %v1587 = vunpack.c.l.b16 %v1539
        %v1588 = vunpack.c.l.b16 %v1540
        %v1589 = vunpack.c.l.b16 %v1541
        %v1590 = vunpack.c.l.b16 %v1542
        %v1591 = vunpack.c.l.b16 %v1543
        %v1592 = vunpack.c.l.b16 %v1544
        %v1593 = vunpack.c.l.b16 %v1545
        %v1594 = vpack.c.b16 %v1579, %v1578
        %v1595 = vpack.c.b16 %v1581, %v1580
        %v1596 = vpack.c.b16 %v1583, %v1582
        %v1597 = vpack.c.b16 %v1585, %v1584
        %v1598 = vpack.c.b16 %v1587, %v1586
        %v1599 = vpack.c.b16 %v1589, %v1588
        %v1600 = vpack.c.b16 %v1591, %v1590
        %v1601 = vpack.c.b16 %v1593, %v1592
        %v1626 = vunpack.c.l.b16 %v725
        %v1627 = vunpack.c.l.b16 %v727
        %v1628 = vunpack.c.l.b16 %v729
        %v1629 = vunpack.c.l.b16 %v731
        %v1630 = vunpack.c.l.b16 %v733
        %v1631 = vunpack.c.l.b16 %v735
        %v1632 = vunpack.c.l.b16 %v737
        %v1633 = vunpack.c.l.b16 %v739
        %v1634 = vunpack.c.l.b16 %v741
        %v1635 = vunpack.c.l.b16 %v743
        %v1636 = vunpack.c.l.b16 %v745
        %v1637 = vunpack.c.l.b16 %v747
        %v1638 = vunpack.c.l.b16 %v749
        %v1639 = vunpack.c.l.b16 %v751
        %v1640 = vunpack.c.l.b16 %v753
        %v1641 = vunpack.c.l.b16 %v755
        %v1642 = vpack.c.b16 %v1627, %v1626
        %v1643 = vpack.c.b16 %v1629, %v1628
        %v1644 = vpack.c.b16 %v1631, %v1630
        %v1645 = vpack.c.b16 %v1633, %v1632
        %v1646 = vpack.c.b16 %v1635, %v1634
        %v1647 = vpack.c.b16 %v1637, %v1636
        %v1648 = vpack.c.b16 %v1639, %v1638
        %v1649 = vpack.c.b16 %v1641, %v1640
        %1658 = vmatpush.bf16.msra.mxu0 %v1649
        %1659 = vmatpush.bf16.msra.mxu0 %v1648
        %1660 = vmatpush.bf16.msra.mxu0 %v1647
        %1661 = vmatpush.bf16.msra.mxu0 %v1646
        %1662 = vmatpush.bf16.msra.mxu0 %v1645
        %1663 = vmatpush.bf16.msra.mxu0 %v1644
        %1664 = vmatpush.bf16.msra.mxu0 %v1643
        %1665 = vmatpush.bf16.msra.mxu0 %v1642
        %1666 = vmatmul.bf16.gmra.mxu0 %v1594
        %v1667 = vpop.f32.mrf.mxu0
        %v1668 = vadd.f32 0.0, %v1667
        %v1669 = vpop.f32.mrf.mxu0
        %v1670 = vadd.f32 0.0, %v1669
        %1671 = vmatmul.bf16.gmra.mxu0 %v1595
        %v1672 = vpop.f32.mrf.mxu0
        %v1673 = vadd.f32 0.0, %v1672
        %v1674 = vpop.f32.mrf.mxu0
        %v1675 = vadd.f32 0.0, %v1674
        %1676 = vmatmul.bf16.gmra.mxu0 %v1596
        %v1677 = vpop.f32.mrf.mxu0
        %v1678 = vadd.f32 0.0, %v1677
        %v1679 = vpop.f32.mrf.mxu0
        %v1680 = vadd.f32 0.0, %v1679
        %1681 = vmatmul.bf16.gmra.mxu0 %v1597
        %v1682 = vpop.f32.mrf.mxu0
        %v1683 = vadd.f32 0.0, %v1682
        %v1684 = vpop.f32.mrf.mxu0
        %v1685 = vadd.f32 0.0, %v1684
        %1686 = vmatmul.bf16.gmra.mxu0 %v1598
        %v1687 = vpop.f32.mrf.mxu0
        %v1688 = vadd.f32 0.0, %v1687
        %v1689 = vpop.f32.mrf.mxu0
        %v1690 = vadd.f32 0.0, %v1689
        %1691 = vmatmul.bf16.gmra.mxu0 %v1599
        %v1692 = vpop.f32.mrf.mxu0
        %v1693 = vadd.f32 0.0, %v1692
        %v1694 = vpop.f32.mrf.mxu0
        %v1695 = vadd.f32 0.0, %v1694
        %1696 = vmatmul.bf16.gmra.mxu0 %v1600
        %v1697 = vpop.f32.mrf.mxu0
        %v1698 = vadd.f32 0.0, %v1697
        %v1699 = vpop.f32.mrf.mxu0
        %v1700 = vadd.f32 0.0, %v1699
        %1701 = vmatmul.bf16.gmra.mxu0 %v1601
        %v1702 = vpop.f32.mrf.mxu0
        %v1703 = vadd.f32 0.0, %v1702
        %v1704 = vpop.f32.mrf.mxu0
        %v1705 = vadd.f32 0.0, %v1704
        %1706 = vdwg.mxu0
        %v1723 = vunpack.c.l.b16 %v1546
        %v1724 = vunpack.c.l.b16 %v1547
        %v1725 = vunpack.c.l.b16 %v1548
        %v1726 = vunpack.c.l.b16 %v1549
        %v1727 = vunpack.c.l.b16 %v1550
        %v1728 = vunpack.c.l.b16 %v1551
        %v1729 = vunpack.c.l.b16 %v1552
        %v1730 = vunpack.c.l.b16 %v1553
        %v1731 = vunpack.c.l.b16 %v1554
        %v1732 = vunpack.c.l.b16 %v1555
        %v1733 = vunpack.c.l.b16 %v1556
        %v1734 = vunpack.c.l.b16 %v1557
        %v1735 = vunpack.c.l.b16 %v1558
        %v1736 = vunpack.c.l.b16 %v1559
        %v1737 = vunpack.c.l.b16 %v1560
        %v1738 = vunpack.c.l.b16 %v1561
        %v1739 = vpack.c.b16 %v1724, %v1723
        %v1740 = vpack.c.b16 %v1726, %v1725
        %v1741 = vpack.c.b16 %v1728, %v1727
        %v1742 = vpack.c.b16 %v1730, %v1729
        %v1743 = vpack.c.b16 %v1732, %v1731
        %v1744 = vpack.c.b16 %v1734, %v1733
        %v1745 = vpack.c.b16 %v1736, %v1735
        %v1746 = vpack.c.b16 %v1738, %v1737
        %v1771 = vunpack.c.l.b16 %v757
        %v1772 = vunpack.c.l.b16 %v759
        %v1773 = vunpack.c.l.b16 %v761
        %v1774 = vunpack.c.l.b16 %v763
        %v1775 = vunpack.c.l.b16 %v765
        %v1776 = vunpack.c.l.b16 %v767
        %v1777 = vunpack.c.l.b16 %v769
        %v1778 = vunpack.c.l.b16 %v771
        %v1779 = vunpack.c.l.b16 %v773
        %v1780 = vunpack.c.l.b16 %v775
        %v1781 = vunpack.c.l.b16 %v777
        %v1782 = vunpack.c.l.b16 %v779
        %v1783 = vunpack.c.l.b16 %v781
        %v1784 = vunpack.c.l.b16 %v783
        %v1785 = vunpack.c.l.b16 %v785
        %v1786 = vunpack.c.l.b16 %v787
        %v1787 = vpack.c.b16 %v1772, %v1771
        %v1788 = vpack.c.b16 %v1774, %v1773
        %v1789 = vpack.c.b16 %v1776, %v1775
        %v1790 = vpack.c.b16 %v1778, %v1777
        %v1791 = vpack.c.b16 %v1780, %v1779
        %v1792 = vpack.c.b16 %v1782, %v1781
        %v1793 = vpack.c.b16 %v1784, %v1783
        %v1794 = vpack.c.b16 %v1786, %v1785
        %1803 = vmatpush.bf16.msra.mxu0 %v1794
        %1804 = vmatpush.bf16.msra.mxu0 %v1793
        %1805 = vmatpush.bf16.msra.mxu0 %v1792
        %1806 = vmatpush.bf16.msra.mxu0 %v1791
        %1807 = vmatpush.bf16.msra.mxu0 %v1790
        %1808 = vmatpush.bf16.msra.mxu0 %v1789
        %1809 = vmatpush.bf16.msra.mxu0 %v1788
        %1810 = vmatpush.bf16.msra.mxu0 %v1787
        %1811 = vmatmul.bf16.gmra.mxu0 %v1739
        %v1812 = vpop.f32.mrf.mxu0
        %v1813 = vadd.f32 0.0, %v1812
        %v1814 = vpop.f32.mrf.mxu0
        %v1815 = vadd.f32 0.0, %v1814
        %1816 = vmatmul.bf16.gmra.mxu0 %v1740
        %v1817 = vpop.f32.mrf.mxu0
        %v1818 = vadd.f32 0.0, %v1817
        %v1819 = vpop.f32.mrf.mxu0
        %v1820 = vadd.f32 0.0, %v1819
        %1821 = vmatmul.bf16.gmra.mxu0 %v1741
        %v1822 = vpop.f32.mrf.mxu0
        %v1823 = vadd.f32 0.0, %v1822
        %v1824 = vpop.f32.mrf.mxu0
        %v1825 = vadd.f32 0.0, %v1824
        %1826 = vmatmul.bf16.gmra.mxu0 %v1742
        %v1827 = vpop.f32.mrf.mxu0
        %v1828 = vadd.f32 0.0, %v1827
        %v1829 = vpop.f32.mrf.mxu0
        %v1830 = vadd.f32 0.0, %v1829
        %1831 = vmatmul.bf16.gmra.mxu0 %v1743
        %v1832 = vpop.f32.mrf.mxu0
        %v1833 = vadd.f32 0.0, %v1832
        %v1834 = vpop.f32.mrf.mxu0
        %v1835 = vadd.f32 0.0, %v1834
        %1836 = vmatmul.bf16.gmra.mxu0 %v1744
        %v1837 = vpop.f32.mrf.mxu0
        %v1838 = vadd.f32 0.0, %v1837
        %v1839 = vpop.f32.mrf.mxu0
        %v1840 = vadd.f32 0.0, %v1839
        %1841 = vmatmul.bf16.gmra.mxu0 %v1745
        %v1842 = vpop.f32.mrf.mxu0
        %v1843 = vadd.f32 0.0, %v1842
        %v1844 = vpop.f32.mrf.mxu0
        %v1845 = vadd.f32 0.0, %v1844
        %1846 = vmatmul.bf16.gmra.mxu0 %v1746
        %v1847 = vpop.f32.mrf.mxu0
        %v1848 = vadd.f32 0.0, %v1847
        %v1849 = vpop.f32.mrf.mxu0
        %v1850 = vadd.f32 0.0, %v1849
        %1851 = vdwg.mxu0
        %v1852 = vpack.c.bf16 %v1668, %v1668
        %v1853 = vpack.c.bf16 %v1670, %v1670
        %v1854 = vpack.c.bf16 %v1673, %v1673
        %v1855 = vpack.c.bf16 %v1675, %v1675
        %v1856 = vpack.c.bf16 %v1678, %v1678
        %v1857 = vpack.c.bf16 %v1680, %v1680
        %v1858 = vpack.c.bf16 %v1683, %v1683
        %v1859 = vpack.c.bf16 %v1685, %v1685
        %v1860 = vpack.c.bf16 %v1688, %v1688
        %v1861 = vpack.c.bf16 %v1690, %v1690
        %v1862 = vpack.c.bf16 %v1693, %v1693
        %v1863 = vpack.c.bf16 %v1695, %v1695
        %v1864 = vpack.c.bf16 %v1698, %v1698
        %v1865 = vpack.c.bf16 %v1700, %v1700
        %v1866 = vpack.c.bf16 %v1703, %v1703
        %v1867 = vpack.c.bf16 %v1705, %v1705
        %v1868 = vpack.c.bf16 %v1813, %v1813
        %v1869 = vpack.c.bf16 %v1815, %v1815
        %v1870 = vpack.c.bf16 %v1818, %v1818
        %v1871 = vpack.c.bf16 %v1820, %v1820
        %v1872 = vpack.c.bf16 %v1823, %v1823
        %v1873 = vpack.c.bf16 %v1825, %v1825
        %v1874 = vpack.c.bf16 %v1828, %v1828
        %v1875 = vpack.c.bf16 %v1830, %v1830
        %v1876 = vpack.c.bf16 %v1833, %v1833
        %v1877 = vpack.c.bf16 %v1835, %v1835
        %v1878 = vpack.c.bf16 %v1838, %v1838
        %v1879 = vpack.c.bf16 %v1840, %v1840
        %v1880 = vpack.c.bf16 %v1843, %v1843
        %v1881 = vpack.c.bf16 %v1845, %v1845
        %v1882 = vpack.c.bf16 %v1848, %v1848
        %v1883 = vpack.c.bf16 %v1850, %v1850
        %vm1884 = vcmask 257024
        %1885 = vst.msk [vmem:[#allocation2] sm:$0xf] %vm1884, %v1852
        %1886 = vst.msk [vmem:[#allocation2 + $0x4] sm:$0xf] %vm1884, %v1853
        %1887 = vst.msk [vmem:[#allocation2 + $0x8] sm:$0xf] %vm1884, %v1854
        %1888 = vst.msk [vmem:[#allocation2 + $0xc] sm:$0xf] %vm1884, %v1855
        %1889 = vst.msk [vmem:[#allocation2 + $0x10] sm:$0xf] %vm1884, %v1856
        %1890 = vst.msk [vmem:[#allocation2 + $0x14] sm:$0xf] %vm1884, %v1857
        %1891 = vst.msk [vmem:[#allocation2 + $0x18] sm:$0xf] %vm1884, %v1858
        %1892 = vst.msk [vmem:[#allocation2 + $0x1c] sm:$0xf] %vm1884, %v1859
        %1893 = vst.msk [vmem:[#allocation2 + $0x20] sm:$0xf] %vm1884, %v1860
        %1894 = vst.msk [vmem:[#allocation2 + $0x24] sm:$0xf] %vm1884, %v1861
        %1895 = vst.msk [vmem:[#allocation2 + $0x28] sm:$0xf] %vm1884, %v1862
        %1896 = vst.msk [vmem:[#allocation2 + $0x2c] sm:$0xf] %vm1884, %v1863
        %1897 = vst.msk [vmem:[#allocation2 + $0x30] sm:$0xf] %vm1884, %v1864
        %1898 = vst.msk [vmem:[#allocation2 + $0x34] sm:$0xf] %vm1884, %v1865
        %1899 = vst.msk [vmem:[#allocation2 + $0x38] sm:$0xf] %vm1884, %v1866
        %1900 = vst.msk [vmem:[#allocation2 + $0x3c] sm:$0xf] %vm1884, %v1867
        %1901 = vst.msk [vmem:[#allocation2 + $0x40] sm:$0xf] %vm1884, %v1868
        %1902 = vst.msk [vmem:[#allocation2 + $0x44] sm:$0xf] %vm1884, %v1869
        %1903 = vst.msk [vmem:[#allocation2 + $0x48] sm:$0xf] %vm1884, %v1870
        %1904 = vst.msk [vmem:[#allocation2 + $0x4c] sm:$0xf] %vm1884, %v1871
        %1905 = vst.msk [vmem:[#allocation2 + $0x50] sm:$0xf] %vm1884, %v1872
        %1906 = vst.msk [vmem:[#allocation2 + $0x54] sm:$0xf] %vm1884, %v1873
        %1907 = vst.msk [vmem:[#allocation2 + $0x58] sm:$0xf] %vm1884, %v1874
        %1908 = vst.msk [vmem:[#allocation2 + $0x5c] sm:$0xf] %vm1884, %v1875
        %1909 = vst.msk [vmem:[#allocation2 + $0x60] sm:$0xf] %vm1884, %v1876
        %1910 = vst.msk [vmem:[#allocation2 + $0x64] sm:$0xf] %vm1884, %v1877
        %1911 = vst.msk [vmem:[#allocation2 + $0x68] sm:$0xf] %vm1884, %v1878
        %1912 = vst.msk [vmem:[#allocation2 + $0x6c] sm:$0xf] %vm1884, %v1879
        %1913 = vst.msk [vmem:[#allocation2 + $0x70] sm:$0xf] %vm1884, %v1880
        %1914 = vst.msk [vmem:[#allocation2 + $0x74] sm:$0xf] %vm1884, %v1881
        %1915 = vst.msk [vmem:[#allocation2 + $0x78] sm:$0xf] %vm1884, %v1882
        %1916 = vst.msk [vmem:[#allocation2 + $0x7c] sm:$0xf] %vm1884, %v1883
        %1917 = vrot.lane.b32.xlu0 %v724, 96
        %v1918 = vpop.permute.xlu0 %1917
        %1919 = vrot.lane.b32.xlu0 %v726, 96
        %v1920 = vpop.permute.xlu0 %1919
        %1921 = vrot.lane.b32.xlu0 %v728, 96
        %v1922 = vpop.permute.xlu0 %1921
        %1923 = vrot.lane.b32.xlu0 %v730, 96
        %v1924 = vpop.permute.xlu0 %1923
        %1925 = vrot.lane.b32.xlu0 %v732, 96
        %v1926 = vpop.permute.xlu0 %1925
        %1927 = vrot.lane.b32.xlu0 %v734, 96
        %v1928 = vpop.permute.xlu0 %1927
        %1929 = vrot.lane.b32.xlu0 %v736, 96
        %v1930 = vpop.permute.xlu0 %1929
        %1931 = vrot.lane.b32.xlu0 %v738, 96
        %v1932 = vpop.permute.xlu0 %1931
        %1933 = vrot.lane.b32.xlu0 %v740, 96
        %v1934 = vpop.permute.xlu0 %1933
        %1935 = vrot.lane.b32.xlu0 %v742, 96
        %v1936 = vpop.permute.xlu0 %1935
        %1937 = vrot.lane.b32.xlu0 %v744, 96
        %v1938 = vpop.permute.xlu0 %1937
        %1939 = vrot.lane.b32.xlu0 %v746, 96
        %v1940 = vpop.permute.xlu0 %1939
        %1941 = vrot.lane.b32.xlu0 %v748, 96
        %v1942 = vpop.permute.xlu0 %1941
        %1943 = vrot.lane.b32.xlu0 %v750, 96
        %v1944 = vpop.permute.xlu0 %1943
        %1945 = vrot.lane.b32.xlu0 %v752, 96
        %v1946 = vpop.permute.xlu0 %1945
        %1947 = vrot.lane.b32.xlu0 %v754, 96
        %v1948 = vpop.permute.xlu0 %1947
        %1949 = vrot.lane.b32.xlu0 %v756, 96
        %v1950 = vpop.permute.xlu0 %1949
        %1951 = vrot.lane.b32.xlu0 %v758, 96
        %v1952 = vpop.permute.xlu0 %1951
        %1953 = vrot.lane.b32.xlu0 %v760, 96
        %v1954 = vpop.permute.xlu0 %1953
        %1955 = vrot.lane.b32.xlu0 %v762, 96
        %v1956 = vpop.permute.xlu0 %1955
        %1957 = vrot.lane.b32.xlu0 %v764, 96
        %v1958 = vpop.permute.xlu0 %1957
        %1959 = vrot.lane.b32.xlu0 %v766, 96
        %v1960 = vpop.permute.xlu0 %1959
        %1961 = vrot.lane.b32.xlu0 %v768, 96
        %v1962 = vpop.permute.xlu0 %1961
        %1963 = vrot.lane.b32.xlu0 %v770, 96
        %v1964 = vpop.permute.xlu0 %1963
        %1965 = vrot.lane.b32.xlu0 %v772, 96
        %v1966 = vpop.permute.xlu0 %1965
        %1967 = vrot.lane.b32.xlu0 %v774, 96
        %v1968 = vpop.permute.xlu0 %1967
        %1969 = vrot.lane.b32.xlu0 %v776, 96
        %v1970 = vpop.permute.xlu0 %1969
        %1971 = vrot.lane.b32.xlu0 %v778, 96
        %v1972 = vpop.permute.xlu0 %1971
        %1973 = vrot.lane.b32.xlu0 %v780, 96
        %v1974 = vpop.permute.xlu0 %1973
        %1975 = vrot.lane.b32.xlu0 %v782, 96
        %v1976 = vpop.permute.xlu0 %1975
        %1977 = vrot.lane.b32.xlu0 %v784, 96
        %v1978 = vpop.permute.xlu0 %1977
        %1979 = vrot.lane.b32.xlu0 %v786, 96
        %v1980 = vpop.permute.xlu0 %1979
        %v1981 = vrot.slane %v1918, 4
        %v1982 = vrot.slane %v1920, 4
        %v1983 = vrot.slane %v1922, 4
        %v1984 = vrot.slane %v1924, 4
        %v1985 = vrot.slane %v1926, 4
        %v1986 = vrot.slane %v1928, 4
        %v1987 = vrot.slane %v1930, 4
        %v1988 = vrot.slane %v1932, 4
        %v1989 = vrot.slane %v1934, 4
        %v1990 = vrot.slane %v1936, 4
        %v1991 = vrot.slane %v1938, 4
        %v1992 = vrot.slane %v1940, 4
        %v1993 = vrot.slane %v1942, 4
        %v1994 = vrot.slane %v1944, 4
        %v1995 = vrot.slane %v1946, 4
        %v1996 = vrot.slane %v1948, 4
        %v1997 = vrot.slane %v1950, 4
        %v1998 = vrot.slane %v1952, 4
        %v1999 = vrot.slane %v1954, 4
        %v2000 = vrot.slane %v1956, 4
        %v2001 = vrot.slane %v1958, 4
        %v2002 = vrot.slane %v1960, 4
        %v2003 = vrot.slane %v1962, 4
        %v2004 = vrot.slane %v1964, 4
        %v2005 = vrot.slane %v1966, 4
        %v2006 = vrot.slane %v1968, 4
        %v2007 = vrot.slane %v1970, 4
        %v2008 = vrot.slane %v1972, 4
        %v2009 = vrot.slane %v1974, 4
        %v2010 = vrot.slane %v1976, 4
        %v2011 = vrot.slane %v1978, 4
        %v2012 = vrot.slane %v1980, 4
        %2013 = vrot.lane.b32.xlu0 %v903, 96
        %v2014 = vpop.permute.xlu0 %2013
        %2015 = vrot.lane.b32.xlu0 %v904, 96
        %v2016 = vpop.permute.xlu0 %2015
        %2017 = vrot.lane.b32.xlu0 %v905, 96
        %v2018 = vpop.permute.xlu0 %2017
        %2019 = vrot.lane.b32.xlu0 %v906, 96
        %v2020 = vpop.permute.xlu0 %2019
        %2021 = vrot.lane.b32.xlu0 %v907, 96
        %v2022 = vpop.permute.xlu0 %2021
        %2023 = vrot.lane.b32.xlu0 %v908, 96
        %v2024 = vpop.permute.xlu0 %2023
        %2025 = vrot.lane.b32.xlu0 %v909, 96
        %v2026 = vpop.permute.xlu0 %2025
        %2027 = vrot.lane.b32.xlu0 %v910, 96
        %v2028 = vpop.permute.xlu0 %2027
        %v2029 = vunpack.c.l.b16 %v1981
        %v2030 = vunpack.c.l.b16 %v1982
        %v2031 = vunpack.c.l.b16 %v1983
        %v2032 = vunpack.c.l.b16 %v1984
        %v2033 = vunpack.c.l.b16 %v1985
        %v2034 = vunpack.c.l.b16 %v1986
        %v2035 = vunpack.c.l.b16 %v1987
        %v2036 = vunpack.c.l.b16 %v1988
        %v2037 = vunpack.c.l.b16 %v1989
        %v2038 = vunpack.c.l.b16 %v1990
        %v2039 = vunpack.c.l.b16 %v1991
        %v2040 = vunpack.c.l.b16 %v1992
        %v2041 = vunpack.c.l.b16 %v1993
        %v2042 = vunpack.c.l.b16 %v1994
        %v2043 = vunpack.c.l.b16 %v1995
        %v2044 = vunpack.c.l.b16 %v1996
        %v2045 = vpack.c.b16 %v2030, %v2029
        %v2046 = vpack.c.b16 %v2032, %v2031
        %v2047 = vpack.c.b16 %v2034, %v2033
        %v2048 = vpack.c.b16 %v2036, %v2035
        %v2049 = vpack.c.b16 %v2038, %v2037
        %v2050 = vpack.c.b16 %v2040, %v2039
        %v2051 = vpack.c.b16 %v2042, %v2041
        %v2052 = vpack.c.b16 %v2044, %v2043
        %v2054 = vsel %vm935, %v2014, 0
        %v2057 = vsel %vm935, %v2016, 0
        %v2060 = vsel %vm935, %v2018, 0
        %v2063 = vsel %vm935, %v2020, 0
        %v2066 = vsel %vm935, %v2022, 0
        %v2069 = vsel %vm935, %v2024, 0
        %v2072 = vsel %vm935, %v2026, 0
        %v2075 = vsel %vm935, %v2028, 0
        %v2078 = vsel %vm935, %v2045, 0
        %v2081 = vsel %vm935, %v2046, 0
        %v2084 = vsel %vm935, %v2047, 0
        %v2087 = vsel %vm935, %v2048, 0
        %v2090 = vsel %vm935, %v2049, 0
        %v2093 = vsel %vm935, %v2050, 0
        %v2096 = vsel %vm935, %v2051, 0
        %v2099 = vsel %vm935, %v2052, 0
        %2101 = vmatpush.bf16.xpose.msra.mxu0 %v2099
        %2102 = vmatpush.bf16.xpose.msra.mxu0 %v2096
        %2103 = vmatpush.bf16.xpose.msra.mxu0 %v2093
        %2104 = vmatpush.bf16.xpose.msra.mxu0 %v2090
        %2105 = vmatpush.bf16.xpose.msra.mxu0 %v2087
        %2106 = vmatpush.bf16.xpose.msra.mxu0 %v2084
        %2107 = vmatpush.bf16.xpose.msra.mxu0 %v2081
        %2108 = vmatpush.bf16.xpose.msra.mxu0 %v2078
        %2109 = vmatmul.bf16.gmra.mxu0 %v2054
        %v2110 = vpop.f32.mrf.mxu0
        %v2111 = vadd.f32 0.0, %v2110
        %v2112 = vpop.f32.mrf.mxu0
        %v2113 = vadd.f32 0.0, %v2112
        %2114 = vmatmul.bf16.gmra.mxu0 %v2057
        %v2115 = vpop.f32.mrf.mxu0
        %v2116 = vadd.f32 0.0, %v2115
        %v2117 = vpop.f32.mrf.mxu0
        %v2118 = vadd.f32 0.0, %v2117
        %2119 = vmatmul.bf16.gmra.mxu0 %v2060
        %v2120 = vpop.f32.mrf.mxu0
        %v2121 = vadd.f32 0.0, %v2120
        %v2122 = vpop.f32.mrf.mxu0
        %v2123 = vadd.f32 0.0, %v2122
        %2124 = vmatmul.bf16.gmra.mxu0 %v2063
        %v2125 = vpop.f32.mrf.mxu0
        %v2126 = vadd.f32 0.0, %v2125
        %v2127 = vpop.f32.mrf.mxu0
        %v2128 = vadd.f32 0.0, %v2127
        %2129 = vmatmul.bf16.gmra.mxu0 %v2066
        %v2130 = vpop.f32.mrf.mxu0
        %v2131 = vadd.f32 0.0, %v2130
        %v2132 = vpop.f32.mrf.mxu0
        %v2133 = vadd.f32 0.0, %v2132
        %2134 = vmatmul.bf16.gmra.mxu0 %v2069
        %v2135 = vpop.f32.mrf.mxu0
        %v2136 = vadd.f32 0.0, %v2135
        %v2137 = vpop.f32.mrf.mxu0
        %v2138 = vadd.f32 0.0, %v2137
        %2139 = vmatmul.bf16.gmra.mxu0 %v2072
        %v2140 = vpop.f32.mrf.mxu0
        %v2141 = vadd.f32 0.0, %v2140
        %v2142 = vpop.f32.mrf.mxu0
        %v2143 = vadd.f32 0.0, %v2142
        %2144 = vmatmul.bf16.gmra.mxu0 %v2075
        %v2145 = vpop.f32.mrf.mxu0
        %v2146 = vadd.f32 0.0, %v2145
        %v2147 = vpop.f32.mrf.mxu0
        %v2148 = vadd.f32 0.0, %v2147
        %2149 = vdwg.mxu0
        %2150 = vrot.lane.b32.xlu0 %v1049, 96
        %v2151 = vpop.permute.xlu0 %2150
        %2152 = vrot.lane.b32.xlu0 %v1050, 96
        %v2153 = vpop.permute.xlu0 %2152
        %2154 = vrot.lane.b32.xlu0 %v1051, 96
        %v2155 = vpop.permute.xlu0 %2154
        %2156 = vrot.lane.b32.xlu0 %v1052, 96
        %v2157 = vpop.permute.xlu0 %2156
        %2158 = vrot.lane.b32.xlu0 %v1053, 96
        %v2159 = vpop.permute.xlu0 %2158
        %2160 = vrot.lane.b32.xlu0 %v1054, 96
        %v2161 = vpop.permute.xlu0 %2160
        %2162 = vrot.lane.b32.xlu0 %v1055, 96
        %v2163 = vpop.permute.xlu0 %2162
        %2164 = vrot.lane.b32.xlu0 %v1056, 96
        %v2165 = vpop.permute.xlu0 %2164
        %v2166 = vunpack.c.l.b16 %v1997
        %v2167 = vunpack.c.l.b16 %v1998
        %v2168 = vunpack.c.l.b16 %v1999
        %v2169 = vunpack.c.l.b16 %v2000
        %v2170 = vunpack.c.l.b16 %v2001
        %v2171 = vunpack.c.l.b16 %v2002
        %v2172 = vunpack.c.l.b16 %v2003
        %v2173 = vunpack.c.l.b16 %v2004
        %v2174 = vunpack.c.l.b16 %v2005
        %v2175 = vunpack.c.l.b16 %v2006
        %v2176 = vunpack.c.l.b16 %v2007
        %v2177 = vunpack.c.l.b16 %v2008
        %v2178 = vunpack.c.l.b16 %v2009
        %v2179 = vunpack.c.l.b16 %v2010
        %v2180 = vunpack.c.l.b16 %v2011
        %v2181 = vunpack.c.l.b16 %v2012
        %v2182 = vpack.c.b16 %v2167, %v2166
        %v2183 = vpack.c.b16 %v2169, %v2168
        %v2184 = vpack.c.b16 %v2171, %v2170
        %v2185 = vpack.c.b16 %v2173, %v2172
        %v2186 = vpack.c.b16 %v2175, %v2174
        %v2187 = vpack.c.b16 %v2177, %v2176
        %v2188 = vpack.c.b16 %v2179, %v2178
        %v2189 = vpack.c.b16 %v2181, %v2180
        %v2191 = vsel %vm935, %v2151, 0
        %v2194 = vsel %vm935, %v2153, 0
        %v2197 = vsel %vm935, %v2155, 0
        %v2200 = vsel %vm935, %v2157, 0
        %v2203 = vsel %vm935, %v2159, 0
        %v2206 = vsel %vm935, %v2161, 0
        %v2209 = vsel %vm935, %v2163, 0
        %v2212 = vsel %vm935, %v2165, 0
        %v2215 = vsel %vm935, %v2182, 0
        %v2218 = vsel %vm935, %v2183, 0
        %v2221 = vsel %vm935, %v2184, 0
        %v2224 = vsel %vm935, %v2185, 0
        %v2227 = vsel %vm935, %v2186, 0
        %v2230 = vsel %vm935, %v2187, 0
        %v2233 = vsel %vm935, %v2188, 0
        %v2236 = vsel %vm935, %v2189, 0
        %2238 = vmatpush.bf16.xpose.msra.mxu0 %v2236
        %2239 = vmatpush.bf16.xpose.msra.mxu0 %v2233
        %2240 = vmatpush.bf16.xpose.msra.mxu0 %v2230
        %2241 = vmatpush.bf16.xpose.msra.mxu0 %v2227
        %2242 = vmatpush.bf16.xpose.msra.mxu0 %v2224
        %2243 = vmatpush.bf16.xpose.msra.mxu0 %v2221
        %2244 = vmatpush.bf16.xpose.msra.mxu0 %v2218
        %2245 = vmatpush.bf16.xpose.msra.mxu0 %v2215
        %2246 = vmatmul.bf16.gmra.mxu0 %v2191
        %v2247 = vpop.f32.mrf.mxu0
        %v2248 = vadd.f32 0.0, %v2247
        %v2249 = vpop.f32.mrf.mxu0
        %v2250 = vadd.f32 0.0, %v2249
        %2251 = vmatmul.bf16.gmra.mxu0 %v2194
        %v2252 = vpop.f32.mrf.mxu0
        %v2253 = vadd.f32 0.0, %v2252
        %v2254 = vpop.f32.mrf.mxu0
        %v2255 = vadd.f32 0.0, %v2254
        %2256 = vmatmul.bf16.gmra.mxu0 %v2197
        %v2257 = vpop.f32.mrf.mxu0
        %v2258 = vadd.f32 0.0, %v2257
        %v2259 = vpop.f32.mrf.mxu0
        %v2260 = vadd.f32 0.0, %v2259
        %2261 = vmatmul.bf16.gmra.mxu0 %v2200
        %v2262 = vpop.f32.mrf.mxu0
        %v2263 = vadd.f32 0.0, %v2262
        %v2264 = vpop.f32.mrf.mxu0
        %v2265 = vadd.f32 0.0, %v2264
        %2266 = vmatmul.bf16.gmra.mxu0 %v2203
        %v2267 = vpop.f32.mrf.mxu0
        %v2268 = vadd.f32 0.0, %v2267
        %v2269 = vpop.f32.mrf.mxu0
        %v2270 = vadd.f32 0.0, %v2269
        %2271 = vmatmul.bf16.gmra.mxu0 %v2206
        %v2272 = vpop.f32.mrf.mxu0
        %v2273 = vadd.f32 0.0, %v2272
        %v2274 = vpop.f32.mrf.mxu0
        %v2275 = vadd.f32 0.0, %v2274
        %2276 = vmatmul.bf16.gmra.mxu0 %v2209
        %v2277 = vpop.f32.mrf.mxu0
        %v2278 = vadd.f32 0.0, %v2277
        %v2279 = vpop.f32.mrf.mxu0
        %v2280 = vadd.f32 0.0, %v2279
        %2281 = vmatmul.bf16.gmra.mxu0 %v2212
        %v2282 = vpop.f32.mrf.mxu0
        %v2283 = vadd.f32 0.0, %v2282
        %v2284 = vpop.f32.mrf.mxu0
        %v2285 = vadd.f32 0.0, %v2284
        %2286 = vdwg.mxu0
        %v2287 = vsel %vm1194, %v2111, -inf
        %v2288 = vsel %vm1195, %v2113, -inf
        %v2289 = vsel %vm1196, %v2116, -inf
        %v2290 = vsel %vm1197, %v2118, -inf
        %v2291 = vsel %vm1198, %v2121, -inf
        %v2292 = vsel %vm1199, %v2123, -inf
        %v2293 = vsel %vm1200, %v2126, -inf
        %v2294 = vsel %vm1201, %v2128, -inf
        %v2295 = vsel %vm1202, %v2131, -inf
        %v2296 = vsel %vm1203, %v2133, -inf
        %v2297 = vsel %vm1204, %v2136, -inf
        %v2298 = vsel %vm1205, %v2138, -inf
        %v2299 = vsel %vm1206, %v2141, -inf
        %v2300 = vsel %vm1207, %v2143, -inf
        %v2301 = vsel %vm1208, %v2146, -inf
        %v2302 = vsel %vm1209, %v2148, -inf
        %v2303 = vsel %vm1194, %v2248, -inf
        %v2304 = vsel %vm1195, %v2250, -inf
        %v2305 = vsel %vm1196, %v2253, -inf
        %v2306 = vsel %vm1197, %v2255, -inf
        %v2307 = vsel %vm1198, %v2258, -inf
        %v2308 = vsel %vm1199, %v2260, -inf
        %v2309 = vsel %vm1200, %v2263, -inf
        %v2310 = vsel %vm1201, %v2265, -inf
        %v2311 = vsel %vm1202, %v2268, -inf
        %v2312 = vsel %vm1203, %v2270, -inf
        %v2313 = vsel %vm1204, %v2273, -inf
        %v2314 = vsel %vm1205, %v2275, -inf
        %v2315 = vsel %vm1206, %v2278, -inf
        %v2316 = vsel %vm1207, %v2280, -inf
        %v2317 = vsel %vm1208, %v2283, -inf
        %v2318 = vsel %vm1209, %v2285, -inf
        %2319 = vmax.xlane.f32.xlu0 %v2287
        %v2320 = vpop.xlane.xlu0 %2319
        %2321 = vmax.xlane.f32.xlu0 %v2288
        %v2322 = vpop.xlane.xlu0 %2321
        %2323 = vmax.xlane.f32.xlu0 %v2289
        %v2324 = vpop.xlane.xlu0 %2323
        %2325 = vmax.xlane.f32.xlu0 %v2290
        %v2326 = vpop.xlane.xlu0 %2325
        %2327 = vmax.xlane.f32.xlu0 %v2291
        %v2328 = vpop.xlane.xlu0 %2327
        %2329 = vmax.xlane.f32.xlu0 %v2292
        %v2330 = vpop.xlane.xlu0 %2329
        %2331 = vmax.xlane.f32.xlu0 %v2293
        %v2332 = vpop.xlane.xlu0 %2331
        %2333 = vmax.xlane.f32.xlu0 %v2294
        %v2334 = vpop.xlane.xlu0 %2333
        %2335 = vmax.xlane.f32.xlu0 %v2295
        %v2336 = vpop.xlane.xlu0 %2335
        %2337 = vmax.xlane.f32.xlu0 %v2296
        %v2338 = vpop.xlane.xlu0 %2337
        %2339 = vmax.xlane.f32.xlu0 %v2297
        %v2340 = vpop.xlane.xlu0 %2339
        %2341 = vmax.xlane.f32.xlu0 %v2298
        %v2342 = vpop.xlane.xlu0 %2341
        %2343 = vmax.xlane.f32.xlu0 %v2299
        %v2344 = vpop.xlane.xlu0 %2343
        %2345 = vmax.xlane.f32.xlu0 %v2300
        %v2346 = vpop.xlane.xlu0 %2345
        %2347 = vmax.xlane.f32.xlu0 %v2301
        %v2348 = vpop.xlane.xlu0 %2347
        %2349 = vmax.xlane.f32.xlu0 %v2302
        %v2350 = vpop.xlane.xlu0 %2349
        %2351 = vmax.xlane.f32.xlu0 %v2303
        %v2352 = vpop.xlane.xlu0 %2351
        %2353 = vmax.xlane.f32.xlu0 %v2304
        %v2354 = vpop.xlane.xlu0 %2353
        %2355 = vmax.xlane.f32.xlu0 %v2305
        %v2356 = vpop.xlane.xlu0 %2355
        %2357 = vmax.xlane.f32.xlu0 %v2306
        %v2358 = vpop.xlane.xlu0 %2357
        %2359 = vmax.xlane.f32.xlu0 %v2307
        %v2360 = vpop.xlane.xlu0 %2359
        %2361 = vmax.xlane.f32.xlu0 %v2308
        %v2362 = vpop.xlane.xlu0 %2361
        %2363 = vmax.xlane.f32.xlu0 %v2309
        %v2364 = vpop.xlane.xlu0 %2363
        %2365 = vmax.xlane.f32.xlu0 %v2310
        %v2366 = vpop.xlane.xlu0 %2365
        %2367 = vmax.xlane.f32.xlu0 %v2311
        %v2368 = vpop.xlane.xlu0 %2367
        %2369 = vmax.xlane.f32.xlu0 %v2312
        %v2370 = vpop.xlane.xlu0 %2369
        %2371 = vmax.xlane.f32.xlu0 %v2313
        %v2372 = vpop.xlane.xlu0 %2371
        %2373 = vmax.xlane.f32.xlu0 %v2314
        %v2374 = vpop.xlane.xlu0 %2373
        %2375 = vmax.xlane.f32.xlu0 %v2315
        %v2376 = vpop.xlane.xlu0 %2375
        %2377 = vmax.xlane.f32.xlu0 %v2316
        %v2378 = vpop.xlane.xlu0 %2377
        %2379 = vmax.xlane.f32.xlu0 %v2317
        %v2380 = vpop.xlane.xlu0 %2379
        %2381 = vmax.xlane.f32.xlu0 %v2318
        %v2382 = vpop.xlane.xlu0 %2381
        %v2383 = vsub.f32 %v2287, %v2320
        %v2384 = vsub.f32 %v2288, %v2322
        %v2385 = vsub.f32 %v2289, %v2324
        %v2386 = vsub.f32 %v2290, %v2326
        %v2387 = vsub.f32 %v2291, %v2328
        %v2388 = vsub.f32 %v2292, %v2330
        %v2389 = vsub.f32 %v2293, %v2332
        %v2390 = vsub.f32 %v2294, %v2334
        %v2391 = vsub.f32 %v2295, %v2336
        %v2392 = vsub.f32 %v2296, %v2338
        %v2393 = vsub.f32 %v2297, %v2340
        %v2394 = vsub.f32 %v2298, %v2342
        %v2395 = vsub.f32 %v2299, %v2344
        %v2396 = vsub.f32 %v2300, %v2346
        %v2397 = vsub.f32 %v2301, %v2348
        %v2398 = vsub.f32 %v2302, %v2350
        %v2399 = vsub.f32 %v2303, %v2352
        %v2400 = vsub.f32 %v2304, %v2354
        %v2401 = vsub.f32 %v2305, %v2356
        %v2402 = vsub.f32 %v2306, %v2358
        %v2403 = vsub.f32 %v2307, %v2360
        %v2404 = vsub.f32 %v2308, %v2362
        %v2405 = vsub.f32 %v2309, %v2364
        %v2406 = vsub.f32 %v2310, %v2366
        %v2407 = vsub.f32 %v2311, %v2368
        %v2408 = vsub.f32 %v2312, %v2370
        %v2409 = vsub.f32 %v2313, %v2372
        %v2410 = vsub.f32 %v2314, %v2374
        %v2411 = vsub.f32 %v2315, %v2376
        %v2412 = vsub.f32 %v2316, %v2378
        %v2413 = vsub.f32 %v2317, %v2380
        %v2414 = vsub.f32 %v2318, %v2382
        %v2415 = vmul.f32 %v2383, 1.442695
        %v2416 = vpow.pop %v2415
        %v2417 = vmul.f32 %v2384, 1.442695
        %v2418 = vpow.pop %v2417
        %v2419 = vmul.f32 %v2385, 1.442695
        %v2420 = vpow.pop %v2419
        %v2421 = vmul.f32 %v2386, 1.442695
        %v2422 = vpow.pop %v2421
        %v2423 = vmul.f32 %v2387, 1.442695
        %v2424 = vpow.pop %v2423
        %v2425 = vmul.f32 %v2388, 1.442695
        %v2426 = vpow.pop %v2425
        %v2427 = vmul.f32 %v2389, 1.442695
        %v2428 = vpow.pop %v2427
        %v2429 = vmul.f32 %v2390, 1.442695
        %v2430 = vpow.pop %v2429
        %v2431 = vmul.f32 %v2391, 1.442695
        %v2432 = vpow.pop %v2431
        %v2433 = vmul.f32 %v2392, 1.442695
        %v2434 = vpow.pop %v2433
        %v2435 = vmul.f32 %v2393, 1.442695
        %v2436 = vpow.pop %v2435
        %v2437 = vmul.f32 %v2394, 1.442695
        %v2438 = vpow.pop %v2437
        %v2439 = vmul.f32 %v2395, 1.442695
        %v2440 = vpow.pop %v2439
        %v2441 = vmul.f32 %v2396, 1.442695
        %v2442 = vpow.pop %v2441
        %v2443 = vmul.f32 %v2397, 1.442695
        %v2444 = vpow.pop %v2443
        %v2445 = vmul.f32 %v2398, 1.442695
        %v2446 = vpow.pop %v2445
        %v2447 = vmul.f32 %v2399, 1.442695
        %v2448 = vpow.pop %v2447
        %v2449 = vmul.f32 %v2400, 1.442695
        %v2450 = vpow.pop %v2449
        %v2451 = vmul.f32 %v2401, 1.442695
        %v2452 = vpow.pop %v2451
        %v2453 = vmul.f32 %v2402, 1.442695
        %v2454 = vpow.pop %v2453
        %v2455 = vmul.f32 %v2403, 1.442695
        %v2456 = vpow.pop %v2455
        %v2457 = vmul.f32 %v2404, 1.442695
        %v2458 = vpow.pop %v2457
        %v2459 = vmul.f32 %v2405, 1.442695
        %v2460 = vpow.pop %v2459
        %v2461 = vmul.f32 %v2406, 1.442695
        %v2462 = vpow.pop %v2461
        %v2463 = vmul.f32 %v2407, 1.442695
        %v2464 = vpow.pop %v2463
        %v2465 = vmul.f32 %v2408, 1.442695
        %v2466 = vpow.pop %v2465
        %v2467 = vmul.f32 %v2409, 1.442695
        %v2468 = vpow.pop %v2467
        %v2469 = vmul.f32 %v2410, 1.442695
        %v2470 = vpow.pop %v2469
        %v2471 = vmul.f32 %v2411, 1.442695
        %v2472 = vpow.pop %v2471
        %v2473 = vmul.f32 %v2412, 1.442695
        %v2474 = vpow.pop %v2473
        %v2475 = vmul.f32 %v2413, 1.442695
        %v2476 = vpow.pop %v2475
        %v2477 = vmul.f32 %v2414, 1.442695
        %v2478 = vpow.pop %v2477
        %2479 = vadd.xlane.f32.xlu0 %v2416
        %v2480 = vpop.xlane.xlu0 %2479
        %2481 = vadd.xlane.f32.xlu0 %v2418
        %v2482 = vpop.xlane.xlu0 %2481
        %2483 = vadd.xlane.f32.xlu0 %v2420
        %v2484 = vpop.xlane.xlu0 %2483
        %2485 = vadd.xlane.f32.xlu0 %v2422
        %v2486 = vpop.xlane.xlu0 %2485
        %2487 = vadd.xlane.f32.xlu0 %v2424
        %v2488 = vpop.xlane.xlu0 %2487
        %2489 = vadd.xlane.f32.xlu0 %v2426
        %v2490 = vpop.xlane.xlu0 %2489
        %2491 = vadd.xlane.f32.xlu0 %v2428
        %v2492 = vpop.xlane.xlu0 %2491
        %2493 = vadd.xlane.f32.xlu0 %v2430
        %v2494 = vpop.xlane.xlu0 %2493
        %2495 = vadd.xlane.f32.xlu0 %v2432
        %v2496 = vpop.xlane.xlu0 %2495
        %2497 = vadd.xlane.f32.xlu0 %v2434
        %v2498 = vpop.xlane.xlu0 %2497
        %2499 = vadd.xlane.f32.xlu0 %v2436
        %v2500 = vpop.xlane.xlu0 %2499
        %2501 = vadd.xlane.f32.xlu0 %v2438
        %v2502 = vpop.xlane.xlu0 %2501
        %2503 = vadd.xlane.f32.xlu0 %v2440
        %v2504 = vpop.xlane.xlu0 %2503
        %2505 = vadd.xlane.f32.xlu0 %v2442
        %v2506 = vpop.xlane.xlu0 %2505
        %2507 = vadd.xlane.f32.xlu0 %v2444
        %v2508 = vpop.xlane.xlu0 %2507
        %2509 = vadd.xlane.f32.xlu0 %v2446
        %v2510 = vpop.xlane.xlu0 %2509
        %2511 = vadd.xlane.f32.xlu0 %v2448
        %v2512 = vpop.xlane.xlu0 %2511
        %2513 = vadd.xlane.f32.xlu0 %v2450
        %v2514 = vpop.xlane.xlu0 %2513
        %2515 = vadd.xlane.f32.xlu0 %v2452
        %v2516 = vpop.xlane.xlu0 %2515
        %2517 = vadd.xlane.f32.xlu0 %v2454
        %v2518 = vpop.xlane.xlu0 %2517
        %2519 = vadd.xlane.f32.xlu0 %v2456
        %v2520 = vpop.xlane.xlu0 %2519
        %2521 = vadd.xlane.f32.xlu0 %v2458
        %v2522 = vpop.xlane.xlu0 %2521
        %2523 = vadd.xlane.f32.xlu0 %v2460
        %v2524 = vpop.xlane.xlu0 %2523
        %2525 = vadd.xlane.f32.xlu0 %v2462
        %v2526 = vpop.xlane.xlu0 %2525
        %2527 = vadd.xlane.f32.xlu0 %v2464
        %v2528 = vpop.xlane.xlu0 %2527
        %2529 = vadd.xlane.f32.xlu0 %v2466
        %v2530 = vpop.xlane.xlu0 %2529
        %2531 = vadd.xlane.f32.xlu0 %v2468
        %v2532 = vpop.xlane.xlu0 %2531
        %2533 = vadd.xlane.f32.xlu0 %v2470
        %v2534 = vpop.xlane.xlu0 %2533
        %2535 = vadd.xlane.f32.xlu0 %v2472
        %v2536 = vpop.xlane.xlu0 %2535
        %2537 = vadd.xlane.f32.xlu0 %v2474
        %v2538 = vpop.xlane.xlu0 %2537
        %2539 = vadd.xlane.f32.xlu0 %v2476
        %v2540 = vpop.xlane.xlu0 %2539
        %2541 = vadd.xlane.f32.xlu0 %v2478
        %v2542 = vpop.xlane.xlu0 %2541
        %v2543 = vrcp.pop %v2480
        %v2544 = vrcp.pop %v2482
        %v2545 = vrcp.pop %v2484
        %v2546 = vrcp.pop %v2486
        %v2547 = vrcp.pop %v2488
        %v2548 = vrcp.pop %v2490
        %v2549 = vrcp.pop %v2492
        %v2550 = vrcp.pop %v2494
        %v2551 = vrcp.pop %v2496
        %v2552 = vrcp.pop %v2498
        %v2553 = vrcp.pop %v2500
        %v2554 = vrcp.pop %v2502
        %v2555 = vrcp.pop %v2504
        %v2556 = vrcp.pop %v2506
        %v2557 = vrcp.pop %v2508
        %v2558 = vrcp.pop %v2510
        %v2559 = vrcp.pop %v2512
        %v2560 = vrcp.pop %v2514
        %v2561 = vrcp.pop %v2516
        %v2562 = vrcp.pop %v2518
        %v2563 = vrcp.pop %v2520
        %v2564 = vrcp.pop %v2522
        %v2565 = vrcp.pop %v2524
        %v2566 = vrcp.pop %v2526
        %v2567 = vrcp.pop %v2528
        %v2568 = vrcp.pop %v2530
        %v2569 = vrcp.pop %v2532
        %v2570 = vrcp.pop %v2534
        %v2571 = vrcp.pop %v2536
        %v2572 = vrcp.pop %v2538
        %v2573 = vrcp.pop %v2540
        %v2574 = vrcp.pop %v2542
        %v2575 = vmul.f32 %v2416, %v2543
        %v2576 = vmul.f32 %v2418, %v2544
        %v2577 = vmul.f32 %v2420, %v2545
        %v2578 = vmul.f32 %v2422, %v2546
        %v2579 = vmul.f32 %v2424, %v2547
        %v2580 = vmul.f32 %v2426, %v2548
        %v2581 = vmul.f32 %v2428, %v2549
        %v2582 = vmul.f32 %v2430, %v2550
        %v2583 = vmul.f32 %v2432, %v2551
        %v2584 = vmul.f32 %v2434, %v2552
        %v2585 = vmul.f32 %v2436, %v2553
        %v2586 = vmul.f32 %v2438, %v2554
        %v2587 = vmul.f32 %v2440, %v2555
        %v2588 = vmul.f32 %v2442, %v2556
        %v2589 = vmul.f32 %v2444, %v2557
        %v2590 = vmul.f32 %v2446, %v2558
        %v2591 = vmul.f32 %v2448, %v2559
        %v2592 = vmul.f32 %v2450, %v2560
        %v2593 = vmul.f32 %v2452, %v2561
        %v2594 = vmul.f32 %v2454, %v2562
        %v2595 = vmul.f32 %v2456, %v2563
        %v2596 = vmul.f32 %v2458, %v2564
        %v2597 = vmul.f32 %v2460, %v2565
        %v2598 = vmul.f32 %v2462, %v2566
        %v2599 = vmul.f32 %v2464, %v2567
        %v2600 = vmul.f32 %v2466, %v2568
        %v2601 = vmul.f32 %v2468, %v2569
        %v2602 = vmul.f32 %v2470, %v2570
        %v2603 = vmul.f32 %v2472, %v2571
        %v2604 = vmul.f32 %v2474, %v2572
        %v2605 = vmul.f32 %v2476, %v2573
        %v2606 = vmul.f32 %v2478, %v2574
        %v2607 = vpack.c.bf16 %v2575, %v2575
        %v2608 = vpack.c.bf16 %v2576, %v2576
        %v2609 = vpack.c.bf16 %v2577, %v2577
        %v2610 = vpack.c.bf16 %v2578, %v2578
        %v2611 = vpack.c.bf16 %v2579, %v2579
        %v2612 = vpack.c.bf16 %v2580, %v2580
        %v2613 = vpack.c.bf16 %v2581, %v2581
        %v2614 = vpack.c.bf16 %v2582, %v2582
        %v2615 = vpack.c.bf16 %v2583, %v2583
        %v2616 = vpack.c.bf16 %v2584, %v2584
        %v2617 = vpack.c.bf16 %v2585, %v2585
        %v2618 = vpack.c.bf16 %v2586, %v2586
        %v2619 = vpack.c.bf16 %v2587, %v2587
        %v2620 = vpack.c.bf16 %v2588, %v2588
        %v2621 = vpack.c.bf16 %v2589, %v2589
        %v2622 = vpack.c.bf16 %v2590, %v2590
        %v2623 = vpack.c.bf16 %v2591, %v2591
        %v2624 = vpack.c.bf16 %v2592, %v2592
        %v2625 = vpack.c.bf16 %v2593, %v2593
        %v2626 = vpack.c.bf16 %v2594, %v2594
        %v2627 = vpack.c.bf16 %v2595, %v2595
        %v2628 = vpack.c.bf16 %v2596, %v2596
        %v2629 = vpack.c.bf16 %v2597, %v2597
        %v2630 = vpack.c.bf16 %v2598, %v2598
        %v2631 = vpack.c.bf16 %v2599, %v2599
        %v2632 = vpack.c.bf16 %v2600, %v2600
        %v2633 = vpack.c.bf16 %v2601, %v2601
        %v2634 = vpack.c.bf16 %v2602, %v2602
        %v2635 = vpack.c.bf16 %v2603, %v2603
        %v2636 = vpack.c.bf16 %v2604, %v2604
        %v2637 = vpack.c.bf16 %v2605, %v2605
        %v2638 = vpack.c.bf16 %v2606, %v2606
        %v2655 = vunpack.c.l.b16 %v2607
        %v2656 = vunpack.c.l.b16 %v2608
        %v2657 = vunpack.c.l.b16 %v2609
        %v2658 = vunpack.c.l.b16 %v2610
        %v2659 = vunpack.c.l.b16 %v2611
        %v2660 = vunpack.c.l.b16 %v2612
        %v2661 = vunpack.c.l.b16 %v2613
        %v2662 = vunpack.c.l.b16 %v2614
        %v2663 = vunpack.c.l.b16 %v2615
        %v2664 = vunpack.c.l.b16 %v2616
        %v2665 = vunpack.c.l.b16 %v2617
        %v2666 = vunpack.c.l.b16 %v2618
        %v2667 = vunpack.c.l.b16 %v2619
        %v2668 = vunpack.c.l.b16 %v2620
        %v2669 = vunpack.c.l.b16 %v2621
        %v2670 = vunpack.c.l.b16 %v2622
        %v2671 = vpack.c.b16 %v2656, %v2655
        %v2672 = vpack.c.b16 %v2658, %v2657
        %v2673 = vpack.c.b16 %v2660, %v2659
        %v2674 = vpack.c.b16 %v2662, %v2661
        %v2675 = vpack.c.b16 %v2664, %v2663
        %v2676 = vpack.c.b16 %v2666, %v2665
        %v2677 = vpack.c.b16 %v2668, %v2667
        %v2678 = vpack.c.b16 %v2670, %v2669
        %2687 = vrot.lane.b32.xlu0 %v1642, 96
        %v2688 = vpop.permute.xlu0 %2687
        %2689 = vrot.lane.b32.xlu0 %v1643, 96
        %v2690 = vpop.permute.xlu0 %2689
        %2691 = vrot.lane.b32.xlu0 %v1644, 96
        %v2692 = vpop.permute.xlu0 %2691
        %2693 = vrot.lane.b32.xlu0 %v1645, 96
        %v2694 = vpop.permute.xlu0 %2693
        %2695 = vrot.lane.b32.xlu0 %v1646, 96
        %v2696 = vpop.permute.xlu0 %2695
        %2697 = vrot.lane.b32.xlu0 %v1647, 96
        %v2698 = vpop.permute.xlu0 %2697
        %2699 = vrot.lane.b32.xlu0 %v1648, 96
        %v2700 = vpop.permute.xlu0 %2699
        %2701 = vrot.lane.b32.xlu0 %v1649, 96
        %v2702 = vpop.permute.xlu0 %2701
        %2711 = vmatpush.bf16.msra.mxu0 %v2702
        %2712 = vmatpush.bf16.msra.mxu0 %v2700
        %2713 = vmatpush.bf16.msra.mxu0 %v2698
        %2714 = vmatpush.bf16.msra.mxu0 %v2696
        %2715 = vmatpush.bf16.msra.mxu0 %v2694
        %2716 = vmatpush.bf16.msra.mxu0 %v2692
        %2717 = vmatpush.bf16.msra.mxu0 %v2690
        %2718 = vmatpush.bf16.msra.mxu0 %v2688
        %2719 = vmatmul.bf16.gmra.mxu0 %v2671
        %v2720 = vpop.f32.mrf.mxu0
        %v2721 = vadd.f32 0.0, %v2720
        %v2722 = vpop.f32.mrf.mxu0
        %v2723 = vadd.f32 0.0, %v2722
        %2724 = vmatmul.bf16.gmra.mxu0 %v2672
        %v2725 = vpop.f32.mrf.mxu0
        %v2726 = vadd.f32 0.0, %v2725
        %v2727 = vpop.f32.mrf.mxu0
        %v2728 = vadd.f32 0.0, %v2727
        %2729 = vmatmul.bf16.gmra.mxu0 %v2673
        %v2730 = vpop.f32.mrf.mxu0
        %v2731 = vadd.f32 0.0, %v2730
        %v2732 = vpop.f32.mrf.mxu0
        %v2733 = vadd.f32 0.0, %v2732
        %2734 = vmatmul.bf16.gmra.mxu0 %v2674
        %v2735 = vpop.f32.mrf.mxu0
        %v2736 = vadd.f32 0.0, %v2735
        %v2737 = vpop.f32.mrf.mxu0
        %v2738 = vadd.f32 0.0, %v2737
        %2739 = vmatmul.bf16.gmra.mxu0 %v2675
        %v2740 = vpop.f32.mrf.mxu0
        %v2741 = vadd.f32 0.0, %v2740
        %v2742 = vpop.f32.mrf.mxu0
        %v2743 = vadd.f32 0.0, %v2742
        %2744 = vmatmul.bf16.gmra.mxu0 %v2676
        %v2745 = vpop.f32.mrf.mxu0
        %v2746 = vadd.f32 0.0, %v2745
        %v2747 = vpop.f32.mrf.mxu0
        %v2748 = vadd.f32 0.0, %v2747
        %2749 = vmatmul.bf16.gmra.mxu0 %v2677
        %v2750 = vpop.f32.mrf.mxu0
        %v2751 = vadd.f32 0.0, %v2750
        %v2752 = vpop.f32.mrf.mxu0
        %v2753 = vadd.f32 0.0, %v2752
        %2754 = vmatmul.bf16.gmra.mxu0 %v2678
        %v2755 = vpop.f32.mrf.mxu0
        %v2756 = vadd.f32 0.0, %v2755
        %v2757 = vpop.f32.mrf.mxu0
        %v2758 = vadd.f32 0.0, %v2757
        %2759 = vdwg.mxu0
        %v2776 = vunpack.c.l.b16 %v2623
        %v2777 = vunpack.c.l.b16 %v2624
        %v2778 = vunpack.c.l.b16 %v2625
        %v2779 = vunpack.c.l.b16 %v2626
        %v2780 = vunpack.c.l.b16 %v2627
        %v2781 = vunpack.c.l.b16 %v2628
        %v2782 = vunpack.c.l.b16 %v2629
        %v2783 = vunpack.c.l.b16 %v2630
        %v2784 = vunpack.c.l.b16 %v2631
        %v2785 = vunpack.c.l.b16 %v2632
        %v2786 = vunpack.c.l.b16 %v2633
        %v2787 = vunpack.c.l.b16 %v2634
        %v2788 = vunpack.c.l.b16 %v2635
        %v2789 = vunpack.c.l.b16 %v2636
        %v2790 = vunpack.c.l.b16 %v2637
        %v2791 = vunpack.c.l.b16 %v2638
        %v2792 = vpack.c.b16 %v2777, %v2776
        %v2793 = vpack.c.b16 %v2779, %v2778
        %v2794 = vpack.c.b16 %v2781, %v2780
        %v2795 = vpack.c.b16 %v2783, %v2782
        %v2796 = vpack.c.b16 %v2785, %v2784
        %v2797 = vpack.c.b16 %v2787, %v2786
        %v2798 = vpack.c.b16 %v2789, %v2788
        %v2799 = vpack.c.b16 %v2791, %v2790
        %2808 = vrot.lane.b32.xlu0 %v1787, 96
        %v2809 = vpop.permute.xlu0 %2808
        %2810 = vrot.lane.b32.xlu0 %v1788, 96
        %v2811 = vpop.permute.xlu0 %2810
        %2812 = vrot.lane.b32.xlu0 %v1789, 96
        %v2813 = vpop.permute.xlu0 %2812
        %2814 = vrot.lane.b32.xlu0 %v1790, 96
        %v2815 = vpop.permute.xlu0 %2814
        %2816 = vrot.lane.b32.xlu0 %v1791, 96
        %v2817 = vpop.permute.xlu0 %2816
        %2818 = vrot.lane.b32.xlu0 %v1792, 96
        %v2819 = vpop.permute.xlu0 %2818
        %2820 = vrot.lane.b32.xlu0 %v1793, 96
        %v2821 = vpop.permute.xlu0 %2820
        %2822 = vrot.lane.b32.xlu0 %v1794, 96
        %v2823 = vpop.permute.xlu0 %2822
        %2832 = vmatpush.bf16.msra.mxu0 %v2823
        %2833 = vmatpush.bf16.msra.mxu0 %v2821
        %2834 = vmatpush.bf16.msra.mxu0 %v2819
        %2835 = vmatpush.bf16.msra.mxu0 %v2817
        %2836 = vmatpush.bf16.msra.mxu0 %v2815
        %2837 = vmatpush.bf16.msra.mxu0 %v2813
        %2838 = vmatpush.bf16.msra.mxu0 %v2811
        %2839 = vmatpush.bf16.msra.mxu0 %v2809
        %2840 = vmatmul.bf16.gmra.mxu0 %v2792
        %v2841 = vpop.f32.mrf.mxu0
        %v2842 = vadd.f32 0.0, %v2841
        %v2843 = vpop.f32.mrf.mxu0
        %v2844 = vadd.f32 0.0, %v2843
        %2845 = vmatmul.bf16.gmra.mxu0 %v2793
        %v2846 = vpop.f32.mrf.mxu0
        %v2847 = vadd.f32 0.0, %v2846
        %v2848 = vpop.f32.mrf.mxu0
        %v2849 = vadd.f32 0.0, %v2848
        %2850 = vmatmul.bf16.gmra.mxu0 %v2794
        %v2851 = vpop.f32.mrf.mxu0
        %v2852 = vadd.f32 0.0, %v2851
        %v2853 = vpop.f32.mrf.mxu0
        %v2854 = vadd.f32 0.0, %v2853
        %2855 = vmatmul.bf16.gmra.mxu0 %v2795
        %v2856 = vpop.f32.mrf.mxu0
        %v2857 = vadd.f32 0.0, %v2856
        %v2858 = vpop.f32.mrf.mxu0
        %v2859 = vadd.f32 0.0, %v2858
        %2860 = vmatmul.bf16.gmra.mxu0 %v2796
        %v2861 = vpop.f32.mrf.mxu0
        %v2862 = vadd.f32 0.0, %v2861
        %v2863 = vpop.f32.mrf.mxu0
        %v2864 = vadd.f32 0.0, %v2863
        %2865 = vmatmul.bf16.gmra.mxu0 %v2797
        %v2866 = vpop.f32.mrf.mxu0
        %v2867 = vadd.f32 0.0, %v2866
        %v2868 = vpop.f32.mrf.mxu0
        %v2869 = vadd.f32 0.0, %v2868
        %2870 = vmatmul.bf16.gmra.mxu0 %v2798
        %v2871 = vpop.f32.mrf.mxu0
        %v2872 = vadd.f32 0.0, %v2871
        %v2873 = vpop.f32.mrf.mxu0
        %v2874 = vadd.f32 0.0, %v2873
        %2875 = vmatmul.bf16.gmra.mxu0 %v2799
        %v2876 = vpop.f32.mrf.mxu0
        %v2877 = vadd.f32 0.0, %v2876
        %v2878 = vpop.f32.mrf.mxu0
        %v2879 = vadd.f32 0.0, %v2878
        %2880 = vdwg.mxu0
        %v2881 = vpack.c.bf16 %v2721, %v2721
        %v2882 = vpack.c.bf16 %v2723, %v2723
        %v2883 = vpack.c.bf16 %v2726, %v2726
        %v2884 = vpack.c.bf16 %v2728, %v2728
        %v2885 = vpack.c.bf16 %v2731, %v2731
        %v2886 = vpack.c.bf16 %v2733, %v2733
        %v2887 = vpack.c.bf16 %v2736, %v2736
        %v2888 = vpack.c.bf16 %v2738, %v2738
        %v2889 = vpack.c.bf16 %v2741, %v2741
        %v2890 = vpack.c.bf16 %v2743, %v2743
        %v2891 = vpack.c.bf16 %v2746, %v2746
        %v2892 = vpack.c.bf16 %v2748, %v2748
        %v2893 = vpack.c.bf16 %v2751, %v2751
        %v2894 = vpack.c.bf16 %v2753, %v2753
        %v2895 = vpack.c.bf16 %v2756, %v2756
        %v2896 = vpack.c.bf16 %v2758, %v2758
        %v2897 = vpack.c.bf16 %v2842, %v2842
        %v2898 = vpack.c.bf16 %v2844, %v2844
        %v2899 = vpack.c.bf16 %v2847, %v2847
        %v2900 = vpack.c.bf16 %v2849, %v2849
        %v2901 = vpack.c.bf16 %v2852, %v2852
        %v2902 = vpack.c.bf16 %v2854, %v2854
        %v2903 = vpack.c.bf16 %v2857, %v2857
        %v2904 = vpack.c.bf16 %v2859, %v2859
        %v2905 = vpack.c.bf16 %v2862, %v2862
        %v2906 = vpack.c.bf16 %v2864, %v2864
        %v2907 = vpack.c.bf16 %v2867, %v2867
        %v2908 = vpack.c.bf16 %v2869, %v2869
        %v2909 = vpack.c.bf16 %v2872, %v2872
        %v2910 = vpack.c.bf16 %v2874, %v2874
        %v2911 = vpack.c.bf16 %v2877, %v2877
        %v2912 = vpack.c.bf16 %v2879, %v2879
        %2945 = vrot.lane.b32.xlu0 %v2881, 32
        %v2946 = vpop.permute.xlu0 %2945
        %2947 = vrot.lane.b32.xlu0 %v2882, 32
        %v2948 = vpop.permute.xlu0 %2947
        %2949 = vrot.lane.b32.xlu0 %v2883, 32
        %v2950 = vpop.permute.xlu0 %2949
        %2951 = vrot.lane.b32.xlu0 %v2884, 32
        %v2952 = vpop.permute.xlu0 %2951
        %2953 = vrot.lane.b32.xlu0 %v2885, 32
        %v2954 = vpop.permute.xlu0 %2953
        %2955 = vrot.lane.b32.xlu0 %v2886, 32
        %v2956 = vpop.permute.xlu0 %2955
        %2957 = vrot.lane.b32.xlu0 %v2887, 32
        %v2958 = vpop.permute.xlu0 %2957
        %2959 = vrot.lane.b32.xlu0 %v2888, 32
        %v2960 = vpop.permute.xlu0 %2959
        %2961 = vrot.lane.b32.xlu0 %v2889, 32
        %v2962 = vpop.permute.xlu0 %2961
        %2963 = vrot.lane.b32.xlu0 %v2890, 32
        %v2964 = vpop.permute.xlu0 %2963
        %2965 = vrot.lane.b32.xlu0 %v2891, 32
        %v2966 = vpop.permute.xlu0 %2965
        %2967 = vrot.lane.b32.xlu0 %v2892, 32
        %v2968 = vpop.permute.xlu0 %2967
        %2969 = vrot.lane.b32.xlu0 %v2893, 32
        %v2970 = vpop.permute.xlu0 %2969
        %2971 = vrot.lane.b32.xlu0 %v2894, 32
        %v2972 = vpop.permute.xlu0 %2971
        %2973 = vrot.lane.b32.xlu0 %v2895, 32
        %v2974 = vpop.permute.xlu0 %2973
        %2975 = vrot.lane.b32.xlu0 %v2896, 32
        %v2976 = vpop.permute.xlu0 %2975
        %2977 = vrot.lane.b32.xlu0 %v2897, 32
        %v2978 = vpop.permute.xlu0 %2977
        %2979 = vrot.lane.b32.xlu0 %v2898, 32
        %v2980 = vpop.permute.xlu0 %2979
        %2981 = vrot.lane.b32.xlu0 %v2899, 32
        %v2982 = vpop.permute.xlu0 %2981
        %2983 = vrot.lane.b32.xlu0 %v2900, 32
        %v2984 = vpop.permute.xlu0 %2983
        %2985 = vrot.lane.b32.xlu0 %v2901, 32
        %v2986 = vpop.permute.xlu0 %2985
        %2987 = vrot.lane.b32.xlu0 %v2902, 32
        %v2988 = vpop.permute.xlu0 %2987
        %2989 = vrot.lane.b32.xlu0 %v2903, 32
        %v2990 = vpop.permute.xlu0 %2989
        %2991 = vrot.lane.b32.xlu0 %v2904, 32
        %v2992 = vpop.permute.xlu0 %2991
        %2993 = vrot.lane.b32.xlu0 %v2905, 32
        %v2994 = vpop.permute.xlu0 %2993
        %2995 = vrot.lane.b32.xlu0 %v2906, 32
        %v2996 = vpop.permute.xlu0 %2995
        %2997 = vrot.lane.b32.xlu0 %v2907, 32
        %v2998 = vpop.permute.xlu0 %2997
        %2999 = vrot.lane.b32.xlu0 %v2908, 32
        %v3000 = vpop.permute.xlu0 %2999
        %3001 = vrot.lane.b32.xlu0 %v2909, 32
        %v3002 = vpop.permute.xlu0 %3001
        %3003 = vrot.lane.b32.xlu0 %v2910, 32
        %v3004 = vpop.permute.xlu0 %3003
        %3005 = vrot.lane.b32.xlu0 %v2911, 32
        %v3006 = vpop.permute.xlu0 %3005
        %3007 = vrot.lane.b32.xlu0 %v2912, 32
        %v3008 = vpop.permute.xlu0 %3007
        %vm3041 = vcmask 519424
        %3042 = vst.msk [vmem:[#allocation2] sm:$0xf] %vm3041, %v2946
        %3043 = vst.msk [vmem:[#allocation2 + $0x4] sm:$0xf] %vm3041, %v2948
        %3044 = vst.msk [vmem:[#allocation2 + $0x8] sm:$0xf] %vm3041, %v2950
        %3045 = vst.msk [vmem:[#allocation2 + $0xc] sm:$0xf] %vm3041, %v2952
        %3046 = vst.msk [vmem:[#allocation2 + $0x10] sm:$0xf] %vm3041, %v2954
        %3047 = vst.msk [vmem:[#allocation2 + $0x14] sm:$0xf] %vm3041, %v2956
        %3048 = vst.msk [vmem:[#allocation2 + $0x18] sm:$0xf] %vm3041, %v2958
        %3049 = vst.msk [vmem:[#allocation2 + $0x1c] sm:$0xf] %vm3041, %v2960
        %3050 = vst.msk [vmem:[#allocation2 + $0x20] sm:$0xf] %vm3041, %v2962
        %3051 = vst.msk [vmem:[#allocation2 + $0x24] sm:$0xf] %vm3041, %v2964
        %3052 = vst.msk [vmem:[#allocation2 + $0x28] sm:$0xf] %vm3041, %v2966
        %3053 = vst.msk [vmem:[#allocation2 + $0x2c] sm:$0xf] %vm3041, %v2968
        %3054 = vst.msk [vmem:[#allocation2 + $0x30] sm:$0xf] %vm3041, %v2970
        %3055 = vst.msk [vmem:[#allocation2 + $0x34] sm:$0xf] %vm3041, %v2972
        %3056 = vst.msk [vmem:[#allocation2 + $0x38] sm:$0xf] %vm3041, %v2974
        %3057 = vst.msk [vmem:[#allocation2 + $0x3c] sm:$0xf] %vm3041, %v2976
        %3058 = vst.msk [vmem:[#allocation2 + $0x40] sm:$0xf] %vm3041, %v2978
        %3059 = vst.msk [vmem:[#allocation2 + $0x44] sm:$0xf] %vm3041, %v2980
        %3060 = vst.msk [vmem:[#allocation2 + $0x48] sm:$0xf] %vm3041, %v2982
        %3061 = vst.msk [vmem:[#allocation2 + $0x4c] sm:$0xf] %vm3041, %v2984
        %3062 = vst.msk [vmem:[#allocation2 + $0x50] sm:$0xf] %vm3041, %v2986
        %3063 = vst.msk [vmem:[#allocation2 + $0x54] sm:$0xf] %vm3041, %v2988
        %3064 = vst.msk [vmem:[#allocation2 + $0x58] sm:$0xf] %vm3041, %v2990
        %3065 = vst.msk [vmem:[#allocation2 + $0x5c] sm:$0xf] %vm3041, %v2992
        %3066 = vst.msk [vmem:[#allocation2 + $0x60] sm:$0xf] %vm3041, %v2994
        %3067 = vst.msk [vmem:[#allocation2 + $0x64] sm:$0xf] %vm3041, %v2996
        %3068 = vst.msk [vmem:[#allocation2 + $0x68] sm:$0xf] %vm3041, %v2998
        %3069 = vst.msk [vmem:[#allocation2 + $0x6c] sm:$0xf] %vm3041, %v3000
        %3070 = vst.msk [vmem:[#allocation2 + $0x70] sm:$0xf] %vm3041, %v3002
        %3071 = vst.msk [vmem:[#allocation2 + $0x74] sm:$0xf] %vm3041, %v3004
        %3072 = vst.msk [vmem:[#allocation2 + $0x78] sm:$0xf] %vm3041, %v3006
        %3073 = vst.msk [vmem:[#allocation2 + $0x7c] sm:$0xf] %vm3041, %v3008
        %3074 = vrot.lane.b32.xlu0 %v724, 64
        %v3075 = vpop.permute.xlu0 %3074
        %3076 = vrot.lane.b32.xlu0 %v726, 64
        %v3077 = vpop.permute.xlu0 %3076
        %3078 = vrot.lane.b32.xlu0 %v728, 64
        %v3079 = vpop.permute.xlu0 %3078
        %3080 = vrot.lane.b32.xlu0 %v730, 64
        %v3081 = vpop.permute.xlu0 %3080
        %3082 = vrot.lane.b32.xlu0 %v732, 64
        %v3083 = vpop.permute.xlu0 %3082
        %3084 = vrot.lane.b32.xlu0 %v734, 64
        %v3085 = vpop.permute.xlu0 %3084
        %3086 = vrot.lane.b32.xlu0 %v736, 64
        %v3087 = vpop.permute.xlu0 %3086
        %3088 = vrot.lane.b32.xlu0 %v738, 64
        %v3089 = vpop.permute.xlu0 %3088
        %3090 = vrot.lane.b32.xlu0 %v740, 64
        %v3091 = vpop.permute.xlu0 %3090
        %3092 = vrot.lane.b32.xlu0 %v742, 64
        %v3093 = vpop.permute.xlu0 %3092
        %3094 = vrot.lane.b32.xlu0 %v744, 64
        %v3095 = vpop.permute.xlu0 %3094
        %3096 = vrot.lane.b32.xlu0 %v746, 64
        %v3097 = vpop.permute.xlu0 %3096
        %3098 = vrot.lane.b32.xlu0 %v748, 64
        %v3099 = vpop.permute.xlu0 %3098
        %3100 = vrot.lane.b32.xlu0 %v750, 64
        %v3101 = vpop.permute.xlu0 %3100
        %3102 = vrot.lane.b32.xlu0 %v752, 64
        %v3103 = vpop.permute.xlu0 %3102
        %3104 = vrot.lane.b32.xlu0 %v754, 64
        %v3105 = vpop.permute.xlu0 %3104
        %3106 = vrot.lane.b32.xlu0 %v756, 64
        %v3107 = vpop.permute.xlu0 %3106
        %3108 = vrot.lane.b32.xlu0 %v758, 64
        %v3109 = vpop.permute.xlu0 %3108
        %3110 = vrot.lane.b32.xlu0 %v760, 64
        %v3111 = vpop.permute.xlu0 %3110
        %3112 = vrot.lane.b32.xlu0 %v762, 64
        %v3113 = vpop.permute.xlu0 %3112
        %3114 = vrot.lane.b32.xlu0 %v764, 64
        %v3115 = vpop.permute.xlu0 %3114
        %3116 = vrot.lane.b32.xlu0 %v766, 64
        %v3117 = vpop.permute.xlu0 %3116
        %3118 = vrot.lane.b32.xlu0 %v768, 64
        %v3119 = vpop.permute.xlu0 %3118
        %3120 = vrot.lane.b32.xlu0 %v770, 64
        %v3121 = vpop.permute.xlu0 %3120
        %3122 = vrot.lane.b32.xlu0 %v772, 64
        %v3123 = vpop.permute.xlu0 %3122
        %3124 = vrot.lane.b32.xlu0 %v774, 64
        %v3125 = vpop.permute.xlu0 %3124
        %3126 = vrot.lane.b32.xlu0 %v776, 64
        %v3127 = vpop.permute.xlu0 %3126
        %3128 = vrot.lane.b32.xlu0 %v778, 64
        %v3129 = vpop.permute.xlu0 %3128
        %3130 = vrot.lane.b32.xlu0 %v780, 64
        %v3131 = vpop.permute.xlu0 %3130
        %3132 = vrot.lane.b32.xlu0 %v782, 64
        %v3133 = vpop.permute.xlu0 %3132
        %3134 = vrot.lane.b32.xlu0 %v784, 64
        %v3135 = vpop.permute.xlu0 %3134
        %3136 = vrot.lane.b32.xlu0 %v786, 64
        %v3137 = vpop.permute.xlu0 %3136
        %v3138 = vrot.slane %v3075, 4
        %v3139 = vrot.slane %v3077, 4
        %v3140 = vrot.slane %v3079, 4
        %v3141 = vrot.slane %v3081, 4
        %v3142 = vrot.slane %v3083, 4
        %v3143 = vrot.slane %v3085, 4
        %v3144 = vrot.slane %v3087, 4
        %v3145 = vrot.slane %v3089, 4
        %v3146 = vrot.slane %v3091, 4
        %v3147 = vrot.slane %v3093, 4
        %v3148 = vrot.slane %v3095, 4
        %v3149 = vrot.slane %v3097, 4
        %v3150 = vrot.slane %v3099, 4
        %v3151 = vrot.slane %v3101, 4
        %v3152 = vrot.slane %v3103, 4
        %v3153 = vrot.slane %v3105, 4
        %v3154 = vrot.slane %v3107, 4
        %v3155 = vrot.slane %v3109, 4
        %v3156 = vrot.slane %v3111, 4
        %v3157 = vrot.slane %v3113, 4
        %v3158 = vrot.slane %v3115, 4
        %v3159 = vrot.slane %v3117, 4
        %v3160 = vrot.slane %v3119, 4
        %v3161 = vrot.slane %v3121, 4
        %v3162 = vrot.slane %v3123, 4
        %v3163 = vrot.slane %v3125, 4
        %v3164 = vrot.slane %v3127, 4
        %v3165 = vrot.slane %v3129, 4
        %v3166 = vrot.slane %v3131, 4
        %v3167 = vrot.slane %v3133, 4
        %v3168 = vrot.slane %v3135, 4
        %v3169 = vrot.slane %v3137, 4
        %3170 = vrot.lane.b32.xlu0 %v903, 64
        %v3171 = vpop.permute.xlu0 %3170
        %3172 = vrot.lane.b32.xlu0 %v904, 64
        %v3173 = vpop.permute.xlu0 %3172
        %3174 = vrot.lane.b32.xlu0 %v905, 64
        %v3175 = vpop.permute.xlu0 %3174
        %3176 = vrot.lane.b32.xlu0 %v906, 64
        %v3177 = vpop.permute.xlu0 %3176
        %3178 = vrot.lane.b32.xlu0 %v907, 64
        %v3179 = vpop.permute.xlu0 %3178
        %3180 = vrot.lane.b32.xlu0 %v908, 64
        %v3181 = vpop.permute.xlu0 %3180
        %3182 = vrot.lane.b32.xlu0 %v909, 64
        %v3183 = vpop.permute.xlu0 %3182
        %3184 = vrot.lane.b32.xlu0 %v910, 64
        %v3185 = vpop.permute.xlu0 %3184
        %v3186 = vunpack.c.l.b16 %v3138
        %v3187 = vunpack.c.l.b16 %v3139
        %v3188 = vunpack.c.l.b16 %v3140
        %v3189 = vunpack.c.l.b16 %v3141
        %v3190 = vunpack.c.l.b16 %v3142
        %v3191 = vunpack.c.l.b16 %v3143
        %v3192 = vunpack.c.l.b16 %v3144
        %v3193 = vunpack.c.l.b16 %v3145
        %v3194 = vunpack.c.l.b16 %v3146
        %v3195 = vunpack.c.l.b16 %v3147
        %v3196 = vunpack.c.l.b16 %v3148
        %v3197 = vunpack.c.l.b16 %v3149
        %v3198 = vunpack.c.l.b16 %v3150
        %v3199 = vunpack.c.l.b16 %v3151
        %v3200 = vunpack.c.l.b16 %v3152
        %v3201 = vunpack.c.l.b16 %v3153
        %v3202 = vpack.c.b16 %v3187, %v3186
        %v3203 = vpack.c.b16 %v3189, %v3188
        %v3204 = vpack.c.b16 %v3191, %v3190
        %v3205 = vpack.c.b16 %v3193, %v3192
        %v3206 = vpack.c.b16 %v3195, %v3194
        %v3207 = vpack.c.b16 %v3197, %v3196
        %v3208 = vpack.c.b16 %v3199, %v3198
        %v3209 = vpack.c.b16 %v3201, %v3200
        %v3211 = vsel %vm935, %v3171, 0
        %v3214 = vsel %vm935, %v3173, 0
        %v3217 = vsel %vm935, %v3175, 0
        %v3220 = vsel %vm935, %v3177, 0
        %v3223 = vsel %vm935, %v3179, 0
        %v3226 = vsel %vm935, %v3181, 0
        %v3229 = vsel %vm935, %v3183, 0
        %v3232 = vsel %vm935, %v3185, 0
        %v3235 = vsel %vm935, %v3202, 0
        %v3238 = vsel %vm935, %v3203, 0
        %v3241 = vsel %vm935, %v3204, 0
        %v3244 = vsel %vm935, %v3205, 0
        %v3247 = vsel %vm935, %v3206, 0
        %v3250 = vsel %vm935, %v3207, 0
        %v3253 = vsel %vm935, %v3208, 0
        %v3256 = vsel %vm935, %v3209, 0
        %3258 = vmatpush.bf16.xpose.msra.mxu0 %v3256
        %3259 = vmatpush.bf16.xpose.msra.mxu0 %v3253
        %3260 = vmatpush.bf16.xpose.msra.mxu0 %v3250
        %3261 = vmatpush.bf16.xpose.msra.mxu0 %v3247
        %3262 = vmatpush.bf16.xpose.msra.mxu0 %v3244
        %3263 = vmatpush.bf16.xpose.msra.mxu0 %v3241
        %3264 = vmatpush.bf16.xpose.msra.mxu0 %v3238
        %3265 = vmatpush.bf16.xpose.msra.mxu0 %v3235
        %3266 = vmatmul.bf16.gmra.mxu0 %v3211
        %v3267 = vpop.f32.mrf.mxu0
        %v3268 = vadd.f32 0.0, %v3267
        %v3269 = vpop.f32.mrf.mxu0
        %v3270 = vadd.f32 0.0, %v3269
        %3271 = vmatmul.bf16.gmra.mxu0 %v3214
        %v3272 = vpop.f32.mrf.mxu0
        %v3273 = vadd.f32 0.0, %v3272
        %v3274 = vpop.f32.mrf.mxu0
        %v3275 = vadd.f32 0.0, %v3274
        %3276 = vmatmul.bf16.gmra.mxu0 %v3217
        %v3277 = vpop.f32.mrf.mxu0
        %v3278 = vadd.f32 0.0, %v3277
        %v3279 = vpop.f32.mrf.mxu0
        %v3280 = vadd.f32 0.0, %v3279
        %3281 = vmatmul.bf16.gmra.mxu0 %v3220
        %v3282 = vpop.f32.mrf.mxu0
        %v3283 = vadd.f32 0.0, %v3282
        %v3284 = vpop.f32.mrf.mxu0
        %v3285 = vadd.f32 0.0, %v3284
        %3286 = vmatmul.bf16.gmra.mxu0 %v3223
        %v3287 = vpop.f32.mrf.mxu0
        %v3288 = vadd.f32 0.0, %v3287
        %v3289 = vpop.f32.mrf.mxu0
        %v3290 = vadd.f32 0.0, %v3289
        %3291 = vmatmul.bf16.gmra.mxu0 %v3226
        %v3292 = vpop.f32.mrf.mxu0
        %v3293 = vadd.f32 0.0, %v3292
        %v3294 = vpop.f32.mrf.mxu0
        %v3295 = vadd.f32 0.0, %v3294
        %3296 = vmatmul.bf16.gmra.mxu0 %v3229
        %v3297 = vpop.f32.mrf.mxu0
        %v3298 = vadd.f32 0.0, %v3297
        %v3299 = vpop.f32.mrf.mxu0
        %v3300 = vadd.f32 0.0, %v3299
        %3301 = vmatmul.bf16.gmra.mxu0 %v3232
        %v3302 = vpop.f32.mrf.mxu0
        %v3303 = vadd.f32 0.0, %v3302
        %v3304 = vpop.f32.mrf.mxu0
        %v3305 = vadd.f32 0.0, %v3304
        %3306 = vdwg.mxu0
        %3307 = vrot.lane.b32.xlu0 %v1049, 64
        %v3308 = vpop.permute.xlu0 %3307
        %3309 = vrot.lane.b32.xlu0 %v1050, 64
        %v3310 = vpop.permute.xlu0 %3309
        %3311 = vrot.lane.b32.xlu0 %v1051, 64
        %v3312 = vpop.permute.xlu0 %3311
        %3313 = vrot.lane.b32.xlu0 %v1052, 64
        %v3314 = vpop.permute.xlu0 %3313
        %3315 = vrot.lane.b32.xlu0 %v1053, 64
        %v3316 = vpop.permute.xlu0 %3315
        %3317 = vrot.lane.b32.xlu0 %v1054, 64
        %v3318 = vpop.permute.xlu0 %3317
        %3319 = vrot.lane.b32.xlu0 %v1055, 64
        %v3320 = vpop.permute.xlu0 %3319
        %3321 = vrot.lane.b32.xlu0 %v1056, 64
        %v3322 = vpop.permute.xlu0 %3321
        %v3323 = vunpack.c.l.b16 %v3154
        %v3324 = vunpack.c.l.b16 %v3155
        %v3325 = vunpack.c.l.b16 %v3156
        %v3326 = vunpack.c.l.b16 %v3157
        %v3327 = vunpack.c.l.b16 %v3158
        %v3328 = vunpack.c.l.b16 %v3159
        %v3329 = vunpack.c.l.b16 %v3160
        %v3330 = vunpack.c.l.b16 %v3161
        %v3331 = vunpack.c.l.b16 %v3162
        %v3332 = vunpack.c.l.b16 %v3163
        %v3333 = vunpack.c.l.b16 %v3164
        %v3334 = vunpack.c.l.b16 %v3165
        %v3335 = vunpack.c.l.b16 %v3166
        %v3336 = vunpack.c.l.b16 %v3167
        %v3337 = vunpack.c.l.b16 %v3168
        %v3338 = vunpack.c.l.b16 %v3169
        %v3339 = vpack.c.b16 %v3324, %v3323
        %v3340 = vpack.c.b16 %v3326, %v3325
        %v3341 = vpack.c.b16 %v3328, %v3327
        %v3342 = vpack.c.b16 %v3330, %v3329
        %v3343 = vpack.c.b16 %v3332, %v3331
        %v3344 = vpack.c.b16 %v3334, %v3333
        %v3345 = vpack.c.b16 %v3336, %v3335
        %v3346 = vpack.c.b16 %v3338, %v3337
        %v3348 = vsel %vm935, %v3308, 0
        %v3351 = vsel %vm935, %v3310, 0
        %v3354 = vsel %vm935, %v3312, 0
        %v3357 = vsel %vm935, %v3314, 0
        %v3360 = vsel %vm935, %v3316, 0
        %v3363 = vsel %vm935, %v3318, 0
        %v3366 = vsel %vm935, %v3320, 0
        %v3369 = vsel %vm935, %v3322, 0
        %v3372 = vsel %vm935, %v3339, 0
        %v3375 = vsel %vm935, %v3340, 0
        %v3378 = vsel %vm935, %v3341, 0
        %v3381 = vsel %vm935, %v3342, 0
        %v3384 = vsel %vm935, %v3343, 0
        %v3387 = vsel %vm935, %v3344, 0
        %v3390 = vsel %vm935, %v3345, 0
        %v3393 = vsel %vm935, %v3346, 0
        %3395 = vmatpush.bf16.xpose.msra.mxu0 %v3393
        %3396 = vmatpush.bf16.xpose.msra.mxu0 %v3390
        %3397 = vmatpush.bf16.xpose.msra.mxu0 %v3387
        %3398 = vmatpush.bf16.xpose.msra.mxu0 %v3384
        %3399 = vmatpush.bf16.xpose.msra.mxu0 %v3381
        %3400 = vmatpush.bf16.xpose.msra.mxu0 %v3378
        %3401 = vmatpush.bf16.xpose.msra.mxu0 %v3375
        %3402 = vmatpush.bf16.xpose.msra.mxu0 %v3372
        %3403 = vmatmul.bf16.gmra.mxu0 %v3348
        %v3404 = vpop.f32.mrf.mxu0
        %v3405 = vadd.f32 0.0, %v3404
        %v3406 = vpop.f32.mrf.mxu0
        %v3407 = vadd.f32 0.0, %v3406
        %3408 = vmatmul.bf16.gmra.mxu0 %v3351
        %v3409 = vpop.f32.mrf.mxu0
        %v3410 = vadd.f32 0.0, %v3409
        %v3411 = vpop.f32.mrf.mxu0
        %v3412 = vadd.f32 0.0, %v3411
        %3413 = vmatmul.bf16.gmra.mxu0 %v3354
        %v3414 = vpop.f32.mrf.mxu0
        %v3415 = vadd.f32 0.0, %v3414
        %v3416 = vpop.f32.mrf.mxu0
        %v3417 = vadd.f32 0.0, %v3416
        %3418 = vmatmul.bf16.gmra.mxu0 %v3357
        %v3419 = vpop.f32.mrf.mxu0
        %v3420 = vadd.f32 0.0, %v3419
        %v3421 = vpop.f32.mrf.mxu0
        %v3422 = vadd.f32 0.0, %v3421
        %3423 = vmatmul.bf16.gmra.mxu0 %v3360
        %v3424 = vpop.f32.mrf.mxu0
        %v3425 = vadd.f32 0.0, %v3424
        %v3426 = vpop.f32.mrf.mxu0
        %v3427 = vadd.f32 0.0, %v3426
        %3428 = vmatmul.bf16.gmra.mxu0 %v3363
        %v3429 = vpop.f32.mrf.mxu0
        %v3430 = vadd.f32 0.0, %v3429
        %v3431 = vpop.f32.mrf.mxu0
        %v3432 = vadd.f32 0.0, %v3431
        %3433 = vmatmul.bf16.gmra.mxu0 %v3366
        %v3434 = vpop.f32.mrf.mxu0
        %v3435 = vadd.f32 0.0, %v3434
        %v3436 = vpop.f32.mrf.mxu0
        %v3437 = vadd.f32 0.0, %v3436
        %3438 = vmatmul.bf16.gmra.mxu0 %v3369
        %v3439 = vpop.f32.mrf.mxu0
        %v3440 = vadd.f32 0.0, %v3439
        %v3441 = vpop.f32.mrf.mxu0
        %v3442 = vadd.f32 0.0, %v3441
        %3443 = vdwg.mxu0
        %v3444 = vsel %vm1194, %v3268, -inf
        %v3445 = vsel %vm1195, %v3270, -inf
        %v3446 = vsel %vm1196, %v3273, -inf
        %v3447 = vsel %vm1197, %v3275, -inf
        %v3448 = vsel %vm1198, %v3278, -inf
        %v3449 = vsel %vm1199, %v3280, -inf
        %v3450 = vsel %vm1200, %v3283, -inf
        %v3451 = vsel %vm1201, %v3285, -inf
        %v3452 = vsel %vm1202, %v3288, -inf
        %v3453 = vsel %vm1203, %v3290, -inf
        %v3454 = vsel %vm1204, %v3293, -inf
        %v3455 = vsel %vm1205, %v3295, -inf
        %v3456 = vsel %vm1206, %v3298, -inf
        %v3457 = vsel %vm1207, %v3300, -inf
        %v3458 = vsel %vm1208, %v3303, -inf
        %v3459 = vsel %vm1209, %v3305, -inf
        %v3460 = vsel %vm1194, %v3405, -inf
        %v3461 = vsel %vm1195, %v3407, -inf
        %v3462 = vsel %vm1196, %v3410, -inf
        %v3463 = vsel %vm1197, %v3412, -inf
        %v3464 = vsel %vm1198, %v3415, -inf
        %v3465 = vsel %vm1199, %v3417, -inf
        %v3466 = vsel %vm1200, %v3420, -inf
        %v3467 = vsel %vm1201, %v3422, -inf
        %v3468 = vsel %vm1202, %v3425, -inf
        %v3469 = vsel %vm1203, %v3427, -inf
        %v3470 = vsel %vm1204, %v3430, -inf
        %v3471 = vsel %vm1205, %v3432, -inf
        %v3472 = vsel %vm1206, %v3435, -inf
        %v3473 = vsel %vm1207, %v3437, -inf
        %v3474 = vsel %vm1208, %v3440, -inf
        %v3475 = vsel %vm1209, %v3442, -inf
        %3476 = vmax.xlane.f32.xlu0 %v3444
        %v3477 = vpop.xlane.xlu0 %3476
        %3478 = vmax.xlane.f32.xlu0 %v3445
        %v3479 = vpop.xlane.xlu0 %3478
        %3480 = vmax.xlane.f32.xlu0 %v3446
        %v3481 = vpop.xlane.xlu0 %3480
        %3482 = vmax.xlane.f32.xlu0 %v3447
        %v3483 = vpop.xlane.xlu0 %3482
        %3484 = vmax.xlane.f32.xlu0 %v3448
        %v3485 = vpop.xlane.xlu0 %3484
        %3486 = vmax.xlane.f32.xlu0 %v3449
        %v3487 = vpop.xlane.xlu0 %3486
        %3488 = vmax.xlane.f32.xlu0 %v3450
        %v3489 = vpop.xlane.xlu0 %3488
        %3490 = vmax.xlane.f32.xlu0 %v3451
        %v3491 = vpop.xlane.xlu0 %3490
        %3492 = vmax.xlane.f32.xlu0 %v3452
        %v3493 = vpop.xlane.xlu0 %3492
        %3494 = vmax.xlane.f32.xlu0 %v3453
        %v3495 = vpop.xlane.xlu0 %3494
        %3496 = vmax.xlane.f32.xlu0 %v3454
        %v3497 = vpop.xlane.xlu0 %3496
        %3498 = vmax.xlane.f32.xlu0 %v3455
        %v3499 = vpop.xlane.xlu0 %3498
        %3500 = vmax.xlane.f32.xlu0 %v3456
        %v3501 = vpop.xlane.xlu0 %3500
        %3502 = vmax.xlane.f32.xlu0 %v3457
        %v3503 = vpop.xlane.xlu0 %3502
        %3504 = vmax.xlane.f32.xlu0 %v3458
        %v3505 = vpop.xlane.xlu0 %3504
        %3506 = vmax.xlane.f32.xlu0 %v3459
        %v3507 = vpop.xlane.xlu0 %3506
        %3508 = vmax.xlane.f32.xlu0 %v3460
        %v3509 = vpop.xlane.xlu0 %3508
        %3510 = vmax.xlane.f32.xlu0 %v3461
        %v3511 = vpop.xlane.xlu0 %3510
        %3512 = vmax.xlane.f32.xlu0 %v3462
        %v3513 = vpop.xlane.xlu0 %3512
        %3514 = vmax.xlane.f32.xlu0 %v3463
        %v3515 = vpop.xlane.xlu0 %3514
        %3516 = vmax.xlane.f32.xlu0 %v3464
        %v3517 = vpop.xlane.xlu0 %3516
        %3518 = vmax.xlane.f32.xlu0 %v3465
        %v3519 = vpop.xlane.xlu0 %3518
        %3520 = vmax.xlane.f32.xlu0 %v3466
        %v3521 = vpop.xlane.xlu0 %3520
        %3522 = vmax.xlane.f32.xlu0 %v3467
        %v3523 = vpop.xlane.xlu0 %3522
        %3524 = vmax.xlane.f32.xlu0 %v3468
        %v3525 = vpop.xlane.xlu0 %3524
        %3526 = vmax.xlane.f32.xlu0 %v3469
        %v3527 = vpop.xlane.xlu0 %3526
        %3528 = vmax.xlane.f32.xlu0 %v3470
        %v3529 = vpop.xlane.xlu0 %3528
        %3530 = vmax.xlane.f32.xlu0 %v3471
        %v3531 = vpop.xlane.xlu0 %3530
        %3532 = vmax.xlane.f32.xlu0 %v3472
        %v3533 = vpop.xlane.xlu0 %3532
        %3534 = vmax.xlane.f32.xlu0 %v3473
        %v3535 = vpop.xlane.xlu0 %3534
        %3536 = vmax.xlane.f32.xlu0 %v3474
        %v3537 = vpop.xlane.xlu0 %3536
        %3538 = vmax.xlane.f32.xlu0 %v3475
        %v3539 = vpop.xlane.xlu0 %3538
        %v3540 = vsub.f32 %v3444, %v3477
        %v3541 = vsub.f32 %v3445, %v3479
        %v3542 = vsub.f32 %v3446, %v3481
        %v3543 = vsub.f32 %v3447, %v3483
        %v3544 = vsub.f32 %v3448, %v3485
        %v3545 = vsub.f32 %v3449, %v3487
        %v3546 = vsub.f32 %v3450, %v3489
        %v3547 = vsub.f32 %v3451, %v3491
        %v3548 = vsub.f32 %v3452, %v3493
        %v3549 = vsub.f32 %v3453, %v3495
        %v3550 = vsub.f32 %v3454, %v3497
        %v3551 = vsub.f32 %v3455, %v3499
        %v3552 = vsub.f32 %v3456, %v3501
        %v3553 = vsub.f32 %v3457, %v3503
        %v3554 = vsub.f32 %v3458, %v3505
        %v3555 = vsub.f32 %v3459, %v3507
        %v3556 = vsub.f32 %v3460, %v3509
        %v3557 = vsub.f32 %v3461, %v3511
        %v3558 = vsub.f32 %v3462, %v3513
        %v3559 = vsub.f32 %v3463, %v3515
        %v3560 = vsub.f32 %v3464, %v3517
        %v3561 = vsub.f32 %v3465, %v3519
        %v3562 = vsub.f32 %v3466, %v3521
        %v3563 = vsub.f32 %v3467, %v3523
        %v3564 = vsub.f32 %v3468, %v3525
        %v3565 = vsub.f32 %v3469, %v3527
        %v3566 = vsub.f32 %v3470, %v3529
        %v3567 = vsub.f32 %v3471, %v3531
        %v3568 = vsub.f32 %v3472, %v3533
        %v3569 = vsub.f32 %v3473, %v3535
        %v3570 = vsub.f32 %v3474, %v3537
        %v3571 = vsub.f32 %v3475, %v3539
        %v3572 = vmul.f32 %v3540, 1.442695
        %v3573 = vpow.pop %v3572
        %v3574 = vmul.f32 %v3541, 1.442695
        %v3575 = vpow.pop %v3574
        %v3576 = vmul.f32 %v3542, 1.442695
        %v3577 = vpow.pop %v3576
        %v3578 = vmul.f32 %v3543, 1.442695
        %v3579 = vpow.pop %v3578
        %v3580 = vmul.f32 %v3544, 1.442695
        %v3581 = vpow.pop %v3580
        %v3582 = vmul.f32 %v3545, 1.442695
        %v3583 = vpow.pop %v3582
        %v3584 = vmul.f32 %v3546, 1.442695
        %v3585 = vpow.pop %v3584
        %v3586 = vmul.f32 %v3547, 1.442695
        %v3587 = vpow.pop %v3586
        %v3588 = vmul.f32 %v3548, 1.442695
        %v3589 = vpow.pop %v3588
        %v3590 = vmul.f32 %v3549, 1.442695
        %v3591 = vpow.pop %v3590
        %v3592 = vmul.f32 %v3550, 1.442695
        %v3593 = vpow.pop %v3592
        %v3594 = vmul.f32 %v3551, 1.442695
        %v3595 = vpow.pop %v3594
        %v3596 = vmul.f32 %v3552, 1.442695
        %v3597 = vpow.pop %v3596
        %v3598 = vmul.f32 %v3553, 1.442695
        %v3599 = vpow.pop %v3598
        %v3600 = vmul.f32 %v3554, 1.442695
        %v3601 = vpow.pop %v3600
        %v3602 = vmul.f32 %v3555, 1.442695
        %v3603 = vpow.pop %v3602
        %v3604 = vmul.f32 %v3556, 1.442695
        %v3605 = vpow.pop %v3604
        %v3606 = vmul.f32 %v3557, 1.442695
        %v3607 = vpow.pop %v3606
        %v3608 = vmul.f32 %v3558, 1.442695
        %v3609 = vpow.pop %v3608
        %v3610 = vmul.f32 %v3559, 1.442695
        %v3611 = vpow.pop %v3610
        %v3612 = vmul.f32 %v3560, 1.442695
        %v3613 = vpow.pop %v3612
        %v3614 = vmul.f32 %v3561, 1.442695
        %v3615 = vpow.pop %v3614
        %v3616 = vmul.f32 %v3562, 1.442695
        %v3617 = vpow.pop %v3616
        %v3618 = vmul.f32 %v3563, 1.442695
        %v3619 = vpow.pop %v3618
        %v3620 = vmul.f32 %v3564, 1.442695
        %v3621 = vpow.pop %v3620
        %v3622 = vmul.f32 %v3565, 1.442695
        %v3623 = vpow.pop %v3622
        %v3624 = vmul.f32 %v3566, 1.442695
        %v3625 = vpow.pop %v3624
        %v3626 = vmul.f32 %v3567, 1.442695
        %v3627 = vpow.pop %v3626
        %v3628 = vmul.f32 %v3568, 1.442695
        %v3629 = vpow.pop %v3628
        %v3630 = vmul.f32 %v3569, 1.442695
        %v3631 = vpow.pop %v3630
        %v3632 = vmul.f32 %v3570, 1.442695
        %v3633 = vpow.pop %v3632
        %v3634 = vmul.f32 %v3571, 1.442695
        %v3635 = vpow.pop %v3634
        %3636 = vadd.xlane.f32.xlu0 %v3573
        %v3637 = vpop.xlane.xlu0 %3636
        %3638 = vadd.xlane.f32.xlu0 %v3575
        %v3639 = vpop.xlane.xlu0 %3638
        %3640 = vadd.xlane.f32.xlu0 %v3577
        %v3641 = vpop.xlane.xlu0 %3640
        %3642 = vadd.xlane.f32.xlu0 %v3579
        %v3643 = vpop.xlane.xlu0 %3642
        %3644 = vadd.xlane.f32.xlu0 %v3581
        %v3645 = vpop.xlane.xlu0 %3644
        %3646 = vadd.xlane.f32.xlu0 %v3583
        %v3647 = vpop.xlane.xlu0 %3646
        %3648 = vadd.xlane.f32.xlu0 %v3585
        %v3649 = vpop.xlane.xlu0 %3648
        %3650 = vadd.xlane.f32.xlu0 %v3587
        %v3651 = vpop.xlane.xlu0 %3650
        %3652 = vadd.xlane.f32.xlu0 %v3589
        %v3653 = vpop.xlane.xlu0 %3652
        %3654 = vadd.xlane.f32.xlu0 %v3591
        %v3655 = vpop.xlane.xlu0 %3654
        %3656 = vadd.xlane.f32.xlu0 %v3593
        %v3657 = vpop.xlane.xlu0 %3656
        %3658 = vadd.xlane.f32.xlu0 %v3595
        %v3659 = vpop.xlane.xlu0 %3658
        %3660 = vadd.xlane.f32.xlu0 %v3597
        %v3661 = vpop.xlane.xlu0 %3660
        %3662 = vadd.xlane.f32.xlu0 %v3599
        %v3663 = vpop.xlane.xlu0 %3662
        %3664 = vadd.xlane.f32.xlu0 %v3601
        %v3665 = vpop.xlane.xlu0 %3664
        %3666 = vadd.xlane.f32.xlu0 %v3603
        %v3667 = vpop.xlane.xlu0 %3666
        %3668 = vadd.xlane.f32.xlu0 %v3605
        %v3669 = vpop.xlane.xlu0 %3668
        %3670 = vadd.xlane.f32.xlu0 %v3607
        %v3671 = vpop.xlane.xlu0 %3670
        %3672 = vadd.xlane.f32.xlu0 %v3609
        %v3673 = vpop.xlane.xlu0 %3672
        %3674 = vadd.xlane.f32.xlu0 %v3611
        %v3675 = vpop.xlane.xlu0 %3674
        %3676 = vadd.xlane.f32.xlu0 %v3613
        %v3677 = vpop.xlane.xlu0 %3676
        %3678 = vadd.xlane.f32.xlu0 %v3615
        %v3679 = vpop.xlane.xlu0 %3678
        %3680 = vadd.xlane.f32.xlu0 %v3617
        %v3681 = vpop.xlane.xlu0 %3680
        %3682 = vadd.xlane.f32.xlu0 %v3619
        %v3683 = vpop.xlane.xlu0 %3682
        %3684 = vadd.xlane.f32.xlu0 %v3621
        %v3685 = vpop.xlane.xlu0 %3684
        %3686 = vadd.xlane.f32.xlu0 %v3623
        %v3687 = vpop.xlane.xlu0 %3686
        %3688 = vadd.xlane.f32.xlu0 %v3625
        %v3689 = vpop.xlane.xlu0 %3688
        %3690 = vadd.xlane.f32.xlu0 %v3627
        %v3691 = vpop.xlane.xlu0 %3690
        %3692 = vadd.xlane.f32.xlu0 %v3629
        %v3693 = vpop.xlane.xlu0 %3692
        %3694 = vadd.xlane.f32.xlu0 %v3631
        %v3695 = vpop.xlane.xlu0 %3694
        %3696 = vadd.xlane.f32.xlu0 %v3633
        %v3697 = vpop.xlane.xlu0 %3696
        %3698 = vadd.xlane.f32.xlu0 %v3635
        %v3699 = vpop.xlane.xlu0 %3698
        %v3700 = vrcp.pop %v3637
        %v3701 = vrcp.pop %v3639
        %v3702 = vrcp.pop %v3641
        %v3703 = vrcp.pop %v3643
        %v3704 = vrcp.pop %v3645
        %v3705 = vrcp.pop %v3647
        %v3706 = vrcp.pop %v3649
        %v3707 = vrcp.pop %v3651
        %v3708 = vrcp.pop %v3653
        %v3709 = vrcp.pop %v3655
        %v3710 = vrcp.pop %v3657
        %v3711 = vrcp.pop %v3659
        %v3712 = vrcp.pop %v3661
        %v3713 = vrcp.pop %v3663
        %v3714 = vrcp.pop %v3665
        %v3715 = vrcp.pop %v3667
        %v3716 = vrcp.pop %v3669
        %v3717 = vrcp.pop %v3671
        %v3718 = vrcp.pop %v3673
        %v3719 = vrcp.pop %v3675
        %v3720 = vrcp.pop %v3677
        %v3721 = vrcp.pop %v3679
        %v3722 = vrcp.pop %v3681
        %v3723 = vrcp.pop %v3683
        %v3724 = vrcp.pop %v3685
        %v3725 = vrcp.pop %v3687
        %v3726 = vrcp.pop %v3689
        %v3727 = vrcp.pop %v3691
        %v3728 = vrcp.pop %v3693
        %v3729 = vrcp.pop %v3695
        %v3730 = vrcp.pop %v3697
        %v3731 = vrcp.pop %v3699
        %v3732 = vmul.f32 %v3573, %v3700
        %v3733 = vmul.f32 %v3575, %v3701
        %v3734 = vmul.f32 %v3577, %v3702
        %v3735 = vmul.f32 %v3579, %v3703
        %v3736 = vmul.f32 %v3581, %v3704
        %v3737 = vmul.f32 %v3583, %v3705
        %v3738 = vmul.f32 %v3585, %v3706
        %v3739 = vmul.f32 %v3587, %v3707
        %v3740 = vmul.f32 %v3589, %v3708
        %v3741 = vmul.f32 %v3591, %v3709
        %v3742 = vmul.f32 %v3593, %v3710
        %v3743 = vmul.f32 %v3595, %v3711
        %v3744 = vmul.f32 %v3597, %v3712
        %v3745 = vmul.f32 %v3599, %v3713
        %v3746 = vmul.f32 %v3601, %v3714
        %v3747 = vmul.f32 %v3603, %v3715
        %v3748 = vmul.f32 %v3605, %v3716
        %v3749 = vmul.f32 %v3607, %v3717
        %v3750 = vmul.f32 %v3609, %v3718
        %v3751 = vmul.f32 %v3611, %v3719
        %v3752 = vmul.f32 %v3613, %v3720
        %v3753 = vmul.f32 %v3615, %v3721
        %v3754 = vmul.f32 %v3617, %v3722
        %v3755 = vmul.f32 %v3619, %v3723
        %v3756 = vmul.f32 %v3621, %v3724
        %v3757 = vmul.f32 %v3623, %v3725
        %v3758 = vmul.f32 %v3625, %v3726
        %v3759 = vmul.f32 %v3627, %v3727
        %v3760 = vmul.f32 %v3629, %v3728
        %v3761 = vmul.f32 %v3631, %v3729
        %v3762 = vmul.f32 %v3633, %v3730
        %v3763 = vmul.f32 %v3635, %v3731
        %v3764 = vpack.c.bf16 %v3732, %v3732
        %v3765 = vpack.c.bf16 %v3733, %v3733
        %v3766 = vpack.c.bf16 %v3734, %v3734
        %v3767 = vpack.c.bf16 %v3735, %v3735
        %v3768 = vpack.c.bf16 %v3736, %v3736
        %v3769 = vpack.c.bf16 %v3737, %v3737
        %v3770 = vpack.c.bf16 %v3738, %v3738
        %v3771 = vpack.c.bf16 %v3739, %v3739
        %v3772 = vpack.c.bf16 %v3740, %v3740
        %v3773 = vpack.c.bf16 %v3741, %v3741
        %v3774 = vpack.c.bf16 %v3742, %v3742
        %v3775 = vpack.c.bf16 %v3743, %v3743
        %v3776 = vpack.c.bf16 %v3744, %v3744
        %v3777 = vpack.c.bf16 %v3745, %v3745
        %v3778 = vpack.c.bf16 %v3746, %v3746
        %v3779 = vpack.c.bf16 %v3747, %v3747
        %v3780 = vpack.c.bf16 %v3748, %v3748
        %v3781 = vpack.c.bf16 %v3749, %v3749
        %v3782 = vpack.c.bf16 %v3750, %v3750
        %v3783 = vpack.c.bf16 %v3751, %v3751
        %v3784 = vpack.c.bf16 %v3752, %v3752
        %v3785 = vpack.c.bf16 %v3753, %v3753
        %v3786 = vpack.c.bf16 %v3754, %v3754
        %v3787 = vpack.c.bf16 %v3755, %v3755
        %v3788 = vpack.c.bf16 %v3756, %v3756
        %v3789 = vpack.c.bf16 %v3757, %v3757
        %v3790 = vpack.c.bf16 %v3758, %v3758
        %v3791 = vpack.c.bf16 %v3759, %v3759
        %v3792 = vpack.c.bf16 %v3760, %v3760
        %v3793 = vpack.c.bf16 %v3761, %v3761
        %v3794 = vpack.c.bf16 %v3762, %v3762
        %v3795 = vpack.c.bf16 %v3763, %v3763
        %v3812 = vunpack.c.l.b16 %v3764
        %v3813 = vunpack.c.l.b16 %v3765
        %v3814 = vunpack.c.l.b16 %v3766
        %v3815 = vunpack.c.l.b16 %v3767
        %v3816 = vunpack.c.l.b16 %v3768
        %v3817 = vunpack.c.l.b16 %v3769
        %v3818 = vunpack.c.l.b16 %v3770
        %v3819 = vunpack.c.l.b16 %v3771
        %v3820 = vunpack.c.l.b16 %v3772
        %v3821 = vunpack.c.l.b16 %v3773
        %v3822 = vunpack.c.l.b16 %v3774
        %v3823 = vunpack.c.l.b16 %v3775
        %v3824 = vunpack.c.l.b16 %v3776
        %v3825 = vunpack.c.l.b16 %v3777
        %v3826 = vunpack.c.l.b16 %v3778
        %v3827 = vunpack.c.l.b16 %v3779
        %v3828 = vpack.c.b16 %v3813, %v3812
        %v3829 = vpack.c.b16 %v3815, %v3814
        %v3830 = vpack.c.b16 %v3817, %v3816
        %v3831 = vpack.c.b16 %v3819, %v3818
        %v3832 = vpack.c.b16 %v3821, %v3820
        %v3833 = vpack.c.b16 %v3823, %v3822
        %v3834 = vpack.c.b16 %v3825, %v3824
        %v3835 = vpack.c.b16 %v3827, %v3826
        %3844 = vrot.lane.b32.xlu0 %v1642, 64
        %v3845 = vpop.permute.xlu0 %3844
        %3846 = vrot.lane.b32.xlu0 %v1643, 64
        %v3847 = vpop.permute.xlu0 %3846
        %3848 = vrot.lane.b32.xlu0 %v1644, 64
        %v3849 = vpop.permute.xlu0 %3848
        %3850 = vrot.lane.b32.xlu0 %v1645, 64
        %v3851 = vpop.permute.xlu0 %3850
        %3852 = vrot.lane.b32.xlu0 %v1646, 64
        %v3853 = vpop.permute.xlu0 %3852
        %3854 = vrot.lane.b32.xlu0 %v1647, 64
        %v3855 = vpop.permute.xlu0 %3854
        %3856 = vrot.lane.b32.xlu0 %v1648, 64
        %v3857 = vpop.permute.xlu0 %3856
        %3858 = vrot.lane.b32.xlu0 %v1649, 64
        %v3859 = vpop.permute.xlu0 %3858
        %3868 = vmatpush.bf16.msra.mxu0 %v3859
        %3869 = vmatpush.bf16.msra.mxu0 %v3857
        %3870 = vmatpush.bf16.msra.mxu0 %v3855
        %3871 = vmatpush.bf16.msra.mxu0 %v3853
        %3872 = vmatpush.bf16.msra.mxu0 %v3851
        %3873 = vmatpush.bf16.msra.mxu0 %v3849
        %3874 = vmatpush.bf16.msra.mxu0 %v3847
        %3875 = vmatpush.bf16.msra.mxu0 %v3845
        %3876 = vmatmul.bf16.gmra.mxu0 %v3828
        %v3877 = vpop.f32.mrf.mxu0
        %v3878 = vadd.f32 0.0, %v3877
        %v3879 = vpop.f32.mrf.mxu0
        %v3880 = vadd.f32 0.0, %v3879
        %3881 = vmatmul.bf16.gmra.mxu0 %v3829
        %v3882 = vpop.f32.mrf.mxu0
        %v3883 = vadd.f32 0.0, %v3882
        %v3884 = vpop.f32.mrf.mxu0
        %v3885 = vadd.f32 0.0, %v3884
        %3886 = vmatmul.bf16.gmra.mxu0 %v3830
        %v3887 = vpop.f32.mrf.mxu0
        %v3888 = vadd.f32 0.0, %v3887
        %v3889 = vpop.f32.mrf.mxu0
        %v3890 = vadd.f32 0.0, %v3889
        %3891 = vmatmul.bf16.gmra.mxu0 %v3831
        %v3892 = vpop.f32.mrf.mxu0
        %v3893 = vadd.f32 0.0, %v3892
        %v3894 = vpop.f32.mrf.mxu0
        %v3895 = vadd.f32 0.0, %v3894
        %3896 = vmatmul.bf16.gmra.mxu0 %v3832
        %v3897 = vpop.f32.mrf.mxu0
        %v3898 = vadd.f32 0.0, %v3897
        %v3899 = vpop.f32.mrf.mxu0
        %v3900 = vadd.f32 0.0, %v3899
        %3901 = vmatmul.bf16.gmra.mxu0 %v3833
        %v3902 = vpop.f32.mrf.mxu0
        %v3903 = vadd.f32 0.0, %v3902
        %v3904 = vpop.f32.mrf.mxu0
        %v3905 = vadd.f32 0.0, %v3904
        %3906 = vmatmul.bf16.gmra.mxu0 %v3834
        %v3907 = vpop.f32.mrf.mxu0
        %v3908 = vadd.f32 0.0, %v3907
        %v3909 = vpop.f32.mrf.mxu0
        %v3910 = vadd.f32 0.0, %v3909
        %3911 = vmatmul.bf16.gmra.mxu0 %v3835
        %v3912 = vpop.f32.mrf.mxu0
        %v3913 = vadd.f32 0.0, %v3912
        %v3914 = vpop.f32.mrf.mxu0
        %v3915 = vadd.f32 0.0, %v3914
        %3916 = vdwg.mxu0
        %v3933 = vunpack.c.l.b16 %v3780
        %v3934 = vunpack.c.l.b16 %v3781
        %v3935 = vunpack.c.l.b16 %v3782
        %v3936 = vunpack.c.l.b16 %v3783
        %v3937 = vunpack.c.l.b16 %v3784
        %v3938 = vunpack.c.l.b16 %v3785
        %v3939 = vunpack.c.l.b16 %v3786
        %v3940 = vunpack.c.l.b16 %v3787
        %v3941 = vunpack.c.l.b16 %v3788
        %v3942 = vunpack.c.l.b16 %v3789
        %v3943 = vunpack.c.l.b16 %v3790
        %v3944 = vunpack.c.l.b16 %v3791
        %v3945 = vunpack.c.l.b16 %v3792
        %v3946 = vunpack.c.l.b16 %v3793
        %v3947 = vunpack.c.l.b16 %v3794
        %v3948 = vunpack.c.l.b16 %v3795
        %v3949 = vpack.c.b16 %v3934, %v3933
        %v3950 = vpack.c.b16 %v3936, %v3935
        %v3951 = vpack.c.b16 %v3938, %v3937
        %v3952 = vpack.c.b16 %v3940, %v3939
        %v3953 = vpack.c.b16 %v3942, %v3941
        %v3954 = vpack.c.b16 %v3944, %v3943
        %v3955 = vpack.c.b16 %v3946, %v3945
        %v3956 = vpack.c.b16 %v3948, %v3947
        %3965 = vrot.lane.b32.xlu0 %v1787, 64
        %v3966 = vpop.permute.xlu0 %3965
        %3967 = vrot.lane.b32.xlu0 %v1788, 64
        %v3968 = vpop.permute.xlu0 %3967
        %3969 = vrot.lane.b32.xlu0 %v1789, 64
        %v3970 = vpop.permute.xlu0 %3969
        %3971 = vrot.lane.b32.xlu0 %v1790, 64
        %v3972 = vpop.permute.xlu0 %3971
        %3973 = vrot.lane.b32.xlu0 %v1791, 64
        %v3974 = vpop.permute.xlu0 %3973
        %3975 = vrot.lane.b32.xlu0 %v1792, 64
        %v3976 = vpop.permute.xlu0 %3975
        %3977 = vrot.lane.b32.xlu0 %v1793, 64
        %v3978 = vpop.permute.xlu0 %3977
        %3979 = vrot.lane.b32.xlu0 %v1794, 64
        %v3980 = vpop.permute.xlu0 %3979
        %3989 = vmatpush.bf16.msra.mxu0 %v3980
        %3990 = vmatpush.bf16.msra.mxu0 %v3978
        %3991 = vmatpush.bf16.msra.mxu0 %v3976
        %3992 = vmatpush.bf16.msra.mxu0 %v3974
        %3993 = vmatpush.bf16.msra.mxu0 %v3972
        %3994 = vmatpush.bf16.msra.mxu0 %v3970
        %3995 = vmatpush.bf16.msra.mxu0 %v3968
        %3996 = vmatpush.bf16.msra.mxu0 %v3966
        %3997 = vmatmul.bf16.gmra.mxu0 %v3949
        %v3998 = vpop.f32.mrf.mxu0
        %v3999 = vadd.f32 0.0, %v3998
        %v4000 = vpop.f32.mrf.mxu0
        %v4001 = vadd.f32 0.0, %v4000
        %4002 = vmatmul.bf16.gmra.mxu0 %v3950
        %v4003 = vpop.f32.mrf.mxu0
        %v4004 = vadd.f32 0.0, %v4003
        %v4005 = vpop.f32.mrf.mxu0
        %v4006 = vadd.f32 0.0, %v4005
        %4007 = vmatmul.bf16.gmra.mxu0 %v3951
        %v4008 = vpop.f32.mrf.mxu0
        %v4009 = vadd.f32 0.0, %v4008
        %v4010 = vpop.f32.mrf.mxu0
        %v4011 = vadd.f32 0.0, %v4010
        %4012 = vmatmul.bf16.gmra.mxu0 %v3952
        %v4013 = vpop.f32.mrf.mxu0
        %v4014 = vadd.f32 0.0, %v4013
        %v4015 = vpop.f32.mrf.mxu0
        %v4016 = vadd.f32 0.0, %v4015
        %4017 = vmatmul.bf16.gmra.mxu0 %v3953
        %v4018 = vpop.f32.mrf.mxu0
        %v4019 = vadd.f32 0.0, %v4018
        %v4020 = vpop.f32.mrf.mxu0
        %v4021 = vadd.f32 0.0, %v4020
        %4022 = vmatmul.bf16.gmra.mxu0 %v3954
        %v4023 = vpop.f32.mrf.mxu0
        %v4024 = vadd.f32 0.0, %v4023
        %v4025 = vpop.f32.mrf.mxu0
        %v4026 = vadd.f32 0.0, %v4025
        %4027 = vmatmul.bf16.gmra.mxu0 %v3955
        %v4028 = vpop.f32.mrf.mxu0
        %v4029 = vadd.f32 0.0, %v4028
        %v4030 = vpop.f32.mrf.mxu0
        %v4031 = vadd.f32 0.0, %v4030
        %4032 = vmatmul.bf16.gmra.mxu0 %v3956
        %v4033 = vpop.f32.mrf.mxu0
        %v4034 = vadd.f32 0.0, %v4033
        %v4035 = vpop.f32.mrf.mxu0
        %v4036 = vadd.f32 0.0, %v4035
        %4037 = vdwg.mxu0
        %v4038 = vpack.c.bf16 %v3878, %v3878
        %v4039 = vpack.c.bf16 %v3880, %v3880
        %v4040 = vpack.c.bf16 %v3883, %v3883
        %v4041 = vpack.c.bf16 %v3885, %v3885
        %v4042 = vpack.c.bf16 %v3888, %v3888
        %v4043 = vpack.c.bf16 %v3890, %v3890
        %v4044 = vpack.c.bf16 %v3893, %v3893
        %v4045 = vpack.c.bf16 %v3895, %v3895
        %v4046 = vpack.c.bf16 %v3898, %v3898
        %v4047 = vpack.c.bf16 %v3900, %v3900
        %v4048 = vpack.c.bf16 %v3903, %v3903
        %v4049 = vpack.c.bf16 %v3905, %v3905
        %v4050 = vpack.c.bf16 %v3908, %v3908
        %v4051 = vpack.c.bf16 %v3910, %v3910
        %v4052 = vpack.c.bf16 %v3913, %v3913
        %v4053 = vpack.c.bf16 %v3915, %v3915
        %v4054 = vpack.c.bf16 %v3999, %v3999
        %v4055 = vpack.c.bf16 %v4001, %v4001
        %v4056 = vpack.c.bf16 %v4004, %v4004
        %v4057 = vpack.c.bf16 %v4006, %v4006
        %v4058 = vpack.c.bf16 %v4009, %v4009
        %v4059 = vpack.c.bf16 %v4011, %v4011
        %v4060 = vpack.c.bf16 %v4014, %v4014
        %v4061 = vpack.c.bf16 %v4016, %v4016
        %v4062 = vpack.c.bf16 %v4019, %v4019
        %v4063 = vpack.c.bf16 %v4021, %v4021
        %v4064 = vpack.c.bf16 %v4024, %v4024
        %v4065 = vpack.c.bf16 %v4026, %v4026
        %v4066 = vpack.c.bf16 %v4029, %v4029
        %v4067 = vpack.c.bf16 %v4031, %v4031
        %v4068 = vpack.c.bf16 %v4034, %v4034
        %v4069 = vpack.c.bf16 %v4036, %v4036
        %4102 = vrot.lane.b32.xlu0 %v4038, 64
        %v4103 = vpop.permute.xlu0 %4102
        %4104 = vrot.lane.b32.xlu0 %v4039, 64
        %v4105 = vpop.permute.xlu0 %4104
        %4106 = vrot.lane.b32.xlu0 %v4040, 64
        %v4107 = vpop.permute.xlu0 %4106
        %4108 = vrot.lane.b32.xlu0 %v4041, 64
        %v4109 = vpop.permute.xlu0 %4108
        %4110 = vrot.lane.b32.xlu0 %v4042, 64
        %v4111 = vpop.permute.xlu0 %4110
        %4112 = vrot.lane.b32.xlu0 %v4043, 64
        %v4113 = vpop.permute.xlu0 %4112
        %4114 = vrot.lane.b32.xlu0 %v4044, 64
        %v4115 = vpop.permute.xlu0 %4114
        %4116 = vrot.lane.b32.xlu0 %v4045, 64
        %v4117 = vpop.permute.xlu0 %4116
        %4118 = vrot.lane.b32.xlu0 %v4046, 64
        %v4119 = vpop.permute.xlu0 %4118
        %4120 = vrot.lane.b32.xlu0 %v4047, 64
        %v4121 = vpop.permute.xlu0 %4120
        %4122 = vrot.lane.b32.xlu0 %v4048, 64
        %v4123 = vpop.permute.xlu0 %4122
        %4124 = vrot.lane.b32.xlu0 %v4049, 64
        %v4125 = vpop.permute.xlu0 %4124
        %4126 = vrot.lane.b32.xlu0 %v4050, 64
        %v4127 = vpop.permute.xlu0 %4126
        %4128 = vrot.lane.b32.xlu0 %v4051, 64
        %v4129 = vpop.permute.xlu0 %4128
        %4130 = vrot.lane.b32.xlu0 %v4052, 64
        %v4131 = vpop.permute.xlu0 %4130
        %4132 = vrot.lane.b32.xlu0 %v4053, 64
        %v4133 = vpop.permute.xlu0 %4132
        %4134 = vrot.lane.b32.xlu0 %v4054, 64
        %v4135 = vpop.permute.xlu0 %4134
        %4136 = vrot.lane.b32.xlu0 %v4055, 64
        %v4137 = vpop.permute.xlu0 %4136
        %4138 = vrot.lane.b32.xlu0 %v4056, 64
        %v4139 = vpop.permute.xlu0 %4138
        %4140 = vrot.lane.b32.xlu0 %v4057, 64
        %v4141 = vpop.permute.xlu0 %4140
        %4142 = vrot.lane.b32.xlu0 %v4058, 64
        %v4143 = vpop.permute.xlu0 %4142
        %4144 = vrot.lane.b32.xlu0 %v4059, 64
        %v4145 = vpop.permute.xlu0 %4144
        %4146 = vrot.lane.b32.xlu0 %v4060, 64
        %v4147 = vpop.permute.xlu0 %4146
        %4148 = vrot.lane.b32.xlu0 %v4061, 64
        %v4149 = vpop.permute.xlu0 %4148
        %4150 = vrot.lane.b32.xlu0 %v4062, 64
        %v4151 = vpop.permute.xlu0 %4150
        %4152 = vrot.lane.b32.xlu0 %v4063, 64
        %v4153 = vpop.permute.xlu0 %4152
        %4154 = vrot.lane.b32.xlu0 %v4064, 64
        %v4155 = vpop.permute.xlu0 %4154
        %4156 = vrot.lane.b32.xlu0 %v4065, 64
        %v4157 = vpop.permute.xlu0 %4156
        %4158 = vrot.lane.b32.xlu0 %v4066, 64
        %v4159 = vpop.permute.xlu0 %4158
        %4160 = vrot.lane.b32.xlu0 %v4067, 64
        %v4161 = vpop.permute.xlu0 %4160
        %4162 = vrot.lane.b32.xlu0 %v4068, 64
        %v4163 = vpop.permute.xlu0 %4162
        %4164 = vrot.lane.b32.xlu0 %v4069, 64
        %v4165 = vpop.permute.xlu0 %4164
        %vm4198 = vcmask 781824
        %4199 = vst.msk [vmem:[#allocation2] sm:$0xf] %vm4198, %v4103
        %4200 = vst.msk [vmem:[#allocation2 + $0x4] sm:$0xf] %vm4198, %v4105
        %4201 = vst.msk [vmem:[#allocation2 + $0x8] sm:$0xf] %vm4198, %v4107
        %4202 = vst.msk [vmem:[#allocation2 + $0xc] sm:$0xf] %vm4198, %v4109
        %4203 = vst.msk [vmem:[#allocation2 + $0x10] sm:$0xf] %vm4198, %v4111
        %4204 = vst.msk [vmem:[#allocation2 + $0x14] sm:$0xf] %vm4198, %v4113
        %4205 = vst.msk [vmem:[#allocation2 + $0x18] sm:$0xf] %vm4198, %v4115
        %4206 = vst.msk [vmem:[#allocation2 + $0x1c] sm:$0xf] %vm4198, %v4117
        %4207 = vst.msk [vmem:[#allocation2 + $0x20] sm:$0xf] %vm4198, %v4119
        %4208 = vst.msk [vmem:[#allocation2 + $0x24] sm:$0xf] %vm4198, %v4121
        %4209 = vst.msk [vmem:[#allocation2 + $0x28] sm:$0xf] %vm4198, %v4123
        %4210 = vst.msk [vmem:[#allocation2 + $0x2c] sm:$0xf] %vm4198, %v4125
        %4211 = vst.msk [vmem:[#allocation2 + $0x30] sm:$0xf] %vm4198, %v4127
        %4212 = vst.msk [vmem:[#allocation2 + $0x34] sm:$0xf] %vm4198, %v4129
        %4213 = vst.msk [vmem:[#allocation2 + $0x38] sm:$0xf] %vm4198, %v4131
        %4214 = vst.msk [vmem:[#allocation2 + $0x3c] sm:$0xf] %vm4198, %v4133
        %4215 = vst.msk [vmem:[#allocation2 + $0x40] sm:$0xf] %vm4198, %v4135
        %4216 = vst.msk [vmem:[#allocation2 + $0x44] sm:$0xf] %vm4198, %v4137
        %4217 = vst.msk [vmem:[#allocation2 + $0x48] sm:$0xf] %vm4198, %v4139
        %4218 = vst.msk [vmem:[#allocation2 + $0x4c] sm:$0xf] %vm4198, %v4141
        %4219 = vst.msk [vmem:[#allocation2 + $0x50] sm:$0xf] %vm4198, %v4143
        %4220 = vst.msk [vmem:[#allocation2 + $0x54] sm:$0xf] %vm4198, %v4145
        %4221 = vst.msk [vmem:[#allocation2 + $0x58] sm:$0xf] %vm4198, %v4147
        %4222 = vst.msk [vmem:[#allocation2 + $0x5c] sm:$0xf] %vm4198, %v4149
        %4223 = vst.msk [vmem:[#allocation2 + $0x60] sm:$0xf] %vm4198, %v4151
        %4224 = vst.msk [vmem:[#allocation2 + $0x64] sm:$0xf] %vm4198, %v4153
        %4225 = vst.msk [vmem:[#allocation2 + $0x68] sm:$0xf] %vm4198, %v4155
        %4226 = vst.msk [vmem:[#allocation2 + $0x6c] sm:$0xf] %vm4198, %v4157
        %4227 = vst.msk [vmem:[#allocation2 + $0x70] sm:$0xf] %vm4198, %v4159
        %4228 = vst.msk [vmem:[#allocation2 + $0x74] sm:$0xf] %vm4198, %v4161
        %4229 = vst.msk [vmem:[#allocation2 + $0x78] sm:$0xf] %vm4198, %v4163
        %4230 = vst.msk [vmem:[#allocation2 + $0x7c] sm:$0xf] %vm4198, %v4165
        %4231 = vrot.lane.b32.xlu0 %v724, 32
        %v4232 = vpop.permute.xlu0 %4231
        %4233 = vrot.lane.b32.xlu0 %v726, 32
        %v4234 = vpop.permute.xlu0 %4233
        %4235 = vrot.lane.b32.xlu0 %v728, 32
        %v4236 = vpop.permute.xlu0 %4235
        %4237 = vrot.lane.b32.xlu0 %v730, 32
        %v4238 = vpop.permute.xlu0 %4237
        %4239 = vrot.lane.b32.xlu0 %v732, 32
        %v4240 = vpop.permute.xlu0 %4239
        %4241 = vrot.lane.b32.xlu0 %v734, 32
        %v4242 = vpop.permute.xlu0 %4241
        %4243 = vrot.lane.b32.xlu0 %v736, 32
        %v4244 = vpop.permute.xlu0 %4243
        %4245 = vrot.lane.b32.xlu0 %v738, 32
        %v4246 = vpop.permute.xlu0 %4245
        %4247 = vrot.lane.b32.xlu0 %v740, 32
        %v4248 = vpop.permute.xlu0 %4247
        %4249 = vrot.lane.b32.xlu0 %v742, 32
        %v4250 = vpop.permute.xlu0 %4249
        %4251 = vrot.lane.b32.xlu0 %v744, 32
        %v4252 = vpop.permute.xlu0 %4251
        %4253 = vrot.lane.b32.xlu0 %v746, 32
        %v4254 = vpop.permute.xlu0 %4253
        %4255 = vrot.lane.b32.xlu0 %v748, 32
        %v4256 = vpop.permute.xlu0 %4255
        %4257 = vrot.lane.b32.xlu0 %v750, 32
        %v4258 = vpop.permute.xlu0 %4257
        %4259 = vrot.lane.b32.xlu0 %v752, 32
        %v4260 = vpop.permute.xlu0 %4259
        %4261 = vrot.lane.b32.xlu0 %v754, 32
        %v4262 = vpop.permute.xlu0 %4261
        %4263 = vrot.lane.b32.xlu0 %v756, 32
        %v4264 = vpop.permute.xlu0 %4263
        %4265 = vrot.lane.b32.xlu0 %v758, 32
        %v4266 = vpop.permute.xlu0 %4265
        %4267 = vrot.lane.b32.xlu0 %v760, 32
        %v4268 = vpop.permute.xlu0 %4267
        %4269 = vrot.lane.b32.xlu0 %v762, 32
        %v4270 = vpop.permute.xlu0 %4269
        %4271 = vrot.lane.b32.xlu0 %v764, 32
        %v4272 = vpop.permute.xlu0 %4271
        %4273 = vrot.lane.b32.xlu0 %v766, 32
        %v4274 = vpop.permute.xlu0 %4273
        %4275 = vrot.lane.b32.xlu0 %v768, 32
        %v4276 = vpop.permute.xlu0 %4275
        %4277 = vrot.lane.b32.xlu0 %v770, 32
        %v4278 = vpop.permute.xlu0 %4277
        %4279 = vrot.lane.b32.xlu0 %v772, 32
        %v4280 = vpop.permute.xlu0 %4279
        %4281 = vrot.lane.b32.xlu0 %v774, 32
        %v4282 = vpop.permute.xlu0 %4281
        %4283 = vrot.lane.b32.xlu0 %v776, 32
        %v4284 = vpop.permute.xlu0 %4283
        %4285 = vrot.lane.b32.xlu0 %v778, 32
        %v4286 = vpop.permute.xlu0 %4285
        %4287 = vrot.lane.b32.xlu0 %v780, 32
        %v4288 = vpop.permute.xlu0 %4287
        %4289 = vrot.lane.b32.xlu0 %v782, 32
        %v4290 = vpop.permute.xlu0 %4289
        %4291 = vrot.lane.b32.xlu0 %v784, 32
        %v4292 = vpop.permute.xlu0 %4291
        %4293 = vrot.lane.b32.xlu0 %v786, 32
        %v4294 = vpop.permute.xlu0 %4293
        %v4295 = vrot.slane %v4232, 4
        %v4296 = vrot.slane %v4234, 4
        %v4297 = vrot.slane %v4236, 4
        %v4298 = vrot.slane %v4238, 4
        %v4299 = vrot.slane %v4240, 4
        %v4300 = vrot.slane %v4242, 4
        %v4301 = vrot.slane %v4244, 4
        %v4302 = vrot.slane %v4246, 4
        %v4303 = vrot.slane %v4248, 4
        %v4304 = vrot.slane %v4250, 4
        %v4305 = vrot.slane %v4252, 4
        %v4306 = vrot.slane %v4254, 4
        %v4307 = vrot.slane %v4256, 4
        %v4308 = vrot.slane %v4258, 4
        %v4309 = vrot.slane %v4260, 4
        %v4310 = vrot.slane %v4262, 4
        %v4311 = vrot.slane %v4264, 4
        %v4312 = vrot.slane %v4266, 4
        %v4313 = vrot.slane %v4268, 4
        %v4314 = vrot.slane %v4270, 4
        %v4315 = vrot.slane %v4272, 4
        %v4316 = vrot.slane %v4274, 4
        %v4317 = vrot.slane %v4276, 4
        %v4318 = vrot.slane %v4278, 4
        %v4319 = vrot.slane %v4280, 4
        %v4320 = vrot.slane %v4282, 4
        %v4321 = vrot.slane %v4284, 4
        %v4322 = vrot.slane %v4286, 4
        %v4323 = vrot.slane %v4288, 4
        %v4324 = vrot.slane %v4290, 4
        %v4325 = vrot.slane %v4292, 4
        %v4326 = vrot.slane %v4294, 4
        %4327 = vrot.lane.b32.xlu0 %v903, 32
        %v4328 = vpop.permute.xlu0 %4327
        %4329 = vrot.lane.b32.xlu0 %v904, 32
        %v4330 = vpop.permute.xlu0 %4329
        %4331 = vrot.lane.b32.xlu0 %v905, 32
        %v4332 = vpop.permute.xlu0 %4331
        %4333 = vrot.lane.b32.xlu0 %v906, 32
        %v4334 = vpop.permute.xlu0 %4333
        %4335 = vrot.lane.b32.xlu0 %v907, 32
        %v4336 = vpop.permute.xlu0 %4335
        %4337 = vrot.lane.b32.xlu0 %v908, 32
        %v4338 = vpop.permute.xlu0 %4337
        %4339 = vrot.lane.b32.xlu0 %v909, 32
        %v4340 = vpop.permute.xlu0 %4339
        %4341 = vrot.lane.b32.xlu0 %v910, 32
        %v4342 = vpop.permute.xlu0 %4341
        %v4343 = vunpack.c.l.b16 %v4295
        %v4344 = vunpack.c.l.b16 %v4296
        %v4345 = vunpack.c.l.b16 %v4297
        %v4346 = vunpack.c.l.b16 %v4298
        %v4347 = vunpack.c.l.b16 %v4299
        %v4348 = vunpack.c.l.b16 %v4300
        %v4349 = vunpack.c.l.b16 %v4301
        %v4350 = vunpack.c.l.b16 %v4302
        %v4351 = vunpack.c.l.b16 %v4303
        %v4352 = vunpack.c.l.b16 %v4304
        %v4353 = vunpack.c.l.b16 %v4305
        %v4354 = vunpack.c.l.b16 %v4306
        %v4355 = vunpack.c.l.b16 %v4307
        %v4356 = vunpack.c.l.b16 %v4308
        %v4357 = vunpack.c.l.b16 %v4309
        %v4358 = vunpack.c.l.b16 %v4310
        %v4359 = vpack.c.b16 %v4344, %v4343
        %v4360 = vpack.c.b16 %v4346, %v4345
        %v4361 = vpack.c.b16 %v4348, %v4347
        %v4362 = vpack.c.b16 %v4350, %v4349
        %v4363 = vpack.c.b16 %v4352, %v4351
        %v4364 = vpack.c.b16 %v4354, %v4353
        %v4365 = vpack.c.b16 %v4356, %v4355
        %v4366 = vpack.c.b16 %v4358, %v4357
        %v4368 = vsel %vm935, %v4328, 0
        %v4371 = vsel %vm935, %v4330, 0
        %v4374 = vsel %vm935, %v4332, 0
        %v4377 = vsel %vm935, %v4334, 0
        %v4380 = vsel %vm935, %v4336, 0
        %v4383 = vsel %vm935, %v4338, 0
        %v4386 = vsel %vm935, %v4340, 0
        %v4389 = vsel %vm935, %v4342, 0
        %v4392 = vsel %vm935, %v4359, 0
        %v4395 = vsel %vm935, %v4360, 0
        %v4398 = vsel %vm935, %v4361, 0
        %v4401 = vsel %vm935, %v4362, 0
        %v4404 = vsel %vm935, %v4363, 0
        %v4407 = vsel %vm935, %v4364, 0
        %v4410 = vsel %vm935, %v4365, 0
        %v4413 = vsel %vm935, %v4366, 0
        %4415 = vmatpush.bf16.xpose.msra.mxu0 %v4413
        %4416 = vmatpush.bf16.xpose.msra.mxu0 %v4410
        %4417 = vmatpush.bf16.xpose.msra.mxu0 %v4407
        %4418 = vmatpush.bf16.xpose.msra.mxu0 %v4404
        %4419 = vmatpush.bf16.xpose.msra.mxu0 %v4401
        %4420 = vmatpush.bf16.xpose.msra.mxu0 %v4398
        %4421 = vmatpush.bf16.xpose.msra.mxu0 %v4395
        %4422 = vmatpush.bf16.xpose.msra.mxu0 %v4392
        %4423 = vmatmul.bf16.gmra.mxu0 %v4368
        %v4424 = vpop.f32.mrf.mxu0
        %v4425 = vadd.f32 0.0, %v4424
        %v4426 = vpop.f32.mrf.mxu0
        %v4427 = vadd.f32 0.0, %v4426
        %4428 = vmatmul.bf16.gmra.mxu0 %v4371
        %v4429 = vpop.f32.mrf.mxu0
        %v4430 = vadd.f32 0.0, %v4429
        %v4431 = vpop.f32.mrf.mxu0
        %v4432 = vadd.f32 0.0, %v4431
        %4433 = vmatmul.bf16.gmra.mxu0 %v4374
        %v4434 = vpop.f32.mrf.mxu0
        %v4435 = vadd.f32 0.0, %v4434
        %v4436 = vpop.f32.mrf.mxu0
        %v4437 = vadd.f32 0.0, %v4436
        %4438 = vmatmul.bf16.gmra.mxu0 %v4377
        %v4439 = vpop.f32.mrf.mxu0
        %v4440 = vadd.f32 0.0, %v4439
        %v4441 = vpop.f32.mrf.mxu0
        %v4442 = vadd.f32 0.0, %v4441
        %4443 = vmatmul.bf16.gmra.mxu0 %v4380
        %v4444 = vpop.f32.mrf.mxu0
        %v4445 = vadd.f32 0.0, %v4444
        %v4446 = vpop.f32.mrf.mxu0
        %v4447 = vadd.f32 0.0, %v4446
        %4448 = vmatmul.bf16.gmra.mxu0 %v4383
        %v4449 = vpop.f32.mrf.mxu0
        %v4450 = vadd.f32 0.0, %v4449
        %v4451 = vpop.f32.mrf.mxu0
        %v4452 = vadd.f32 0.0, %v4451
        %4453 = vmatmul.bf16.gmra.mxu0 %v4386
        %v4454 = vpop.f32.mrf.mxu0
        %v4455 = vadd.f32 0.0, %v4454
        %v4456 = vpop.f32.mrf.mxu0
        %v4457 = vadd.f32 0.0, %v4456
        %4458 = vmatmul.bf16.gmra.mxu0 %v4389
        %v4459 = vpop.f32.mrf.mxu0
        %v4460 = vadd.f32 0.0, %v4459
        %v4461 = vpop.f32.mrf.mxu0
        %v4462 = vadd.f32 0.0, %v4461
        %4463 = vdwg.mxu0
        %4464 = vrot.lane.b32.xlu0 %v1049, 32
        %v4465 = vpop.permute.xlu0 %4464
        %4466 = vrot.lane.b32.xlu0 %v1050, 32
        %v4467 = vpop.permute.xlu0 %4466
        %4468 = vrot.lane.b32.xlu0 %v1051, 32
        %v4469 = vpop.permute.xlu0 %4468
        %4470 = vrot.lane.b32.xlu0 %v1052, 32
        %v4471 = vpop.permute.xlu0 %4470
        %4472 = vrot.lane.b32.xlu0 %v1053, 32
        %v4473 = vpop.permute.xlu0 %4472
        %4474 = vrot.lane.b32.xlu0 %v1054, 32
        %v4475 = vpop.permute.xlu0 %4474
        %4476 = vrot.lane.b32.xlu0 %v1055, 32
        %v4477 = vpop.permute.xlu0 %4476
        %4478 = vrot.lane.b32.xlu0 %v1056, 32
        %v4479 = vpop.permute.xlu0 %4478
        %v4480 = vunpack.c.l.b16 %v4311
        %v4481 = vunpack.c.l.b16 %v4312
        %v4482 = vunpack.c.l.b16 %v4313
        %v4483 = vunpack.c.l.b16 %v4314
        %v4484 = vunpack.c.l.b16 %v4315
        %v4485 = vunpack.c.l.b16 %v4316
        %v4486 = vunpack.c.l.b16 %v4317
        %v4487 = vunpack.c.l.b16 %v4318
        %v4488 = vunpack.c.l.b16 %v4319
        %v4489 = vunpack.c.l.b16 %v4320
        %v4490 = vunpack.c.l.b16 %v4321
        %v4491 = vunpack.c.l.b16 %v4322
        %v4492 = vunpack.c.l.b16 %v4323
        %v4493 = vunpack.c.l.b16 %v4324
        %v4494 = vunpack.c.l.b16 %v4325
        %v4495 = vunpack.c.l.b16 %v4326
        %v4496 = vpack.c.b16 %v4481, %v4480
        %v4497 = vpack.c.b16 %v4483, %v4482
        %v4498 = vpack.c.b16 %v4485, %v4484
        %v4499 = vpack.c.b16 %v4487, %v4486
        %v4500 = vpack.c.b16 %v4489, %v4488
        %v4501 = vpack.c.b16 %v4491, %v4490
        %v4502 = vpack.c.b16 %v4493, %v4492
        %v4503 = vpack.c.b16 %v4495, %v4494
        %v4505 = vsel %vm935, %v4465, 0
        %v4508 = vsel %vm935, %v4467, 0
        %v4511 = vsel %vm935, %v4469, 0
        %v4514 = vsel %vm935, %v4471, 0
        %v4517 = vsel %vm935, %v4473, 0
        %v4520 = vsel %vm935, %v4475, 0
        %v4523 = vsel %vm935, %v4477, 0
        %v4526 = vsel %vm935, %v4479, 0
        %v4529 = vsel %vm935, %v4496, 0
        %v4532 = vsel %vm935, %v4497, 0
        %v4535 = vsel %vm935, %v4498, 0
        %v4538 = vsel %vm935, %v4499, 0
        %v4541 = vsel %vm935, %v4500, 0
        %v4544 = vsel %vm935, %v4501, 0
        %v4547 = vsel %vm935, %v4502, 0
        %v4550 = vsel %vm935, %v4503, 0
        %4552 = vmatpush.bf16.xpose.msra.mxu0 %v4550
        %4553 = vmatpush.bf16.xpose.msra.mxu0 %v4547
        %4554 = vmatpush.bf16.xpose.msra.mxu0 %v4544
        %4555 = vmatpush.bf16.xpose.msra.mxu0 %v4541
        %4556 = vmatpush.bf16.xpose.msra.mxu0 %v4538
        %4557 = vmatpush.bf16.xpose.msra.mxu0 %v4535
        %4558 = vmatpush.bf16.xpose.msra.mxu0 %v4532
        %4559 = vmatpush.bf16.xpose.msra.mxu0 %v4529
        %4560 = vmatmul.bf16.gmra.mxu0 %v4505
        %v4561 = vpop.f32.mrf.mxu0
        %v4562 = vadd.f32 0.0, %v4561
        %v4563 = vpop.f32.mrf.mxu0
        %v4564 = vadd.f32 0.0, %v4563
        %4565 = vmatmul.bf16.gmra.mxu0 %v4508
        %v4566 = vpop.f32.mrf.mxu0
        %v4567 = vadd.f32 0.0, %v4566
        %v4568 = vpop.f32.mrf.mxu0
        %v4569 = vadd.f32 0.0, %v4568
        %4570 = vmatmul.bf16.gmra.mxu0 %v4511
        %v4571 = vpop.f32.mrf.mxu0
        %v4572 = vadd.f32 0.0, %v4571
        %v4573 = vpop.f32.mrf.mxu0
        %v4574 = vadd.f32 0.0, %v4573
        %4575 = vmatmul.bf16.gmra.mxu0 %v4514
        %v4576 = vpop.f32.mrf.mxu0
        %v4577 = vadd.f32 0.0, %v4576
        %v4578 = vpop.f32.mrf.mxu0
        %v4579 = vadd.f32 0.0, %v4578
        %4580 = vmatmul.bf16.gmra.mxu0 %v4517
        %v4581 = vpop.f32.mrf.mxu0
        %v4582 = vadd.f32 0.0, %v4581
        %v4583 = vpop.f32.mrf.mxu0
        %v4584 = vadd.f32 0.0, %v4583
        %4585 = vmatmul.bf16.gmra.mxu0 %v4520
        %v4586 = vpop.f32.mrf.mxu0
        %v4587 = vadd.f32 0.0, %v4586
        %v4588 = vpop.f32.mrf.mxu0
        %v4589 = vadd.f32 0.0, %v4588
        %4590 = vmatmul.bf16.gmra.mxu0 %v4523
        %v4591 = vpop.f32.mrf.mxu0
        %v4592 = vadd.f32 0.0, %v4591
        %v4593 = vpop.f32.mrf.mxu0
        %v4594 = vadd.f32 0.0, %v4593
        %4595 = vmatmul.bf16.gmra.mxu0 %v4526
        %v4596 = vpop.f32.mrf.mxu0
        %v4597 = vadd.f32 0.0, %v4596
        %v4598 = vpop.f32.mrf.mxu0
        %v4599 = vadd.f32 0.0, %v4598
        %4600 = vdwg.mxu0
        %v4601 = vsel %vm1194, %v4425, -inf
        %v4602 = vsel %vm1195, %v4427, -inf
        %v4603 = vsel %vm1196, %v4430, -inf
        %v4604 = vsel %vm1197, %v4432, -inf
        %v4605 = vsel %vm1198, %v4435, -inf
        %v4606 = vsel %vm1199, %v4437, -inf
        %v4607 = vsel %vm1200, %v4440, -inf
        %v4608 = vsel %vm1201, %v4442, -inf
        %v4609 = vsel %vm1202, %v4445, -inf
        %v4610 = vsel %vm1203, %v4447, -inf
        %v4611 = vsel %vm1204, %v4450, -inf
        %v4612 = vsel %vm1205, %v4452, -inf
        %v4613 = vsel %vm1206, %v4455, -inf
        %v4614 = vsel %vm1207, %v4457, -inf
        %v4615 = vsel %vm1208, %v4460, -inf
        %v4616 = vsel %vm1209, %v4462, -inf
        %v4617 = vsel %vm1194, %v4562, -inf
        %v4618 = vsel %vm1195, %v4564, -inf
        %v4619 = vsel %vm1196, %v4567, -inf
        %v4620 = vsel %vm1197, %v4569, -inf
        %v4621 = vsel %vm1198, %v4572, -inf
        %v4622 = vsel %vm1199, %v4574, -inf
        %v4623 = vsel %vm1200, %v4577, -inf
        %v4624 = vsel %vm1201, %v4579, -inf
        %v4625 = vsel %vm1202, %v4582, -inf
        %v4626 = vsel %vm1203, %v4584, -inf
        %v4627 = vsel %vm1204, %v4587, -inf
        %v4628 = vsel %vm1205, %v4589, -inf
        %v4629 = vsel %vm1206, %v4592, -inf
        %v4630 = vsel %vm1207, %v4594, -inf
        %v4631 = vsel %vm1208, %v4597, -inf
        %v4632 = vsel %vm1209, %v4599, -inf
        %4633 = vmax.xlane.f32.xlu0 %v4601
        %v4634 = vpop.xlane.xlu0 %4633
        %4635 = vmax.xlane.f32.xlu0 %v4602
        %v4636 = vpop.xlane.xlu0 %4635
        %4637 = vmax.xlane.f32.xlu0 %v4603
        %v4638 = vpop.xlane.xlu0 %4637
        %4639 = vmax.xlane.f32.xlu0 %v4604
        %v4640 = vpop.xlane.xlu0 %4639
        %4641 = vmax.xlane.f32.xlu0 %v4605
        %v4642 = vpop.xlane.xlu0 %4641
        %4643 = vmax.xlane.f32.xlu0 %v4606
        %v4644 = vpop.xlane.xlu0 %4643
        %4645 = vmax.xlane.f32.xlu0 %v4607
        %v4646 = vpop.xlane.xlu0 %4645
        %4647 = vmax.xlane.f32.xlu0 %v4608
        %v4648 = vpop.xlane.xlu0 %4647
        %4649 = vmax.xlane.f32.xlu0 %v4609
        %v4650 = vpop.xlane.xlu0 %4649
        %4651 = vmax.xlane.f32.xlu0 %v4610
        %v4652 = vpop.xlane.xlu0 %4651
        %4653 = vmax.xlane.f32.xlu0 %v4611
        %v4654 = vpop.xlane.xlu0 %4653
        %4655 = vmax.xlane.f32.xlu0 %v4612
        %v4656 = vpop.xlane.xlu0 %4655
        %4657 = vmax.xlane.f32.xlu0 %v4613
        %v4658 = vpop.xlane.xlu0 %4657
        %4659 = vmax.xlane.f32.xlu0 %v4614
        %v4660 = vpop.xlane.xlu0 %4659
        %4661 = vmax.xlane.f32.xlu0 %v4615
        %v4662 = vpop.xlane.xlu0 %4661
        %4663 = vmax.xlane.f32.xlu0 %v4616
        %v4664 = vpop.xlane.xlu0 %4663
        %4665 = vmax.xlane.f32.xlu0 %v4617
        %v4666 = vpop.xlane.xlu0 %4665
        %4667 = vmax.xlane.f32.xlu0 %v4618
        %v4668 = vpop.xlane.xlu0 %4667
        %4669 = vmax.xlane.f32.xlu0 %v4619
        %v4670 = vpop.xlane.xlu0 %4669
        %4671 = vmax.xlane.f32.xlu0 %v4620
        %v4672 = vpop.xlane.xlu0 %4671
        %4673 = vmax.xlane.f32.xlu0 %v4621
        %v4674 = vpop.xlane.xlu0 %4673
        %4675 = vmax.xlane.f32.xlu0 %v4622
        %v4676 = vpop.xlane.xlu0 %4675
        %4677 = vmax.xlane.f32.xlu0 %v4623
        %v4678 = vpop.xlane.xlu0 %4677
        %4679 = vmax.xlane.f32.xlu0 %v4624
        %v4680 = vpop.xlane.xlu0 %4679
        %4681 = vmax.xlane.f32.xlu0 %v4625
        %v4682 = vpop.xlane.xlu0 %4681
        %4683 = vmax.xlane.f32.xlu0 %v4626
        %v4684 = vpop.xlane.xlu0 %4683
        %4685 = vmax.xlane.f32.xlu0 %v4627
        %v4686 = vpop.xlane.xlu0 %4685
        %4687 = vmax.xlane.f32.xlu0 %v4628
        %v4688 = vpop.xlane.xlu0 %4687
        %4689 = vmax.xlane.f32.xlu0 %v4629
        %v4690 = vpop.xlane.xlu0 %4689
        %4691 = vmax.xlane.f32.xlu0 %v4630
        %v4692 = vpop.xlane.xlu0 %4691
        %4693 = vmax.xlane.f32.xlu0 %v4631
        %v4694 = vpop.xlane.xlu0 %4693
        %4695 = vmax.xlane.f32.xlu0 %v4632
        %v4696 = vpop.xlane.xlu0 %4695
        %v4697 = vsub.f32 %v4601, %v4634
        %v4698 = vsub.f32 %v4602, %v4636
        %v4699 = vsub.f32 %v4603, %v4638
        %v4700 = vsub.f32 %v4604, %v4640
        %v4701 = vsub.f32 %v4605, %v4642
        %v4702 = vsub.f32 %v4606, %v4644
        %v4703 = vsub.f32 %v4607, %v4646
        %v4704 = vsub.f32 %v4608, %v4648
        %v4705 = vsub.f32 %v4609, %v4650
        %v4706 = vsub.f32 %v4610, %v4652
        %v4707 = vsub.f32 %v4611, %v4654
        %v4708 = vsub.f32 %v4612, %v4656
        %v4709 = vsub.f32 %v4613, %v4658
        %v4710 = vsub.f32 %v4614, %v4660
        %v4711 = vsub.f32 %v4615, %v4662
        %v4712 = vsub.f32 %v4616, %v4664
        %v4713 = vsub.f32 %v4617, %v4666
        %v4714 = vsub.f32 %v4618, %v4668
        %v4715 = vsub.f32 %v4619, %v4670
        %v4716 = vsub.f32 %v4620, %v4672
        %v4717 = vsub.f32 %v4621, %v4674
        %v4718 = vsub.f32 %v4622, %v4676
        %v4719 = vsub.f32 %v4623, %v4678
        %v4720 = vsub.f32 %v4624, %v4680
        %v4721 = vsub.f32 %v4625, %v4682
        %v4722 = vsub.f32 %v4626, %v4684
        %v4723 = vsub.f32 %v4627, %v4686
        %v4724 = vsub.f32 %v4628, %v4688
        %v4725 = vsub.f32 %v4629, %v4690
        %v4726 = vsub.f32 %v4630, %v4692
        %v4727 = vsub.f32 %v4631, %v4694
        %v4728 = vsub.f32 %v4632, %v4696
        %v4729 = vmul.f32 %v4697, 1.442695
        %v4730 = vpow.pop %v4729
        %v4731 = vmul.f32 %v4698, 1.442695
        %v4732 = vpow.pop %v4731
        %v4733 = vmul.f32 %v4699, 1.442695
        %v4734 = vpow.pop %v4733
        %v4735 = vmul.f32 %v4700, 1.442695
        %v4736 = vpow.pop %v4735
        %v4737 = vmul.f32 %v4701, 1.442695
        %v4738 = vpow.pop %v4737
        %v4739 = vmul.f32 %v4702, 1.442695
        %v4740 = vpow.pop %v4739
        %v4741 = vmul.f32 %v4703, 1.442695
        %v4742 = vpow.pop %v4741
        %v4743 = vmul.f32 %v4704, 1.442695
        %v4744 = vpow.pop %v4743
        %v4745 = vmul.f32 %v4705, 1.442695
        %v4746 = vpow.pop %v4745
        %v4747 = vmul.f32 %v4706, 1.442695
        %v4748 = vpow.pop %v4747
        %v4749 = vmul.f32 %v4707, 1.442695
        %v4750 = vpow.pop %v4749
        %v4751 = vmul.f32 %v4708, 1.442695
        %v4752 = vpow.pop %v4751
        %v4753 = vmul.f32 %v4709, 1.442695
        %v4754 = vpow.pop %v4753
        %v4755 = vmul.f32 %v4710, 1.442695
        %v4756 = vpow.pop %v4755
        %v4757 = vmul.f32 %v4711, 1.442695
        %v4758 = vpow.pop %v4757
        %v4759 = vmul.f32 %v4712, 1.442695
        %v4760 = vpow.pop %v4759
        %v4761 = vmul.f32 %v4713, 1.442695
        %v4762 = vpow.pop %v4761
        %v4763 = vmul.f32 %v4714, 1.442695
        %v4764 = vpow.pop %v4763
        %v4765 = vmul.f32 %v4715, 1.442695
        %v4766 = vpow.pop %v4765
        %v4767 = vmul.f32 %v4716, 1.442695
        %v4768 = vpow.pop %v4767
        %v4769 = vmul.f32 %v4717, 1.442695
        %v4770 = vpow.pop %v4769
        %v4771 = vmul.f32 %v4718, 1.442695
        %v4772 = vpow.pop %v4771
        %v4773 = vmul.f32 %v4719, 1.442695
        %v4774 = vpow.pop %v4773
        %v4775 = vmul.f32 %v4720, 1.442695
        %v4776 = vpow.pop %v4775
        %v4777 = vmul.f32 %v4721, 1.442695
        %v4778 = vpow.pop %v4777
        %v4779 = vmul.f32 %v4722, 1.442695
        %v4780 = vpow.pop %v4779
        %v4781 = vmul.f32 %v4723, 1.442695
        %v4782 = vpow.pop %v4781
        %v4783 = vmul.f32 %v4724, 1.442695
        %v4784 = vpow.pop %v4783
        %v4785 = vmul.f32 %v4725, 1.442695
        %v4786 = vpow.pop %v4785
        %v4787 = vmul.f32 %v4726, 1.442695
        %v4788 = vpow.pop %v4787
        %v4789 = vmul.f32 %v4727, 1.442695
        %v4790 = vpow.pop %v4789
        %v4791 = vmul.f32 %v4728, 1.442695
        %v4792 = vpow.pop %v4791
        %4793 = vadd.xlane.f32.xlu0 %v4730
        %v4794 = vpop.xlane.xlu0 %4793
        %4795 = vadd.xlane.f32.xlu0 %v4732
        %v4796 = vpop.xlane.xlu0 %4795
        %4797 = vadd.xlane.f32.xlu0 %v4734
        %v4798 = vpop.xlane.xlu0 %4797
        %4799 = vadd.xlane.f32.xlu0 %v4736
        %v4800 = vpop.xlane.xlu0 %4799
        %4801 = vadd.xlane.f32.xlu0 %v4738
        %v4802 = vpop.xlane.xlu0 %4801
        %4803 = vadd.xlane.f32.xlu0 %v4740
        %v4804 = vpop.xlane.xlu0 %4803
        %4805 = vadd.xlane.f32.xlu0 %v4742
        %v4806 = vpop.xlane.xlu0 %4805
        %4807 = vadd.xlane.f32.xlu0 %v4744
        %v4808 = vpop.xlane.xlu0 %4807
        %4809 = vadd.xlane.f32.xlu0 %v4746
        %v4810 = vpop.xlane.xlu0 %4809
        %4811 = vadd.xlane.f32.xlu0 %v4748
        %v4812 = vpop.xlane.xlu0 %4811
        %4813 = vadd.xlane.f32.xlu0 %v4750
        %v4814 = vpop.xlane.xlu0 %4813
        %4815 = vadd.xlane.f32.xlu0 %v4752
        %v4816 = vpop.xlane.xlu0 %4815
        %4817 = vadd.xlane.f32.xlu0 %v4754
        %v4818 = vpop.xlane.xlu0 %4817
        %4819 = vadd.xlane.f32.xlu0 %v4756
        %v4820 = vpop.xlane.xlu0 %4819
        %4821 = vadd.xlane.f32.xlu0 %v4758
        %v4822 = vpop.xlane.xlu0 %4821
        %4823 = vadd.xlane.f32.xlu0 %v4760
        %v4824 = vpop.xlane.xlu0 %4823
        %4825 = vadd.xlane.f32.xlu0 %v4762
        %v4826 = vpop.xlane.xlu0 %4825
        %4827 = vadd.xlane.f32.xlu0 %v4764
        %v4828 = vpop.xlane.xlu0 %4827
        %4829 = vadd.xlane.f32.xlu0 %v4766
        %v4830 = vpop.xlane.xlu0 %4829
        %4831 = vadd.xlane.f32.xlu0 %v4768
        %v4832 = vpop.xlane.xlu0 %4831
        %4833 = vadd.xlane.f32.xlu0 %v4770
        %v4834 = vpop.xlane.xlu0 %4833
        %4835 = vadd.xlane.f32.xlu0 %v4772
        %v4836 = vpop.xlane.xlu0 %4835
        %4837 = vadd.xlane.f32.xlu0 %v4774
        %v4838 = vpop.xlane.xlu0 %4837
        %4839 = vadd.xlane.f32.xlu0 %v4776
        %v4840 = vpop.xlane.xlu0 %4839
        %4841 = vadd.xlane.f32.xlu0 %v4778
        %v4842 = vpop.xlane.xlu0 %4841
        %4843 = vadd.xlane.f32.xlu0 %v4780
        %v4844 = vpop.xlane.xlu0 %4843
        %4845 = vadd.xlane.f32.xlu0 %v4782
        %v4846 = vpop.xlane.xlu0 %4845
        %4847 = vadd.xlane.f32.xlu0 %v4784
        %v4848 = vpop.xlane.xlu0 %4847
        %4849 = vadd.xlane.f32.xlu0 %v4786
        %v4850 = vpop.xlane.xlu0 %4849
        %4851 = vadd.xlane.f32.xlu0 %v4788
        %v4852 = vpop.xlane.xlu0 %4851
        %4853 = vadd.xlane.f32.xlu0 %v4790
        %v4854 = vpop.xlane.xlu0 %4853
        %4855 = vadd.xlane.f32.xlu0 %v4792
        %v4856 = vpop.xlane.xlu0 %4855
        %v4857 = vrcp.pop %v4794
        %v4858 = vrcp.pop %v4796
        %v4859 = vrcp.pop %v4798
        %v4860 = vrcp.pop %v4800
        %v4861 = vrcp.pop %v4802
        %v4862 = vrcp.pop %v4804
        %v4863 = vrcp.pop %v4806
        %v4864 = vrcp.pop %v4808
        %v4865 = vrcp.pop %v4810
        %v4866 = vrcp.pop %v4812
        %v4867 = vrcp.pop %v4814
        %v4868 = vrcp.pop %v4816
        %v4869 = vrcp.pop %v4818
        %v4870 = vrcp.pop %v4820
        %v4871 = vrcp.pop %v4822
        %v4872 = vrcp.pop %v4824
        %v4873 = vrcp.pop %v4826
        %v4874 = vrcp.pop %v4828
        %v4875 = vrcp.pop %v4830
        %v4876 = vrcp.pop %v4832
        %v4877 = vrcp.pop %v4834
        %v4878 = vrcp.pop %v4836
        %v4879 = vrcp.pop %v4838
        %v4880 = vrcp.pop %v4840
        %v4881 = vrcp.pop %v4842
        %v4882 = vrcp.pop %v4844
        %v4883 = vrcp.pop %v4846
        %v4884 = vrcp.pop %v4848
        %v4885 = vrcp.pop %v4850
        %v4886 = vrcp.pop %v4852
        %v4887 = vrcp.pop %v4854
        %v4888 = vrcp.pop %v4856
        %v4889 = vmul.f32 %v4730, %v4857
        %v4890 = vmul.f32 %v4732, %v4858
        %v4891 = vmul.f32 %v4734, %v4859
        %v4892 = vmul.f32 %v4736, %v4860
        %v4893 = vmul.f32 %v4738, %v4861
        %v4894 = vmul.f32 %v4740, %v4862
        %v4895 = vmul.f32 %v4742, %v4863
        %v4896 = vmul.f32 %v4744, %v4864
        %v4897 = vmul.f32 %v4746, %v4865
        %v4898 = vmul.f32 %v4748, %v4866
        %v4899 = vmul.f32 %v4750, %v4867
        %v4900 = vmul.f32 %v4752, %v4868
        %v4901 = vmul.f32 %v4754, %v4869
        %v4902 = vmul.f32 %v4756, %v4870
        %v4903 = vmul.f32 %v4758, %v4871
        %v4904 = vmul.f32 %v4760, %v4872
        %v4905 = vmul.f32 %v4762, %v4873
        %v4906 = vmul.f32 %v4764, %v4874
        %v4907 = vmul.f32 %v4766, %v4875
        %v4908 = vmul.f32 %v4768, %v4876
        %v4909 = vmul.f32 %v4770, %v4877
        %v4910 = vmul.f32 %v4772, %v4878
        %v4911 = vmul.f32 %v4774, %v4879
        %v4912 = vmul.f32 %v4776, %v4880
        %v4913 = vmul.f32 %v4778, %v4881
        %v4914 = vmul.f32 %v4780, %v4882
        %v4915 = vmul.f32 %v4782, %v4883
        %v4916 = vmul.f32 %v4784, %v4884
        %v4917 = vmul.f32 %v4786, %v4885
        %v4918 = vmul.f32 %v4788, %v4886
        %v4919 = vmul.f32 %v4790, %v4887
        %v4920 = vmul.f32 %v4792, %v4888
        %v4921 = vpack.c.bf16 %v4889, %v4889
        %v4922 = vpack.c.bf16 %v4890, %v4890
        %v4923 = vpack.c.bf16 %v4891, %v4891
        %v4924 = vpack.c.bf16 %v4892, %v4892
        %v4925 = vpack.c.bf16 %v4893, %v4893
        %v4926 = vpack.c.bf16 %v4894, %v4894
        %v4927 = vpack.c.bf16 %v4895, %v4895
        %v4928 = vpack.c.bf16 %v4896, %v4896
        %v4929 = vpack.c.bf16 %v4897, %v4897
        %v4930 = vpack.c.bf16 %v4898, %v4898
        %v4931 = vpack.c.bf16 %v4899, %v4899
        %v4932 = vpack.c.bf16 %v4900, %v4900
        %v4933 = vpack.c.bf16 %v4901, %v4901
        %v4934 = vpack.c.bf16 %v4902, %v4902
        %v4935 = vpack.c.bf16 %v4903, %v4903
        %v4936 = vpack.c.bf16 %v4904, %v4904
        %v4937 = vpack.c.bf16 %v4905, %v4905
        %v4938 = vpack.c.bf16 %v4906, %v4906
        %v4939 = vpack.c.bf16 %v4907, %v4907
        %v4940 = vpack.c.bf16 %v4908, %v4908
        %v4941 = vpack.c.bf16 %v4909, %v4909
        %v4942 = vpack.c.bf16 %v4910, %v4910
        %v4943 = vpack.c.bf16 %v4911, %v4911
        %v4944 = vpack.c.bf16 %v4912, %v4912
        %v4945 = vpack.c.bf16 %v4913, %v4913
        %v4946 = vpack.c.bf16 %v4914, %v4914
        %v4947 = vpack.c.bf16 %v4915, %v4915
        %v4948 = vpack.c.bf16 %v4916, %v4916
        %v4949 = vpack.c.bf16 %v4917, %v4917
        %v4950 = vpack.c.bf16 %v4918, %v4918
        %v4951 = vpack.c.bf16 %v4919, %v4919
        %v4952 = vpack.c.bf16 %v4920, %v4920
        %v4969 = vunpack.c.l.b16 %v4921
        %v4970 = vunpack.c.l.b16 %v4922
        %v4971 = vunpack.c.l.b16 %v4923
        %v4972 = vunpack.c.l.b16 %v4924
        %v4973 = vunpack.c.l.b16 %v4925
        %v4974 = vunpack.c.l.b16 %v4926
        %v4975 = vunpack.c.l.b16 %v4927
        %v4976 = vunpack.c.l.b16 %v4928
        %v4977 = vunpack.c.l.b16 %v4929
        %v4978 = vunpack.c.l.b16 %v4930
        %v4979 = vunpack.c.l.b16 %v4931
        %v4980 = vunpack.c.l.b16 %v4932
        %v4981 = vunpack.c.l.b16 %v4933
        %v4982 = vunpack.c.l.b16 %v4934
        %v4983 = vunpack.c.l.b16 %v4935
        %v4984 = vunpack.c.l.b16 %v4936
        %v4985 = vpack.c.b16 %v4970, %v4969
        %v4986 = vpack.c.b16 %v4972, %v4971
        %v4987 = vpack.c.b16 %v4974, %v4973
        %v4988 = vpack.c.b16 %v4976, %v4975
        %v4989 = vpack.c.b16 %v4978, %v4977
        %v4990 = vpack.c.b16 %v4980, %v4979
        %v4991 = vpack.c.b16 %v4982, %v4981
        %v4992 = vpack.c.b16 %v4984, %v4983
        %5001 = vrot.lane.b32.xlu0 %v1642, 32
        %v5002 = vpop.permute.xlu0 %5001
        %5003 = vrot.lane.b32.xlu0 %v1643, 32
        %v5004 = vpop.permute.xlu0 %5003
        %5005 = vrot.lane.b32.xlu0 %v1644, 32
        %v5006 = vpop.permute.xlu0 %5005
        %5007 = vrot.lane.b32.xlu0 %v1645, 32
        %v5008 = vpop.permute.xlu0 %5007
        %5009 = vrot.lane.b32.xlu0 %v1646, 32
        %v5010 = vpop.permute.xlu0 %5009
        %5011 = vrot.lane.b32.xlu0 %v1647, 32
        %v5012 = vpop.permute.xlu0 %5011
        %5013 = vrot.lane.b32.xlu0 %v1648, 32
        %v5014 = vpop.permute.xlu0 %5013
        %5015 = vrot.lane.b32.xlu0 %v1649, 32
        %v5016 = vpop.permute.xlu0 %5015
        %5025 = vmatpush.bf16.msra.mxu0 %v5016
        %5026 = vmatpush.bf16.msra.mxu0 %v5014
        %5027 = vmatpush.bf16.msra.mxu0 %v5012
        %5028 = vmatpush.bf16.msra.mxu0 %v5010
        %5029 = vmatpush.bf16.msra.mxu0 %v5008
        %5030 = vmatpush.bf16.msra.mxu0 %v5006
        %5031 = vmatpush.bf16.msra.mxu0 %v5004
        %5032 = vmatpush.bf16.msra.mxu0 %v5002
        %5033 = vmatmul.bf16.gmra.mxu0 %v4985
        %v5034 = vpop.f32.mrf.mxu0
        %v5035 = vadd.f32 0.0, %v5034
        %v5036 = vpop.f32.mrf.mxu0
        %v5037 = vadd.f32 0.0, %v5036
        %5038 = vmatmul.bf16.gmra.mxu0 %v4986
        %v5039 = vpop.f32.mrf.mxu0
        %v5040 = vadd.f32 0.0, %v5039
        %v5041 = vpop.f32.mrf.mxu0
        %v5042 = vadd.f32 0.0, %v5041
        %5043 = vmatmul.bf16.gmra.mxu0 %v4987
        %v5044 = vpop.f32.mrf.mxu0
        %v5045 = vadd.f32 0.0, %v5044
        %v5046 = vpop.f32.mrf.mxu0
        %v5047 = vadd.f32 0.0, %v5046
        %5048 = vmatmul.bf16.gmra.mxu0 %v4988
        %v5049 = vpop.f32.mrf.mxu0
        %v5050 = vadd.f32 0.0, %v5049
        %v5051 = vpop.f32.mrf.mxu0
        %v5052 = vadd.f32 0.0, %v5051
        %5053 = vmatmul.bf16.gmra.mxu0 %v4989
        %v5054 = vpop.f32.mrf.mxu0
        %v5055 = vadd.f32 0.0, %v5054
        %v5056 = vpop.f32.mrf.mxu0
        %v5057 = vadd.f32 0.0, %v5056
        %5058 = vmatmul.bf16.gmra.mxu0 %v4990
        %v5059 = vpop.f32.mrf.mxu0
        %v5060 = vadd.f32 0.0, %v5059
        %v5061 = vpop.f32.mrf.mxu0
        %v5062 = vadd.f32 0.0, %v5061
        %5063 = vmatmul.bf16.gmra.mxu0 %v4991
        %v5064 = vpop.f32.mrf.mxu0
        %v5065 = vadd.f32 0.0, %v5064
        %v5066 = vpop.f32.mrf.mxu0
        %v5067 = vadd.f32 0.0, %v5066
        %5068 = vmatmul.bf16.gmra.mxu0 %v4992
        %v5069 = vpop.f32.mrf.mxu0
        %v5070 = vadd.f32 0.0, %v5069
        %v5071 = vpop.f32.mrf.mxu0
        %v5072 = vadd.f32 0.0, %v5071
        %5073 = vdwg.mxu0
        %v5090 = vunpack.c.l.b16 %v4937
        %v5091 = vunpack.c.l.b16 %v4938
        %v5092 = vunpack.c.l.b16 %v4939
        %v5093 = vunpack.c.l.b16 %v4940
        %v5094 = vunpack.c.l.b16 %v4941
        %v5095 = vunpack.c.l.b16 %v4942
        %v5096 = vunpack.c.l.b16 %v4943
        %v5097 = vunpack.c.l.b16 %v4944
        %v5098 = vunpack.c.l.b16 %v4945
        %v5099 = vunpack.c.l.b16 %v4946
        %v5100 = vunpack.c.l.b16 %v4947
        %v5101 = vunpack.c.l.b16 %v4948
        %v5102 = vunpack.c.l.b16 %v4949
        %v5103 = vunpack.c.l.b16 %v4950
        %v5104 = vunpack.c.l.b16 %v4951
        %v5105 = vunpack.c.l.b16 %v4952
        %v5106 = vpack.c.b16 %v5091, %v5090
        %v5107 = vpack.c.b16 %v5093, %v5092
        %v5108 = vpack.c.b16 %v5095, %v5094
        %v5109 = vpack.c.b16 %v5097, %v5096
        %v5110 = vpack.c.b16 %v5099, %v5098
        %v5111 = vpack.c.b16 %v5101, %v5100
        %v5112 = vpack.c.b16 %v5103, %v5102
        %v5113 = vpack.c.b16 %v5105, %v5104
        %5122 = vrot.lane.b32.xlu0 %v1787, 32
        %v5123 = vpop.permute.xlu0 %5122
        %5124 = vrot.lane.b32.xlu0 %v1788, 32
        %v5125 = vpop.permute.xlu0 %5124
        %5126 = vrot.lane.b32.xlu0 %v1789, 32
        %v5127 = vpop.permute.xlu0 %5126
        %5128 = vrot.lane.b32.xlu0 %v1790, 32
        %v5129 = vpop.permute.xlu0 %5128
        %5130 = vrot.lane.b32.xlu0 %v1791, 32
        %v5131 = vpop.permute.xlu0 %5130
        %5132 = vrot.lane.b32.xlu0 %v1792, 32
        %v5133 = vpop.permute.xlu0 %5132
        %5134 = vrot.lane.b32.xlu0 %v1793, 32
        %v5135 = vpop.permute.xlu0 %5134
        %5136 = vrot.lane.b32.xlu0 %v1794, 32
        %v5137 = vpop.permute.xlu0 %5136
        %5146 = vmatpush.bf16.msra.mxu0 %v5137
        %5147 = vmatpush.bf16.msra.mxu0 %v5135
        %5148 = vmatpush.bf16.msra.mxu0 %v5133
        %5149 = vmatpush.bf16.msra.mxu0 %v5131
        %5150 = vmatpush.bf16.msra.mxu0 %v5129
        %5151 = vmatpush.bf16.msra.mxu0 %v5127
        %5152 = vmatpush.bf16.msra.mxu0 %v5125
        %5153 = vmatpush.bf16.msra.mxu0 %v5123
        %5154 = vmatmul.bf16.gmra.mxu0 %v5106
        %v5155 = vpop.f32.mrf.mxu0
        %v5156 = vadd.f32 0.0, %v5155
        %v5157 = vpop.f32.mrf.mxu0
        %v5158 = vadd.f32 0.0, %v5157
        %5159 = vmatmul.bf16.gmra.mxu0 %v5107
        %v5160 = vpop.f32.mrf.mxu0
        %v5161 = vadd.f32 0.0, %v5160
        %v5162 = vpop.f32.mrf.mxu0
        %v5163 = vadd.f32 0.0, %v5162
        %5164 = vmatmul.bf16.gmra.mxu0 %v5108
        %v5165 = vpop.f32.mrf.mxu0
        %v5166 = vadd.f32 0.0, %v5165
        %v5167 = vpop.f32.mrf.mxu0
        %v5168 = vadd.f32 0.0, %v5167
        %5169 = vmatmul.bf16.gmra.mxu0 %v5109
        %v5170 = vpop.f32.mrf.mxu0
        %v5171 = vadd.f32 0.0, %v5170
        %v5172 = vpop.f32.mrf.mxu0
        %v5173 = vadd.f32 0.0, %v5172
        %5174 = vmatmul.bf16.gmra.mxu0 %v5110
        %v5175 = vpop.f32.mrf.mxu0
        %v5176 = vadd.f32 0.0, %v5175
        %v5177 = vpop.f32.mrf.mxu0
        %v5178 = vadd.f32 0.0, %v5177
        %5179 = vmatmul.bf16.gmra.mxu0 %v5111
        %v5180 = vpop.f32.mrf.mxu0
        %v5181 = vadd.f32 0.0, %v5180
        %v5182 = vpop.f32.mrf.mxu0
        %v5183 = vadd.f32 0.0, %v5182
        %5184 = vmatmul.bf16.gmra.mxu0 %v5112
        %v5185 = vpop.f32.mrf.mxu0
        %v5186 = vadd.f32 0.0, %v5185
        %v5187 = vpop.f32.mrf.mxu0
        %v5188 = vadd.f32 0.0, %v5187
        %5189 = vmatmul.bf16.gmra.mxu0 %v5113
        %v5190 = vpop.f32.mrf.mxu0
        %v5191 = vadd.f32 0.0, %v5190
        %v5192 = vpop.f32.mrf.mxu0
        %v5193 = vadd.f32 0.0, %v5192
        %5194 = vdwg.mxu0
        %v5195 = vpack.c.bf16 %v5035, %v5035
        %v5196 = vpack.c.bf16 %v5037, %v5037
        %v5197 = vpack.c.bf16 %v5040, %v5040
        %v5198 = vpack.c.bf16 %v5042, %v5042
        %v5199 = vpack.c.bf16 %v5045, %v5045
        %v5200 = vpack.c.bf16 %v5047, %v5047
        %v5201 = vpack.c.bf16 %v5050, %v5050
        %v5202 = vpack.c.bf16 %v5052, %v5052
        %v5203 = vpack.c.bf16 %v5055, %v5055
        %v5204 = vpack.c.bf16 %v5057, %v5057
        %v5205 = vpack.c.bf16 %v5060, %v5060
        %v5206 = vpack.c.bf16 %v5062, %v5062
        %v5207 = vpack.c.bf16 %v5065, %v5065
        %v5208 = vpack.c.bf16 %v5067, %v5067
        %v5209 = vpack.c.bf16 %v5070, %v5070
        %v5210 = vpack.c.bf16 %v5072, %v5072
        %v5211 = vpack.c.bf16 %v5156, %v5156
        %v5212 = vpack.c.bf16 %v5158, %v5158
        %v5213 = vpack.c.bf16 %v5161, %v5161
        %v5214 = vpack.c.bf16 %v5163, %v5163
        %v5215 = vpack.c.bf16 %v5166, %v5166
        %v5216 = vpack.c.bf16 %v5168, %v5168
        %v5217 = vpack.c.bf16 %v5171, %v5171
        %v5218 = vpack.c.bf16 %v5173, %v5173
        %v5219 = vpack.c.bf16 %v5176, %v5176
        %v5220 = vpack.c.bf16 %v5178, %v5178
        %v5221 = vpack.c.bf16 %v5181, %v5181
        %v5222 = vpack.c.bf16 %v5183, %v5183
        %v5223 = vpack.c.bf16 %v5186, %v5186
        %v5224 = vpack.c.bf16 %v5188, %v5188
        %v5225 = vpack.c.bf16 %v5191, %v5191
        %v5226 = vpack.c.bf16 %v5193, %v5193
        %5259 = vrot.lane.b32.xlu0 %v5195, 96
        %v5260 = vpop.permute.xlu0 %5259
        %5261 = vrot.lane.b32.xlu0 %v5196, 96
        %v5262 = vpop.permute.xlu0 %5261
        %5263 = vrot.lane.b32.xlu0 %v5197, 96
        %v5264 = vpop.permute.xlu0 %5263
        %5265 = vrot.lane.b32.xlu0 %v5198, 96
        %v5266 = vpop.permute.xlu0 %5265
        %5267 = vrot.lane.b32.xlu0 %v5199, 96
        %v5268 = vpop.permute.xlu0 %5267
        %5269 = vrot.lane.b32.xlu0 %v5200, 96
        %v5270 = vpop.permute.xlu0 %5269
        %5271 = vrot.lane.b32.xlu0 %v5201, 96
        %v5272 = vpop.permute.xlu0 %5271
        %5273 = vrot.lane.b32.xlu0 %v5202, 96
        %v5274 = vpop.permute.xlu0 %5273
        %5275 = vrot.lane.b32.xlu0 %v5203, 96
        %v5276 = vpop.permute.xlu0 %5275
        %5277 = vrot.lane.b32.xlu0 %v5204, 96
        %v5278 = vpop.permute.xlu0 %5277
        %5279 = vrot.lane.b32.xlu0 %v5205, 96
        %v5280 = vpop.permute.xlu0 %5279
        %5281 = vrot.lane.b32.xlu0 %v5206, 96
        %v5282 = vpop.permute.xlu0 %5281
        %5283 = vrot.lane.b32.xlu0 %v5207, 96
        %v5284 = vpop.permute.xlu0 %5283
        %5285 = vrot.lane.b32.xlu0 %v5208, 96
        %v5286 = vpop.permute.xlu0 %5285
        %5287 = vrot.lane.b32.xlu0 %v5209, 96
        %v5288 = vpop.permute.xlu0 %5287
        %5289 = vrot.lane.b32.xlu0 %v5210, 96
        %v5290 = vpop.permute.xlu0 %5289
        %5291 = vrot.lane.b32.xlu0 %v5211, 96
        %v5292 = vpop.permute.xlu0 %5291
        %5293 = vrot.lane.b32.xlu0 %v5212, 96
        %v5294 = vpop.permute.xlu0 %5293
        %5295 = vrot.lane.b32.xlu0 %v5213, 96
        %v5296 = vpop.permute.xlu0 %5295
        %5297 = vrot.lane.b32.xlu0 %v5214, 96
        %v5298 = vpop.permute.xlu0 %5297
        %5299 = vrot.lane.b32.xlu0 %v5215, 96
        %v5300 = vpop.permute.xlu0 %5299
        %5301 = vrot.lane.b32.xlu0 %v5216, 96
        %v5302 = vpop.permute.xlu0 %5301
        %5303 = vrot.lane.b32.xlu0 %v5217, 96
        %v5304 = vpop.permute.xlu0 %5303
        %5305 = vrot.lane.b32.xlu0 %v5218, 96
        %v5306 = vpop.permute.xlu0 %5305
        %5307 = vrot.lane.b32.xlu0 %v5219, 96
        %v5308 = vpop.permute.xlu0 %5307
        %5309 = vrot.lane.b32.xlu0 %v5220, 96
        %v5310 = vpop.permute.xlu0 %5309
        %5311 = vrot.lane.b32.xlu0 %v5221, 96
        %v5312 = vpop.permute.xlu0 %5311
        %5313 = vrot.lane.b32.xlu0 %v5222, 96
        %v5314 = vpop.permute.xlu0 %5313
        %5315 = vrot.lane.b32.xlu0 %v5223, 96
        %v5316 = vpop.permute.xlu0 %5315
        %5317 = vrot.lane.b32.xlu0 %v5224, 96
        %v5318 = vpop.permute.xlu0 %5317
        %5319 = vrot.lane.b32.xlu0 %v5225, 96
        %v5320 = vpop.permute.xlu0 %5319
        %5321 = vrot.lane.b32.xlu0 %v5226, 96
        %v5322 = vpop.permute.xlu0 %5321
        %vm5355 = vcmask 1044224
        %5356 = vst.msk [vmem:[#allocation2] sm:$0xf] %vm5355, %v5260
        %5357 = vst.msk [vmem:[#allocation2 + $0x4] sm:$0xf] %vm5355, %v5262
        %5358 = vst.msk [vmem:[#allocation2 + $0x8] sm:$0xf] %vm5355, %v5264
        %5359 = vst.msk [vmem:[#allocation2 + $0xc] sm:$0xf] %vm5355, %v5266
        %5360 = vst.msk [vmem:[#allocation2 + $0x10] sm:$0xf] %vm5355, %v5268
        %5361 = vst.msk [vmem:[#allocation2 + $0x14] sm:$0xf] %vm5355, %v5270
        %5362 = vst.msk [vmem:[#allocation2 + $0x18] sm:$0xf] %vm5355, %v5272
        %5363 = vst.msk [vmem:[#allocation2 + $0x1c] sm:$0xf] %vm5355, %v5274
        %5364 = vst.msk [vmem:[#allocation2 + $0x20] sm:$0xf] %vm5355, %v5276
        %5365 = vst.msk [vmem:[#allocation2 + $0x24] sm:$0xf] %vm5355, %v5278
        %5366 = vst.msk [vmem:[#allocation2 + $0x28] sm:$0xf] %vm5355, %v5280
        %5367 = vst.msk [vmem:[#allocation2 + $0x2c] sm:$0xf] %vm5355, %v5282
        %5368 = vst.msk [vmem:[#allocation2 + $0x30] sm:$0xf] %vm5355, %v5284
        %5369 = vst.msk [vmem:[#allocation2 + $0x34] sm:$0xf] %vm5355, %v5286
        %5370 = vst.msk [vmem:[#allocation2 + $0x38] sm:$0xf] %vm5355, %v5288
        %5371 = vst.msk [vmem:[#allocation2 + $0x3c] sm:$0xf] %vm5355, %v5290
        %5372 = vst.msk [vmem:[#allocation2 + $0x40] sm:$0xf] %vm5355, %v5292
        %5373 = vst.msk [vmem:[#allocation2 + $0x44] sm:$0xf] %vm5355, %v5294
        %5374 = vst.msk [vmem:[#allocation2 + $0x48] sm:$0xf] %vm5355, %v5296
        %5375 = vst.msk [vmem:[#allocation2 + $0x4c] sm:$0xf] %vm5355, %v5298
        %5376 = vst.msk [vmem:[#allocation2 + $0x50] sm:$0xf] %vm5355, %v5300
        %5377 = vst.msk [vmem:[#allocation2 + $0x54] sm:$0xf] %vm5355, %v5302
        %5378 = vst.msk [vmem:[#allocation2 + $0x58] sm:$0xf] %vm5355, %v5304
        %5379 = vst.msk [vmem:[#allocation2 + $0x5c] sm:$0xf] %vm5355, %v5306
        %5380 = vst.msk [vmem:[#allocation2 + $0x60] sm:$0xf] %vm5355, %v5308
        %5381 = vst.msk [vmem:[#allocation2 + $0x64] sm:$0xf] %vm5355, %v5310
        %5382 = vst.msk [vmem:[#allocation2 + $0x68] sm:$0xf] %vm5355, %v5312
        %5383 = vst.msk [vmem:[#allocation2 + $0x6c] sm:$0xf] %vm5355, %v5314
        %5384 = vst.msk [vmem:[#allocation2 + $0x70] sm:$0xf] %vm5355, %v5316
        %5385 = vst.msk [vmem:[#allocation2 + $0x74] sm:$0xf] %vm5355, %v5318
        %5386 = vst.msk [vmem:[#allocation2 + $0x78] sm:$0xf] %vm5355, %v5320
        %5387 = vst.msk [vmem:[#allocation2 + $0x7c] sm:$0xf] %vm5355, %v5322
        %v5388 = vld [vmem:[#allocation2] sm:$0xf]
        %v5389 = vld [vmem:[#allocation2 + $0x4] sm:$0xf]
        %v5390 = vld [vmem:[#allocation2 + $0x8] sm:$0xf]
        %v5391 = vld [vmem:[#allocation2 + $0xc] sm:$0xf]
        %v5392 = vld [vmem:[#allocation2 + $0x10] sm:$0xf]
        %v5393 = vld [vmem:[#allocation2 + $0x14] sm:$0xf]
        %v5394 = vld [vmem:[#allocation2 + $0x18] sm:$0xf]
        %v5395 = vld [vmem:[#allocation2 + $0x1c] sm:$0xf]
        %v5396 = vld [vmem:[#allocation2 + $0x20] sm:$0xf]
        %v5397 = vld [vmem:[#allocation2 + $0x24] sm:$0xf]
        %v5398 = vld [vmem:[#allocation2 + $0x28] sm:$0xf]
        %v5399 = vld [vmem:[#allocation2 + $0x2c] sm:$0xf]
        %v5400 = vld [vmem:[#allocation2 + $0x30] sm:$0xf]
        %v5401 = vld [vmem:[#allocation2 + $0x34] sm:$0xf]
        %v5402 = vld [vmem:[#allocation2 + $0x38] sm:$0xf]
        %v5403 = vld [vmem:[#allocation2 + $0x3c] sm:$0xf]
        %v5404 = vld [vmem:[#allocation2 + $0x40] sm:$0xf]
        %v5405 = vld [vmem:[#allocation2 + $0x44] sm:$0xf]
        %v5406 = vld [vmem:[#allocation2 + $0x48] sm:$0xf]
        %v5407 = vld [vmem:[#allocation2 + $0x4c] sm:$0xf]
        %v5408 = vld [vmem:[#allocation2 + $0x50] sm:$0xf]
        %v5409 = vld [vmem:[#allocation2 + $0x54] sm:$0xf]
        %v5410 = vld [vmem:[#allocation2 + $0x58] sm:$0xf]
        %v5411 = vld [vmem:[#allocation2 + $0x5c] sm:$0xf]
        %v5412 = vld [vmem:[#allocation2 + $0x60] sm:$0xf]
        %v5413 = vld [vmem:[#allocation2 + $0x64] sm:$0xf]
        %v5414 = vld [vmem:[#allocation2 + $0x68] sm:$0xf]
        %v5415 = vld [vmem:[#allocation2 + $0x6c] sm:$0xf]
        %v5416 = vld [vmem:[#allocation2 + $0x70] sm:$0xf]
        %v5417 = vld [vmem:[#allocation2 + $0x74] sm:$0xf]
        %v5418 = vld [vmem:[#allocation2 + $0x78] sm:$0xf]
        %v5419 = vld [vmem:[#allocation2 + $0x7c] sm:$0xf]
        %v5420 = vld [vmem:[%s2] sm:$0xf]
        %v5421 = vld [vmem:[%s2 + $0x4] sm:$0xf]
        %v5422 = vld [vmem:[%s2 + $0x8] sm:$0xf]
        %v5423 = vld [vmem:[%s2 + $0xc] sm:$0xf]
        %v5424 = vld [vmem:[%s2 + $0x10] sm:$0xf]
        %v5425 = vld [vmem:[%s2 + $0x14] sm:$0xf]
        %v5426 = vld [vmem:[%s2 + $0x18] sm:$0xf]
        %v5427 = vld [vmem:[%s2 + $0x1c] sm:$0xf]
        %v5428 = vld [vmem:[%s2 + $0x20] sm:$0xf]
        %v5429 = vld [vmem:[%s2 + $0x24] sm:$0xf]
        %v5430 = vld [vmem:[%s2 + $0x28] sm:$0xf]
        %v5431 = vld [vmem:[%s2 + $0x2c] sm:$0xf]
        %v5432 = vld [vmem:[%s2 + $0x30] sm:$0xf]
        %v5433 = vld [vmem:[%s2 + $0x34] sm:$0xf]
        %v5434 = vld [vmem:[%s2 + $0x38] sm:$0xf]
        %v5435 = vld [vmem:[%s2 + $0x3c] sm:$0xf]
        %v5468 = vunpack.c.l.b16 %v5388
        %v5469 = vunpack.c.l.b16 %v5389
        %v5470 = vunpack.c.l.b16 %v5390
        %v5471 = vunpack.c.l.b16 %v5391
        %v5472 = vunpack.c.l.b16 %v5392
        %v5473 = vunpack.c.l.b16 %v5393
        %v5474 = vunpack.c.l.b16 %v5394
        %v5475 = vunpack.c.l.b16 %v5395
        %v5476 = vunpack.c.l.b16 %v5396
        %v5477 = vunpack.c.l.b16 %v5397
        %v5478 = vunpack.c.l.b16 %v5398
        %v5479 = vunpack.c.l.b16 %v5399
        %v5480 = vunpack.c.l.b16 %v5400
        %v5481 = vunpack.c.l.b16 %v5401
        %v5482 = vunpack.c.l.b16 %v5402
        %v5483 = vunpack.c.l.b16 %v5403
        %v5484 = vunpack.c.l.b16 %v5404
        %v5485 = vunpack.c.l.b16 %v5405
        %v5486 = vunpack.c.l.b16 %v5406
        %v5487 = vunpack.c.l.b16 %v5407
        %v5488 = vunpack.c.l.b16 %v5408
        %v5489 = vunpack.c.l.b16 %v5409
        %v5490 = vunpack.c.l.b16 %v5410
        %v5491 = vunpack.c.l.b16 %v5411
        %v5492 = vunpack.c.l.b16 %v5412
        %v5493 = vunpack.c.l.b16 %v5413
        %v5494 = vunpack.c.l.b16 %v5414
        %v5495 = vunpack.c.l.b16 %v5415
        %v5496 = vunpack.c.l.b16 %v5416
        %v5497 = vunpack.c.l.b16 %v5417
        %v5498 = vunpack.c.l.b16 %v5418
        %v5499 = vunpack.c.l.b16 %v5419
        %v5500 = vpack.c.b16 %v5469, %v5468
        %v5501 = vpack.c.b16 %v5471, %v5470
        %v5502 = vpack.c.b16 %v5473, %v5472
        %v5503 = vpack.c.b16 %v5475, %v5474
        %v5504 = vpack.c.b16 %v5477, %v5476
        %v5505 = vpack.c.b16 %v5479, %v5478
        %v5506 = vpack.c.b16 %v5481, %v5480
        %v5507 = vpack.c.b16 %v5483, %v5482
        %v5508 = vpack.c.b16 %v5485, %v5484
        %v5509 = vpack.c.b16 %v5487, %v5486
        %v5510 = vpack.c.b16 %v5489, %v5488
        %v5511 = vpack.c.b16 %v5491, %v5490
        %v5512 = vpack.c.b16 %v5493, %v5492
        %v5513 = vpack.c.b16 %v5495, %v5494
        %v5514 = vpack.c.b16 %v5497, %v5496
        %v5515 = vpack.c.b16 %v5499, %v5498
        %v5548 = vunpack.c.l.b16 %v5420
        %v5549 = vunpack.c.l.b16 %v5421
        %v5550 = vunpack.c.l.b16 %v5422
        %v5551 = vunpack.c.l.b16 %v5423
        %v5552 = vunpack.c.l.b16 %v5424
        %v5553 = vunpack.c.l.b16 %v5425
        %v5554 = vunpack.c.l.b16 %v5426
        %v5555 = vunpack.c.l.b16 %v5427
        %v5556 = vunpack.c.l.b16 %v5428
        %v5557 = vunpack.c.l.b16 %v5429
        %v5558 = vunpack.c.l.b16 %v5430
        %v5559 = vunpack.c.l.b16 %v5431
        %v5560 = vunpack.c.l.b16 %v5432
        %v5561 = vunpack.c.l.b16 %v5433
        %v5562 = vunpack.c.l.b16 %v5434
        %v5563 = vunpack.c.l.b16 %v5435
        %v5564 = vpack.c.b16 %v5549, %v5548
        %v5565 = vpack.c.b16 %v5551, %v5550
        %v5566 = vpack.c.b16 %v5553, %v5552
        %v5567 = vpack.c.b16 %v5555, %v5554
        %v5568 = vpack.c.b16 %v5557, %v5556
        %v5569 = vpack.c.b16 %v5559, %v5558
        %v5570 = vpack.c.b16 %v5561, %v5560
        %v5571 = vpack.c.b16 %v5563, %v5562
        %5580 = vmatpush.bf16.msra.mxu0 %v5571
        %5581 = vmatpush.bf16.msra.mxu0 %v5570
        %5582 = vmatpush.bf16.msra.mxu0 %v5569
        %5583 = vmatpush.bf16.msra.mxu0 %v5568
        %5584 = vmatpush.bf16.msra.mxu0 %v5567
        %5585 = vmatpush.bf16.msra.mxu0 %v5566
        %5586 = vmatpush.bf16.msra.mxu0 %v5565
        %5587 = vmatpush.bf16.msra.mxu0 %v5564
        %5588 = vmatmul.bf16.gmra.mxu0 %v5500
        %v5589 = vpop.f32.mrf.mxu0
        %v5590 = vadd.f32 0.0, %v5589
        %v5591 = vpop.f32.mrf.mxu0
        %v5592 = vadd.f32 0.0, %v5591
        %5593 = vmatmul.bf16.gmra.mxu0 %v5501
        %v5594 = vpop.f32.mrf.mxu0
        %v5595 = vadd.f32 0.0, %v5594
        %v5596 = vpop.f32.mrf.mxu0
        %v5597 = vadd.f32 0.0, %v5596
        %5598 = vmatmul.bf16.gmra.mxu0 %v5502
        %v5599 = vpop.f32.mrf.mxu0
        %v5600 = vadd.f32 0.0, %v5599
        %v5601 = vpop.f32.mrf.mxu0
        %v5602 = vadd.f32 0.0, %v5601
        %5603 = vmatmul.bf16.gmra.mxu0 %v5503
        %v5604 = vpop.f32.mrf.mxu0
        %v5605 = vadd.f32 0.0, %v5604
        %v5606 = vpop.f32.mrf.mxu0
        %v5607 = vadd.f32 0.0, %v5606
        %5608 = vmatmul.bf16.gmra.mxu0 %v5504
        %v5609 = vpop.f32.mrf.mxu0
        %v5610 = vadd.f32 0.0, %v5609
        %v5611 = vpop.f32.mrf.mxu0
        %v5612 = vadd.f32 0.0, %v5611
        %5613 = vmatmul.bf16.gmra.mxu0 %v5505
        %v5614 = vpop.f32.mrf.mxu0
        %v5615 = vadd.f32 0.0, %v5614
        %v5616 = vpop.f32.mrf.mxu0
        %v5617 = vadd.f32 0.0, %v5616
        %5618 = vmatmul.bf16.gmra.mxu0 %v5506
        %v5619 = vpop.f32.mrf.mxu0
        %v5620 = vadd.f32 0.0, %v5619
        %v5621 = vpop.f32.mrf.mxu0
        %v5622 = vadd.f32 0.0, %v5621
        %5623 = vmatmul.bf16.gmra.mxu0 %v5507
        %v5624 = vpop.f32.mrf.mxu0
        %v5625 = vadd.f32 0.0, %v5624
        %v5626 = vpop.f32.mrf.mxu0
        %v5627 = vadd.f32 0.0, %v5626
        %5628 = vmatmul.bf16.gmra.mxu0 %v5508
        %v5629 = vpop.f32.mrf.mxu0
        %v5630 = vadd.f32 0.0, %v5629
        %v5631 = vpop.f32.mrf.mxu0
        %v5632 = vadd.f32 0.0, %v5631
        %5633 = vmatmul.bf16.gmra.mxu0 %v5509
        %v5634 = vpop.f32.mrf.mxu0
        %v5635 = vadd.f32 0.0, %v5634
        %v5636 = vpop.f32.mrf.mxu0
        %v5637 = vadd.f32 0.0, %v5636
        %5638 = vmatmul.bf16.gmra.mxu0 %v5510
        %v5639 = vpop.f32.mrf.mxu0
        %v5640 = vadd.f32 0.0, %v5639
        %v5641 = vpop.f32.mrf.mxu0
        %v5642 = vadd.f32 0.0, %v5641
        %5643 = vmatmul.bf16.gmra.mxu0 %v5511
        %v5644 = vpop.f32.mrf.mxu0
        %v5645 = vadd.f32 0.0, %v5644
        %v5646 = vpop.f32.mrf.mxu0
        %v5647 = vadd.f32 0.0, %v5646
        %5648 = vmatmul.bf16.gmra.mxu0 %v5512
        %v5649 = vpop.f32.mrf.mxu0
        %v5650 = vadd.f32 0.0, %v5649
        %v5651 = vpop.f32.mrf.mxu0
        %v5652 = vadd.f32 0.0, %v5651
        %5653 = vmatmul.bf16.gmra.mxu0 %v5513
        %v5654 = vpop.f32.mrf.mxu0
        %v5655 = vadd.f32 0.0, %v5654
        %v5656 = vpop.f32.mrf.mxu0
        %v5657 = vadd.f32 0.0, %v5656
        %5658 = vmatmul.bf16.gmra.mxu0 %v5514
        %v5659 = vpop.f32.mrf.mxu0
        %v5660 = vadd.f32 0.0, %v5659
        %v5661 = vpop.f32.mrf.mxu0
        %v5662 = vadd.f32 0.0, %v5661
        %5663 = vmatmul.bf16.gmra.mxu0 %v5515
        %v5664 = vpop.f32.mrf.mxu0
        %v5665 = vadd.f32 0.0, %v5664
        %v5666 = vpop.f32.mrf.mxu0
        %v5667 = vadd.f32 0.0, %v5666
        %5668 = vdwg.mxu0
        %v5669 = vpack.c.bf16 %v5590, %v5590
        %v5670 = vpack.c.bf16 %v5592, %v5592
        %v5671 = vpack.c.bf16 %v5595, %v5595
        %v5672 = vpack.c.bf16 %v5597, %v5597
        %v5673 = vpack.c.bf16 %v5600, %v5600
        %v5674 = vpack.c.bf16 %v5602, %v5602
        %v5675 = vpack.c.bf16 %v5605, %v5605
        %v5676 = vpack.c.bf16 %v5607, %v5607
        %v5677 = vpack.c.bf16 %v5610, %v5610
        %v5678 = vpack.c.bf16 %v5612, %v5612
        %v5679 = vpack.c.bf16 %v5615, %v5615
        %v5680 = vpack.c.bf16 %v5617, %v5617
        %v5681 = vpack.c.bf16 %v5620, %v5620
        %v5682 = vpack.c.bf16 %v5622, %v5622
        %v5683 = vpack.c.bf16 %v5625, %v5625
        %v5684 = vpack.c.bf16 %v5627, %v5627
        %v5685 = vpack.c.bf16 %v5630, %v5630
        %v5686 = vpack.c.bf16 %v5632, %v5632
        %v5687 = vpack.c.bf16 %v5635, %v5635
        %v5688 = vpack.c.bf16 %v5637, %v5637
        %v5689 = vpack.c.bf16 %v5640, %v5640
        %v5690 = vpack.c.bf16 %v5642, %v5642
        %v5691 = vpack.c.bf16 %v5645, %v5645
        %v5692 = vpack.c.bf16 %v5647, %v5647
        %v5693 = vpack.c.bf16 %v5650, %v5650
        %v5694 = vpack.c.bf16 %v5652, %v5652
        %v5695 = vpack.c.bf16 %v5655, %v5655
        %v5696 = vpack.c.bf16 %v5657, %v5657
        %v5697 = vpack.c.bf16 %v5660, %v5660
        %v5698 = vpack.c.bf16 %v5662, %v5662
        %v5699 = vpack.c.bf16 %v5665, %v5665
        %v5700 = vpack.c.bf16 %v5667, %v5667
        %5701 = vst [vmem:[%s163] sm:$0xf] %v5669
        %5702 = vst [vmem:[%s163 + $0x4] sm:$0xf] %v5670
        %5703 = vst [vmem:[%s163 + $0x8] sm:$0xf] %v5671
        %5704 = vst [vmem:[%s163 + $0xc] sm:$0xf] %v5672
        %5705 = vst [vmem:[%s163 + $0x10] sm:$0xf] %v5673
        %5706 = vst [vmem:[%s163 + $0x14] sm:$0xf] %v5674
        %5707 = vst [vmem:[%s163 + $0x18] sm:$0xf] %v5675
        %5708 = vst [vmem:[%s163 + $0x1c] sm:$0xf] %v5676
        %5709 = vst [vmem:[%s163 + $0x20] sm:$0xf] %v5677
        %5710 = vst [vmem:[%s163 + $0x24] sm:$0xf] %v5678
        %5711 = vst [vmem:[%s163 + $0x28] sm:$0xf] %v5679
        %5712 = vst [vmem:[%s163 + $0x2c] sm:$0xf] %v5680
        %5713 = vst [vmem:[%s163 + $0x30] sm:$0xf] %v5681
        %5714 = vst [vmem:[%s163 + $0x34] sm:$0xf] %v5682
        %5715 = vst [vmem:[%s163 + $0x38] sm:$0xf] %v5683
        %5716 = vst [vmem:[%s163 + $0x3c] sm:$0xf] %v5684
        %5717 = vst [vmem:[%s163 + $0x40] sm:$0xf] %v5685
        %5718 = vst [vmem:[%s163 + $0x44] sm:$0xf] %v5686
        %5719 = vst [vmem:[%s163 + $0x48] sm:$0xf] %v5687
        %5720 = vst [vmem:[%s163 + $0x4c] sm:$0xf] %v5688
        %5721 = vst [vmem:[%s163 + $0x50] sm:$0xf] %v5689
        %5722 = vst [vmem:[%s163 + $0x54] sm:$0xf] %v5690
        %5723 = vst [vmem:[%s163 + $0x58] sm:$0xf] %v5691
        %5724 = vst [vmem:[%s163 + $0x5c] sm:$0xf] %v5692
        %5725 = vst [vmem:[%s163 + $0x60] sm:$0xf] %v5693
        %5726 = vst [vmem:[%s163 + $0x64] sm:$0xf] %v5694
        %5727 = vst [vmem:[%s163 + $0x68] sm:$0xf] %v5695
        %5728 = vst [vmem:[%s163 + $0x6c] sm:$0xf] %v5696
        %5729 = vst [vmem:[%s163 + $0x70] sm:$0xf] %v5697
        %5730 = vst [vmem:[%s163 + $0x74] sm:$0xf] %v5698
        %5731 = vst [vmem:[%s163 + $0x78] sm:$0xf] %v5699
        %5732 = vst [vmem:[%s163 + $0x7c] sm:$0xf] %v5700
        %s5733 = sand.u32 %s93, 1
        %s5734 = scalar_lea.sflag [#allocation4], %s5733
        %s5735 = sand.u32 %s93, 1
        %s5736 = smul.addr %s5735, 128
        %s5737 = scalar_lea.vmem [#allocation3], %s5736
        // Predicated region
        $region33: #{causal_self_attention.1} parent=31 // pred_check
          %p5738 = pneg %p103
        $region34: #{causal_self_attention.1} parent=31 // pred_check_branch
          %5740 = sbr.rel (%p5738) target = $region36
        $region35: #{causal_self_attention.1} parent=31 // pred_region
          %5742 = vsyncadd %s5734, 0
          %s5743 = smul.addr %s17, 32
          %s5744 = smul.addr %s5743, 4
          %s5745 = scalar_lea.hbm %s3, %s5744
          %s5746 = sshll.u32 %s5737, 4
          %s5747 = int_to_ptr.vmem [resolvable:$true] %s5746
          %s5748 = sshll.u32 %s5745, 4
          %s5749 = int_to_ptr.hbm [resolvable:$true] %s5748
          %5754 = dma.vmem_to_hbm [thread:$0]  %s5747, 2048, %s5749, %s5734, 64, 64, 4
        $region36: #{causal_self_attention.1} parent=31 // pred_fallthru
          _
      $region32: #{causal_self_attention.1} parent=5 // pred_fallthru
        _
      %p5755 = scmp.le.s32.totalorder 2, %s12
      // Predicated region
      $region37: #{causal_self_attention.1} parent=5 // pred_check
        %p5756 = pneg %p5755
      $region38: #{causal_self_attention.1} parent=5 // pred_check_branch
        %5758 = sbr.rel (%p5756) target = $region40
      $region39: #{causal_self_attention.1} parent=5 // pred_region
        %s5759 = ssub.s32 %s12, 2
        // Predicated region
        $region41: #{causal_self_attention.1} parent=39 // pred_check
          %p5760 = pneg %p109
        $region42: #{causal_self_attention.1} parent=39 // pred_check_branch
          %5762 = sbr.rel (%p5760) target = $region44
        $region43: #{causal_self_attention.1} parent=39 // pred_region
          %s5763 = sand.u32 %s94, 1
          %s5764 = scalar_lea.sflag [#allocation4], %s5763
          %s5765 = sand.u32 %s94, 1
          %s5766 = smul.addr %s5765, 128
          %s5767 = scalar_lea.vmem [#allocation3], %s5766
          %5769 = dma.done %s5764, 2048
        $region44: #{causal_self_attention.1} parent=39 // pred_fallthru
          _
      $region40: #{causal_self_attention.1} parent=5 // pred_fallthru
        _
    $region6: #{causal_self_attention.1} parent=1 // loop_footer
      %s16 = sadd.s32 1, %s12
    $region7: #{causal_self_attention.1} parent=1 // loop_footer_branch
      %11 = sbr.rel target = $region3
    $region8: #{causal_self_attention.1} parent=1 // loop_exit
      _
    %5770 = vsyncpa [#allocation4], 1
    %s5771 = scalar_lea.sflag [#allocation4], 1
    %5772 = vsyncpa %s5771, 1

</llo_original>
